<compile_context>
chip_gen: v7x
topology: tpu7x:2x2x1
jax: 0.10.0
libtpu: 0.0.40
codegen_flags: <defaults>
</compile_context>

<pallas_src>
import jax
import jax.numpy as jnp
import numpy as np
from jax.experimental import pallas as pl
from jax.experimental.pallas import tpu as pltpu

# ---------------- problem sizes (consistent with the module) ----------------
B, C, H, W = 2, 8, 16, 16
HW = H * W                              # 256 (lane axis)
MLP_RATIO = 4.0
HID = int(MLP_RATIO * C)                # 32
K, PAD = 7, 3
PADF = 64                               # flat-halo on each side; must be >= PAD*W + PAD = 51
LEXT = HW + 2 * PADF                    # 384 = 3 * 128 lanes
LN_EPS = 1e-5
assert PADF >= PAD * W + PAD


def _gelu_tanh(x):
    # TODO(synk): PyTorch nn.GELU() defaults to the exact erf formulation; the tanh
    # approximation (max abs deviation ~3e-4) is used for robust Mosaic lowering.
    # The pure-JAX reference below uses the same formula.
    return 0.5 * x * (1.0 + jnp.tanh(0.7978845608028654 * (x + 0.044715 * x * x * x)))


def convnext_block_kernel(x_ref, wmask_ref, dww_ref, dwb_ref, lnw_ref, lnb_ref,
                          w1_ref, b1_ref, w2_ref, b2_ref, out_ref):
    # x_ref    : (B, C, LEXT)  flattened spatial with a 64-lane zero halo per side
    # wmask_ref: (K, 1, HW)    1.0 where the kw-shifted column stays inside its row
    # dww_ref  : (C, K*K)      depthwise taps, element [c, kh*K + kw]
    # dwb/lnw/lnb/b2: (C, 1); w1: (HID, C); b1: (HID, 1); w2: (C, HID) (gamma folded)
    # out_ref  : (B, C, HW)
    dww = dww_ref[...]
    dwb = dwb_ref[...]
    lnw = lnw_ref[...]
    lnb = lnb_ref[...]
    w1 = w1_ref[...]
    b1 = b1_ref[...]
    w2 = w2_ref[...]
    b2 = b2_ref[...]

    for b in range(B):                                  # static unroll, B == 2
        xe = x_ref[b]                                   # (C, LEXT) = (8, 384)
        xin = xe[:, PADF:PADF + HW]                     # residual input, (C, HW)

        # ---- depthwise 7x7 conv: lane-shifted slices, column mask per kw ----
        acc = jnp.zeros((C, HW), jnp.float32)
        for kw in range(K):
            col = jnp.zeros((C, HW), jnp.float32)
            for kh in range(K):
                start = PADF + (kh - PAD) * W + (kw - PAD)   # static, in [13, 115]
                j = kh * K + kw
                col = col + xe[:, start:start + HW] * dww[:, j:j + 1]
            if kw != PAD:                               # kw == PAD -> mask is all ones
                col = col * wmask_ref[kw]               # zero out cross-row wraparound
            acc = acc + col
        acc = acc + dwb

        # ---- LayerNorm over channels (sublane axis), biased var, eps=1e-5 ----
        mean = jnp.mean(acc, axis=0, keepdims=True)
        var = jnp.mean((acc - mean) ** 2, axis=0, keepdims=True)
        xn = (acc - mean) * jax.lax.rsqrt(var + LN_EPS)
        xn = xn * lnw + lnb

        # ---- pointwise MLP in (out_ch, pixels) orientation (lane-dense N=256) ----
        hdn = jnp.dot(w1, xn, preferred_element_type=jnp.float32) + b1   # (HID, HW)
        hdn = _gelu_tanh(hdn)
        y = jnp.dot(w2, hdn, preferred_element_type=jnp.float32) + b2    # (C, HW)

        # ---- residual (gamma already folded into w2/b2) ----
        out_ref[b] = xin + y


@jax.jit
def convnext_block(x_nchw, params):
    dw_w, dw_b, ln_w, ln_b, w1, b1, w2, b2, gamma = params
    assert x_nchw.shape == (B, C, H, W)

    # fold scalar layer-scale gamma into the second pointwise conv (exact)
    w2g = w2 * gamma[0]
    b2g = (b2 * gamma[0]).reshape(C, 1)

    # NCHW-native flattened layout + zero halo on the flattened spatial axis
    x_ext = jnp.pad(x_nchw.reshape(B, C, HW),
                    ((0, 0), (0, 0), (PADF, LEXT - HW - PADF)))          # (B, C, 384)

    # static per-kw column-validity masks (exact zero-padding in the W direction)
    wcol = np.arange(HW) % W
    wmask = np.stack(
        [((wcol + (kw - PAD) >= 0) & (wcol + (kw - PAD) < W)).astype(np.float32)
         for kw in range(K)])[:, None, :]                                # (K, 1, HW)
    wmask = jnp.asarray(wmask)

    # depthwise taps as a single (C, K*K) tile: [c, kh*K + kw]
    dww = jnp.transpose(dw_w, (2, 0, 1)).reshape(C, K * K)

    out_flat = pl.pallas_call(
        convnext_block_kernel,
        out_shape=jax.ShapeDtypeStruct((B, C, HW), jnp.float32),
        grid_spec=pltpu.PrefetchScalarGridSpec(
            num_scalar_prefetch=0,
            grid=(1,),                                   # single step: weights DMA'd once
            in_specs=[
                pl.BlockSpec((B, C, LEXT), lambda i: (0, 0, 0)),   # x (haloed)
                pl.BlockSpec((K, 1, HW),   lambda i: (0, 0, 0)),   # column masks
                pl.BlockSpec((C, K * K),   lambda i: (0, 0)),      # dw taps
                pl.BlockSpec((C, 1),       lambda i: (0, 0)),      # dw bias
                pl.BlockSpec((C, 1),       lambda i: (0, 0)),      # ln weight
                pl.BlockSpec((C, 1),       lambda i: (0, 0)),      # ln bias
                pl.BlockSpec((HID, C),     lambda i: (0, 0)),      # pwconv1 W (out,in)
                pl.BlockSpec((HID, 1),     lambda i: (0, 0)),      # pwconv1 b
                pl.BlockSpec((C, HID),     lambda i: (0, 0)),      # pwconv2 W * gamma
                pl.BlockSpec((C, 1),       lambda i: (0, 0)),      # pwconv2 b * gamma
            ],
            out_specs=pl.BlockSpec((B, C, HW), lambda i: (0, 0, 0)),
        ),
        compiler_params=pltpu.CompilerParams(dimension_semantics=("arbitrary",)),
    )(x_ext, wmask, dww, dw_b.reshape(C, 1),
      ln_w.reshape(C, 1), ln_b.reshape(C, 1),
      w1, b1.reshape(HID, 1), w2g, b2g)

    return out_flat.reshape(B, C, H, W)


# ---------------- pure-JAX reference for correctness check ----------------
def convnext_block_ref(x_nchw, params):
    dw_w, dw_b, ln_w, ln_b, w1, b1, w2, b2, gamma = params
    w_oihw = jnp.transpose(dw_w, (2, 0, 1))[:, None, :, :]       # (C,1,7,7)
    y = jax.lax.conv_general_dilated(
        x_nchw, w_oihw, window_strides=(1, 1),
        padding=((PAD, PAD), (PAD, PAD)),
        feature_group_count=C,
        dimension_numbers=("NCHW", "OIHW", "NCHW"),
    ) + dw_b[None, :, None, None]
    y = jnp.transpose(y, (0, 2, 3, 1))                           # NHWC
    mean = jnp.mean(y, axis=-1, keepdims=True)
    var = jnp.mean((y - mean) ** 2, axis=-1, keepdims=True)
    y = (y - mean) * jax.lax.rsqrt(var + LN_EPS) * ln_w + ln_b
    y = _gelu_tanh(y @ w1.T + b1) @ w2.T + b2                    # Linear weights are (out,in)
    y = jnp.transpose(y, (0, 3, 1, 2))                           # NCHW
    return x_nchw + gamma[0] * y


if __name__ == "__main__":
    key = jax.random.PRNGKey(0)
    ks = jax.random.split(key, 10)

    x = jax.random.normal(ks[0], (B, C, H, W), jnp.float32)

    # parameter shapes mirror nn.Conv2d(C,C,7,groups=C), nn.LayerNorm(C),
    # nn.Linear(C,4C), nn.Linear(4C,C) [PyTorch (out,in) layout], gamma=(1,)
    dw_w = jax.random.normal(ks[1], (K, K, C), jnp.float32) * 0.1
    dw_b = jax.random.normal(ks[2], (C,), jnp.float32) * 0.1
    ln_w = 1.0 + 0.1 * jax.random.normal(ks[3], (C,), jnp.float32)
    ln_b = 0.1 * jax.random.normal(ks[4], (C,), jnp.float32)
    w1 = jax.random.normal(ks[5], (HID, C), jnp.float32) * 0.1
    b1 = jax.random.normal(ks[6], (HID,), jnp.float32) * 0.1
    w2 = jax.random.normal(ks[7], (C, HID), jnp.float32) * 0.1
    b2 = jax.random.normal(ks[8], (C,), jnp.float32) * 0.1
    gamma = jnp.ones((1,), jnp.float32)

    params = (dw_w, dw_b, ln_w, ln_b, w1, b1, w2, b2, gamma)

    out = jax.block_until_ready(convnext_block(x, params))
    ref = jax.block_until_ready(convnext_block_ref(x, params))

    assert out.shape == (B, C, H, W)
    np.testing.assert_allclose(np.asarray(out), np.asarray(ref), atol=1e-2, rtol=1e-2)
    print("KERNEL_OK")
</pallas_src>

<mosaic_0001>
module attributes {stable_mosaic.version = 11 : i64} {
  func.func @convnext_block_kernel(%arg0: i32, %arg1: memref<2x8x384xf32, #tpu.memory_space<vmem>>, %arg2: memref<7x1x256xf32, #tpu.memory_space<vmem>>, %arg3: memref<8x49xf32, #tpu.memory_space<vmem>>, %arg4: memref<8x1xf32, #tpu.memory_space<vmem>>, %arg5: memref<8x1xf32, #tpu.memory_space<vmem>>, %arg6: memref<8x1xf32, #tpu.memory_space<vmem>>, %arg7: memref<32x8xf32, #tpu.memory_space<vmem>>, %arg8: memref<32x1xf32, #tpu.memory_space<vmem>>, %arg9: memref<8x32xf32, #tpu.memory_space<vmem>>, %arg10: memref<8x1xf32, #tpu.memory_space<vmem>>, %arg11: memref<2x8x256xf32, #tpu.memory_space<vmem>>) attributes {dimension_semantics = [#tpu.dimension_semantics<arbitrary>], iteration_bounds = array<i64: 1>, scalar_prefetch = 0 : i64, scratch_operands = 0 : i64, tpu.core_type = #tpu.core_type<tc>, window_params = [{pipeline_mode = #tpu.pipeline_mode<synchronous>, transform_indices = @transform_0, window_bounds = array<i64: 2, 8, 384>}, {pipeline_mode = #tpu.pipeline_mode<synchronous>, transform_indices = @transform_1, window_bounds = array<i64: 7, 1, 256>}, {pipeline_mode = #tpu.pipeline_mode<synchronous>, transform_indices = @transform_2, window_bounds = array<i64: 8, 49>}, {pipeline_mode = #tpu.pipeline_mode<synchronous>, transform_indices = @transform_3, window_bounds = array<i64: 8, 1>}, {pipeline_mode = #tpu.pipeline_mode<synchronous>, transform_indices = @transform_4, window_bounds = array<i64: 8, 1>}, {pipeline_mode = #tpu.pipeline_mode<synchronous>, transform_indices = @transform_5, window_bounds = array<i64: 8, 1>}, {pipeline_mode = #tpu.pipeline_mode<synchronous>, transform_indices = @transform_6, window_bounds = array<i64: 32, 8>}, {pipeline_mode = #tpu.pipeline_mode<synchronous>, transform_indices = @transform_7, window_bounds = array<i64: 32, 1>}, {pipeline_mode = #tpu.pipeline_mode<synchronous>, transform_indices = @transform_8, window_bounds = array<i64: 8, 32>}, {pipeline_mode = #tpu.pipeline_mode<synchronous>, transform_indices = @transform_9, window_bounds = array<i64: 8, 1>}, {pipeline_mode = #tpu.pipeline_mode<synchronous>, transform_indices = @transform_10, window_bounds = array<i64: 2, 8, 256>}]} {
    %c0 = arith.constant 0 : index
    %c0_0 = arith.constant 0 : index
    %0 = vector.load %arg3[%c0, %c0_0] : memref<8x49xf32, #tpu.memory_space<vmem>>, vector<8x49xf32>
    %c0_1 = arith.constant 0 : index
    %c0_2 = arith.constant 0 : index
    %1 = vector.load %arg4[%c0_1, %c0_2] : memref<8x1xf32, #tpu.memory_space<vmem>>, vector<8x1xf32>
    %c0_3 = arith.constant 0 : index
    %c0_4 = arith.constant 0 : index
    %2 = vector.load %arg5[%c0_3, %c0_4] : memref<8x1xf32, #tpu.memory_space<vmem>>, vector<8x1xf32>
    %c0_5 = arith.constant 0 : index
    %c0_6 = arith.constant 0 : index
    %3 = vector.load %arg6[%c0_5, %c0_6] : memref<8x1xf32, #tpu.memory_space<vmem>>, vector<8x1xf32>
    %c0_7 = arith.constant 0 : index
    %c0_8 = arith.constant 0 : index
    %4 = vector.load %arg7[%c0_7, %c0_8] : memref<32x8xf32, #tpu.memory_space<vmem>>, vector<32x8xf32>
    %c0_9 = arith.constant 0 : index
    %c0_10 = arith.constant 0 : index
    %5 = vector.load %arg8[%c0_9, %c0_10] : memref<32x1xf32, #tpu.memory_space<vmem>>, vector<32x1xf32>
    %c0_11 = arith.constant 0 : index
    %c0_12 = arith.constant 0 : index
    %6 = vector.load %arg9[%c0_11, %c0_12] : memref<8x32xf32, #tpu.memory_space<vmem>>, vector<8x32xf32>
    %c0_13 = arith.constant 0 : index
    %c0_14 = arith.constant 0 : index
    %7 = vector.load %arg10[%c0_13, %c0_14] : memref<8x1xf32, #tpu.memory_space<vmem>>, vector<8x1xf32>
    %c0_15 = arith.constant 0 : index
    %c0_16 = arith.constant 0 : index
    %c0_17 = arith.constant 0 : index
    %8 = vector.load %arg1[%c0_15, %c0_16, %c0_17] : memref<2x8x384xf32, #tpu.memory_space<vmem>>, vector<1x8x384xf32>
    %9 = vector.shape_cast %8 : vector<1x8x384xf32> to vector<8x384xf32>
    %10 = vector.extract_strided_slice %9 {offsets = [0, 64], sizes = [8, 256], strides = [1, 1]} : vector<8x384xf32> to vector<8x256xf32>
    %cst = arith.constant 0.000000e+00 : f32
    %11 = vector.broadcast %cst : f32 to vector<8x256xf32>
    %cst_18 = arith.constant 0.000000e+00 : f32
    %12 = vector.broadcast %cst_18 : f32 to vector<8x256xf32>
    %13 = vector.extract_strided_slice %9 {offsets = [0, 13], sizes = [8, 256], strides = [1, 1]} : vector<8x384xf32> to vector<8x256xf32>
    %14 = vector.extract_strided_slice %0 {offsets = [0, 0], sizes = [8, 1], strides = [1, 1]} : vector<8x49xf32> to vector<8x1xf32>
    %15 = vector.broadcast %14 : vector<8x1xf32> to vector<8x256xf32>
    %16 = arith.mulf %13, %15 : vector<8x256xf32>
    %17 = arith.addf %12, %16 : vector<8x256xf32>
    %18 = vector.extract_strided_slice %9 {offsets = [0, 29], sizes = [8, 256], strides = [1, 1]} : vector<8x384xf32> to vector<8x256xf32>
    %19 = vector.extract_strided_slice %0 {offsets = [0, 7], sizes = [8, 1], strides = [1, 1]} : vector<8x49xf32> to vector<8x1xf32>
    %20 = vector.broadcast %19 : vector<8x1xf32> to vector<8x256xf32>
    %21 = arith.mulf %18, %20 : vector<8x256xf32>
    %22 = arith.addf %17, %21 : vector<8x256xf32>
    %23 = vector.extract_strided_slice %9 {offsets = [0, 45], sizes = [8, 256], strides = [1, 1]} : vector<8x384xf32> to vector<8x256xf32>
    %24 = vector.extract_strided_slice %0 {offsets = [0, 14], sizes = [8, 1], strides = [1, 1]} : vector<8x49xf32> to vector<8x1xf32>
    %25 = vector.broadcast %24 : vector<8x1xf32> to vector<8x256xf32>
    %26 = arith.mulf %23, %25 : vector<8x256xf32>
    %27 = arith.addf %22, %26 : vector<8x256xf32>
    %28 = vector.extract_strided_slice %9 {offsets = [0, 61], sizes = [8, 256], strides = [1, 1]} : vector<8x384xf32> to vector<8x256xf32>
    %29 = vector.extract_strided_slice %0 {offsets = [0, 21], sizes = [8, 1], strides = [1, 1]} : vector<8x49xf32> to vector<8x1xf32>
    %30 = vector.broadcast %29 : vector<8x1xf32> to vector<8x256xf32>
    %31 = arith.mulf %28, %30 : vector<8x256xf32>
    %32 = arith.addf %27, %31 : vector<8x256xf32>
    %33 = vector.extract_strided_slice %9 {offsets = [0, 77], sizes = [8, 256], strides = [1, 1]} : vector<8x384xf32> to vector<8x256xf32>
    %34 = vector.extract_strided_slice %0 {offsets = [0, 28], sizes = [8, 1], strides = [1, 1]} : vector<8x49xf32> to vector<8x1xf32>
    %35 = vector.broadcast %34 : vector<8x1xf32> to vector<8x256xf32>
    %36 = arith.mulf %33, %35 : vector<8x256xf32>
    %37 = arith.addf %32, %36 : vector<8x256xf32>
    %38 = vector.extract_strided_slice %9 {offsets = [0, 93], sizes = [8, 256], strides = [1, 1]} : vector<8x384xf32> to vector<8x256xf32>
    %39 = vector.extract_strided_slice %0 {offsets = [0, 35], sizes = [8, 1], strides = [1, 1]} : vector<8x49xf32> to vector<8x1xf32>
    %40 = vector.broadcast %39 : vector<8x1xf32> to vector<8x256xf32>
    %41 = arith.mulf %38, %40 : vector<8x256xf32>
    %42 = arith.addf %37, %41 : vector<8x256xf32>
    %43 = vector.extract_strided_slice %9 {offsets = [0, 109], sizes = [8, 256], strides = [1, 1]} : vector<8x384xf32> to vector<8x256xf32>
    %44 = vector.extract_strided_slice %0 {offsets = [0, 42], sizes = [8, 1], strides = [1, 1]} : vector<8x49xf32> to vector<8x1xf32>
    %45 = vector.broadcast %44 : vector<8x1xf32> to vector<8x256xf32>
    %46 = arith.mulf %43, %45 : vector<8x256xf32>
    %47 = arith.addf %42, %46 : vector<8x256xf32>
    %c0_19 = arith.constant 0 : index
    %c0_20 = arith.constant 0 : index
    %c0_21 = arith.constant 0 : index
    %48 = vector.load %arg2[%c0_19, %c0_20, %c0_21] : memref<7x1x256xf32, #tpu.memory_space<vmem>>, vector<1x1x256xf32>
    %49 = vector.shape_cast %48 : vector<1x1x256xf32> to vector<1x256xf32>
    %50 = vector.broadcast %49 : vector<1x256xf32> to vector<8x256xf32>
    %51 = arith.mulf %47, %50 : vector<8x256xf32>
    %52 = arith.addf %11, %51 : vector<8x256xf32>
    %cst_22 = arith.constant 0.000000e+00 : f32
    %53 = vector.broadcast %cst_22 : f32 to vector<8x256xf32>
    %54 = vector.extract_strided_slice %9 {offsets = [0, 14], sizes = [8, 256], strides = [1, 1]} : vector<8x384xf32> to vector<8x256xf32>
    %55 = vector.extract_strided_slice %0 {offsets = [0, 1], sizes = [8, 1], strides = [1, 1]} : vector<8x49xf32> to vector<8x1xf32>
    %56 = vector.broadcast %55 : vector<8x1xf32> to vector<8x256xf32>
    %57 = arith.mulf %54, %56 : vector<8x256xf32>
    %58 = arith.addf %53, %57 : vector<8x256xf32>
    %59 = vector.extract_strided_slice %9 {offsets = [0, 30], sizes = [8, 256], strides = [1, 1]} : vector<8x384xf32> to vector<8x256xf32>
    %60 = vector.extract_strided_slice %0 {offsets = [0, 8], sizes = [8, 1], strides = [1, 1]} : vector<8x49xf32> to vector<8x1xf32>
    %61 = vector.broadcast %60 : vector<8x1xf32> to vector<8x256xf32>
    %62 = arith.mulf %59, %61 : vector<8x256xf32>
    %63 = arith.addf %58, %62 : vector<8x256xf32>
    %64 = vector.extract_strided_slice %9 {offsets = [0, 46], sizes = [8, 256], strides = [1, 1]} : vector<8x384xf32> to vector<8x256xf32>
    %65 = vector.extract_strided_slice %0 {offsets = [0, 15], sizes = [8, 1], strides = [1, 1]} : vector<8x49xf32> to vector<8x1xf32>
    %66 = vector.broadcast %65 : vector<8x1xf32> to vector<8x256xf32>
    %67 = arith.mulf %64, %66 : vector<8x256xf32>
    %68 = arith.addf %63, %67 : vector<8x256xf32>
    %69 = vector.extract_strided_slice %9 {offsets = [0, 62], sizes = [8, 256], strides = [1, 1]} : vector<8x384xf32> to vector<8x256xf32>
    %70 = vector.extract_strided_slice %0 {offsets = [0, 22], sizes = [8, 1], strides = [1, 1]} : vector<8x49xf32> to vector<8x1xf32>
    %71 = vector.broadcast %70 : vector<8x1xf32> to vector<8x256xf32>
    %72 = arith.mulf %69, %71 : vector<8x256xf32>
    %73 = arith.addf %68, %72 : vector<8x256xf32>
    %74 = vector.extract_strided_slice %9 {offsets = [0, 78], sizes = [8, 256], strides = [1, 1]} : vector<8x384xf32> to vector<8x256xf32>
    %75 = vector.extract_strided_slice %0 {offsets = [0, 29], sizes = [8, 1], strides = [1, 1]} : vector<8x49xf32> to vector<8x1xf32>
    %76 = vector.broadcast %75 : vector<8x1xf32> to vector<8x256xf32>
    %77 = arith.mulf %74, %76 : vector<8x256xf32>
    %78 = arith.addf %73, %77 : vector<8x256xf32>
    %79 = vector.extract_strided_slice %9 {offsets = [0, 94], sizes = [8, 256], strides = [1, 1]} : vector<8x384xf32> to vector<8x256xf32>
    %80 = vector.extract_strided_slice %0 {offsets = [0, 36], sizes = [8, 1], strides = [1, 1]} : vector<8x49xf32> to vector<8x1xf32>
    %81 = vector.broadcast %80 : vector<8x1xf32> to vector<8x256xf32>
    %82 = arith.mulf %79, %81 : vector<8x256xf32>
    %83 = arith.addf %78, %82 : vector<8x256xf32>
    %84 = vector.extract_strided_slice %9 {offsets = [0, 110], sizes = [8, 256], strides = [1, 1]} : vector<8x384xf32> to vector<8x256xf32>
    %85 = vector.extract_strided_slice %0 {offsets = [0, 43], sizes = [8, 1], strides = [1, 1]} : vector<8x49xf32> to vector<8x1xf32>
    %86 = vector.broadcast %85 : vector<8x1xf32> to vector<8x256xf32>
    %87 = arith.mulf %84, %86 : vector<8x256xf32>
    %88 = arith.addf %83, %87 : vector<8x256xf32>
    %c1 = arith.constant 1 : index
    %c0_23 = arith.constant 0 : index
    %c0_24 = arith.constant 0 : index
    %89 = vector.load %arg2[%c1, %c0_23, %c0_24] : memref<7x1x256xf32, #tpu.memory_space<vmem>>, vector<1x1x256xf32>
    %90 = vector.shape_cast %89 : vector<1x1x256xf32> to vector<1x256xf32>
    %91 = vector.broadcast %90 : vector<1x256xf32> to vector<8x256xf32>
    %92 = arith.mulf %88, %91 : vector<8x256xf32>
    %93 = arith.addf %52, %92 : vector<8x256xf32>
    %cst_25 = arith.constant 0.000000e+00 : f32
    %94 = vector.broadcast %cst_25 : f32 to vector<8x256xf32>
    %95 = vector.extract_strided_slice %9 {offsets = [0, 15], sizes = [8, 256], strides = [1, 1]} : vector<8x384xf32> to vector<8x256xf32>
    %96 = vector.extract_strided_slice %0 {offsets = [0, 2], sizes = [8, 1], strides = [1, 1]} : vector<8x49xf32> to vector<8x1xf32>
    %97 = vector.broadcast %96 : vector<8x1xf32> to vector<8x256xf32>
    %98 = arith.mulf %95, %97 : vector<8x256xf32>
    %99 = arith.addf %94, %98 : vector<8x256xf32>
    %100 = vector.extract_strided_slice %9 {offsets = [0, 31], sizes = [8, 256], strides = [1, 1]} : vector<8x384xf32> to vector<8x256xf32>
    %101 = vector.extract_strided_slice %0 {offsets = [0, 9], sizes = [8, 1], strides = [1, 1]} : vector<8x49xf32> to vector<8x1xf32>
    %102 = vector.broadcast %101 : vector<8x1xf32> to vector<8x256xf32>
    %103 = arith.mulf %100, %102 : vector<8x256xf32>
    %104 = arith.addf %99, %103 : vector<8x256xf32>
    %105 = vector.extract_strided_slice %9 {offsets = [0, 47], sizes = [8, 256], strides = [1, 1]} : vector<8x384xf32> to vector<8x256xf32>
    %106 = vector.extract_strided_slice %0 {offsets = [0, 16], sizes = [8, 1], strides = [1, 1]} : vector<8x49xf32> to vector<8x1xf32>
    %107 = vector.broadcast %106 : vector<8x1xf32> to vector<8x256xf32>
    %108 = arith.mulf %105, %107 : vector<8x256xf32>
    %109 = arith.addf %104, %108 : vector<8x256xf32>
    %110 = vector.extract_strided_slice %9 {offsets = [0, 63], sizes = [8, 256], strides = [1, 1]} : vector<8x384xf32> to vector<8x256xf32>
    %111 = vector.extract_strided_slice %0 {offsets = [0, 23], sizes = [8, 1], strides = [1, 1]} : vector<8x49xf32> to vector<8x1xf32>
    %112 = vector.broadcast %111 : vector<8x1xf32> to vector<8x256xf32>
    %113 = arith.mulf %110, %112 : vector<8x256xf32>
    %114 = arith.addf %109, %113 : vector<8x256xf32>
    %115 = vector.extract_strided_slice %9 {offsets = [0, 79], sizes = [8, 256], strides = [1, 1]} : vector<8x384xf32> to vector<8x256xf32>
    %116 = vector.extract_strided_slice %0 {offsets = [0, 30], sizes = [8, 1], strides = [1, 1]} : vector<8x49xf32> to vector<8x1xf32>
    %117 = vector.broadcast %116 : vector<8x1xf32> to vector<8x256xf32>
    %118 = arith.mulf %115, %117 : vector<8x256xf32>
    %119 = arith.addf %114, %118 : vector<8x256xf32>
    %120 = vector.extract_strided_slice %9 {offsets = [0, 95], sizes = [8, 256], strides = [1, 1]} : vector<8x384xf32> to vector<8x256xf32>
    %121 = vector.extract_strided_slice %0 {offsets = [0, 37], sizes = [8, 1], strides = [1, 1]} : vector<8x49xf32> to vector<8x1xf32>
    %122 = vector.broadcast %121 : vector<8x1xf32> to vector<8x256xf32>
    %123 = arith.mulf %120, %122 : vector<8x256xf32>
    %124 = arith.addf %119, %123 : vector<8x256xf32>
    %125 = vector.extract_strided_slice %9 {offsets = [0, 111], sizes = [8, 256], strides = [1, 1]} : vector<8x384xf32> to vector<8x256xf32>
    %126 = vector.extract_strided_slice %0 {offsets = [0, 44], sizes = [8, 1], strides = [1, 1]} : vector<8x49xf32> to vector<8x1xf32>
    %127 = vector.broadcast %126 : vector<8x1xf32> to vector<8x256xf32>
    %128 = arith.mulf %125, %127 : vector<8x256xf32>
    %129 = arith.addf %124, %128 : vector<8x256xf32>
    %c2 = arith.constant 2 : index
    %c0_26 = arith.constant 0 : index
    %c0_27 = arith.constant 0 : index
    %130 = vector.load %arg2[%c2, %c0_26, %c0_27] : memref<7x1x256xf32, #tpu.memory_space<vmem>>, vector<1x1x256xf32>
    %131 = vector.shape_cast %130 : vector<1x1x256xf32> to vector<1x256xf32>
    %132 = vector.broadcast %131 : vector<1x256xf32> to vector<8x256xf32>
    %133 = arith.mulf %129, %132 : vector<8x256xf32>
    %134 = arith.addf %93, %133 : vector<8x256xf32>
    %cst_28 = arith.constant 0.000000e+00 : f32
    %135 = vector.broadcast %cst_28 : f32 to vector<8x256xf32>
    %136 = vector.extract_strided_slice %9 {offsets = [0, 16], sizes = [8, 256], strides = [1, 1]} : vector<8x384xf32> to vector<8x256xf32>
    %137 = vector.extract_strided_slice %0 {offsets = [0, 3], sizes = [8, 1], strides = [1, 1]} : vector<8x49xf32> to vector<8x1xf32>
    %138 = vector.broadcast %137 : vector<8x1xf32> to vector<8x256xf32>
    %139 = arith.mulf %136, %138 : vector<8x256xf32>
    %140 = arith.addf %135, %139 : vector<8x256xf32>
    %141 = vector.extract_strided_slice %9 {offsets = [0, 32], sizes = [8, 256], strides = [1, 1]} : vector<8x384xf32> to vector<8x256xf32>
    %142 = vector.extract_strided_slice %0 {offsets = [0, 10], sizes = [8, 1], strides = [1, 1]} : vector<8x49xf32> to vector<8x1xf32>
    %143 = vector.broadcast %142 : vector<8x1xf32> to vector<8x256xf32>
    %144 = arith.mulf %141, %143 : vector<8x256xf32>
    %145 = arith.addf %140, %144 : vector<8x256xf32>
    %146 = vector.extract_strided_slice %9 {offsets = [0, 48], sizes = [8, 256], strides = [1, 1]} : vector<8x384xf32> to vector<8x256xf32>
    %147 = vector.extract_strided_slice %0 {offsets = [0, 17], sizes = [8, 1], strides = [1, 1]} : vector<8x49xf32> to vector<8x1xf32>
    %148 = vector.broadcast %147 : vector<8x1xf32> to vector<8x256xf32>
    %149 = arith.mulf %146, %148 : vector<8x256xf32>
    %150 = arith.addf %145, %149 : vector<8x256xf32>
    %151 = vector.extract_strided_slice %9 {offsets = [0, 64], sizes = [8, 256], strides = [1, 1]} : vector<8x384xf32> to vector<8x256xf32>
    %152 = vector.extract_strided_slice %0 {offsets = [0, 24], sizes = [8, 1], strides = [1, 1]} : vector<8x49xf32> to vector<8x1xf32>
    %153 = vector.broadcast %152 : vector<8x1xf32> to vector<8x256xf32>
    %154 = arith.mulf %151, %153 : vector<8x256xf32>
    %155 = arith.addf %150, %154 : vector<8x256xf32>
    %156 = vector.extract_strided_slice %9 {offsets = [0, 80], sizes = [8, 256], strides = [1, 1]} : vector<8x384xf32> to vector<8x256xf32>
    %157 = vector.extract_strided_slice %0 {offsets = [0, 31], sizes = [8, 1], strides = [1, 1]} : vector<8x49xf32> to vector<8x1xf32>
    %158 = vector.broadcast %157 : vector<8x1xf32> to vector<8x256xf32>
    %159 = arith.mulf %156, %158 : vector<8x256xf32>
    %160 = arith.addf %155, %159 : vector<8x256xf32>
    %161 = vector.extract_strided_slice %9 {offsets = [0, 96], sizes = [8, 256], strides = [1, 1]} : vector<8x384xf32> to vector<8x256xf32>
    %162 = vector.extract_strided_slice %0 {offsets = [0, 38], sizes = [8, 1], strides = [1, 1]} : vector<8x49xf32> to vector<8x1xf32>
    %163 = vector.broadcast %162 : vector<8x1xf32> to vector<8x256xf32>
    %164 = arith.mulf %161, %163 : vector<8x256xf32>
    %165 = arith.addf %160, %164 : vector<8x256xf32>
    %166 = vector.extract_strided_slice %9 {offsets = [0, 112], sizes = [8, 256], strides = [1, 1]} : vector<8x384xf32> to vector<8x256xf32>
    %167 = vector.extract_strided_slice %0 {offsets = [0, 45], sizes = [8, 1], strides = [1, 1]} : vector<8x49xf32> to vector<8x1xf32>
    %168 = vector.broadcast %167 : vector<8x1xf32> to vector<8x256xf32>
    %169 = arith.mulf %166, %168 : vector<8x256xf32>
    %170 = arith.addf %165, %169 : vector<8x256xf32>
    %171 = arith.addf %134, %170 : vector<8x256xf32>
    %cst_29 = arith.constant 0.000000e+00 : f32
    %172 = vector.broadcast %cst_29 : f32 to vector<8x256xf32>
    %173 = vector.extract_strided_slice %9 {offsets = [0, 17], sizes = [8, 256], strides = [1, 1]} : vector<8x384xf32> to vector<8x256xf32>
    %174 = vector.extract_strided_slice %0 {offsets = [0, 4], sizes = [8, 1], strides = [1, 1]} : vector<8x49xf32> to vector<8x1xf32>
    %175 = vector.broadcast %174 : vector<8x1xf32> to vector<8x256xf32>
    %176 = arith.mulf %173, %175 : vector<8x256xf32>
    %177 = arith.addf %172, %176 : vector<8x256xf32>
    %178 = vector.extract_strided_slice %9 {offsets = [0, 33], sizes = [8, 256], strides = [1, 1]} : vector<8x384xf32> to vector<8x256xf32>
    %179 = vector.extract_strided_slice %0 {offsets = [0, 11], sizes = [8, 1], strides = [1, 1]} : vector<8x49xf32> to vector<8x1xf32>
    %180 = vector.broadcast %179 : vector<8x1xf32> to vector<8x256xf32>
    %181 = arith.mulf %178, %180 : vector<8x256xf32>
    %182 = arith.addf %177, %181 : vector<8x256xf32>
    %183 = vector.extract_strided_slice %9 {offsets = [0, 49], sizes = [8, 256], strides = [1, 1]} : vector<8x384xf32> to vector<8x256xf32>
    %184 = vector.extract_strided_slice %0 {offsets = [0, 18], sizes = [8, 1], strides = [1, 1]} : vector<8x49xf32> to vector<8x1xf32>
    %185 = vector.broadcast %184 : vector<8x1xf32> to vector<8x256xf32>
    %186 = arith.mulf %183, %185 : vector<8x256xf32>
    %187 = arith.addf %182, %186 : vector<8x256xf32>
    %188 = vector.extract_strided_slice %9 {offsets = [0, 65], sizes = [8, 256], strides = [1, 1]} : vector<8x384xf32> to vector<8x256xf32>
    %189 = vector.extract_strided_slice %0 {offsets = [0, 25], sizes = [8, 1], strides = [1, 1]} : vector<8x49xf32> to vector<8x1xf32>
    %190 = vector.broadcast %189 : vector<8x1xf32> to vector<8x256xf32>
    %191 = arith.mulf %188, %190 : vector<8x256xf32>
    %192 = arith.addf %187, %191 : vector<8x256xf32>
    %193 = vector.extract_strided_slice %9 {offsets = [0, 81], sizes = [8, 256], strides = [1, 1]} : vector<8x384xf32> to vector<8x256xf32>
    %194 = vector.extract_strided_slice %0 {offsets = [0, 32], sizes = [8, 1], strides = [1, 1]} : vector<8x49xf32> to vector<8x1xf32>
    %195 = vector.broadcast %194 : vector<8x1xf32> to vector<8x256xf32>
    %196 = arith.mulf %193, %195 : vector<8x256xf32>
    %197 = arith.addf %192, %196 : vector<8x256xf32>
    %198 = vector.extract_strided_slice %9 {offsets = [0, 97], sizes = [8, 256], strides = [1, 1]} : vector<8x384xf32> to vector<8x256xf32>
    %199 = vector.extract_strided_slice %0 {offsets = [0, 39], sizes = [8, 1], strides = [1, 1]} : vector<8x49xf32> to vector<8x1xf32>
    %200 = vector.broadcast %199 : vector<8x1xf32> to vector<8x256xf32>
    %201 = arith.mulf %198, %200 : vector<8x256xf32>
    %202 = arith.addf %197, %201 : vector<8x256xf32>
    %203 = vector.extract_strided_slice %9 {offsets = [0, 113], sizes = [8, 256], strides = [1, 1]} : vector<8x384xf32> to vector<8x256xf32>
    %204 = vector.extract_strided_slice %0 {offsets = [0, 46], sizes = [8, 1], strides = [1, 1]} : vector<8x49xf32> to vector<8x1xf32>
    %205 = vector.broadcast %204 : vector<8x1xf32> to vector<8x256xf32>
    %206 = arith.mulf %203, %205 : vector<8x256xf32>
    %207 = arith.addf %202, %206 : vector<8x256xf32>
    %c4 = arith.constant 4 : index
    %c0_30 = arith.constant 0 : index
    %c0_31 = arith.constant 0 : index
    %208 = vector.load %arg2[%c4, %c0_30, %c0_31] : memref<7x1x256xf32, #tpu.memory_space<vmem>>, vector<1x1x256xf32>
    %209 = vector.shape_cast %208 : vector<1x1x256xf32> to vector<1x256xf32>
    %210 = vector.broadcast %209 : vector<1x256xf32> to vector<8x256xf32>
    %211 = arith.mulf %207, %210 : vector<8x256xf32>
    %212 = arith.addf %171, %211 : vector<8x256xf32>
    %cst_32 = arith.constant 0.000000e+00 : f32
    %213 = vector.broadcast %cst_32 : f32 to vector<8x256xf32>
    %214 = vector.extract_strided_slice %9 {offsets = [0, 18], sizes = [8, 256], strides = [1, 1]} : vector<8x384xf32> to vector<8x256xf32>
    %215 = vector.extract_strided_slice %0 {offsets = [0, 5], sizes = [8, 1], strides = [1, 1]} : vector<8x49xf32> to vector<8x1xf32>
    %216 = vector.broadcast %215 : vector<8x1xf32> to vector<8x256xf32>
    %217 = arith.mulf %214, %216 : vector<8x256xf32>
    %218 = arith.addf %213, %217 : vector<8x256xf32>
    %219 = vector.extract_strided_slice %9 {offsets = [0, 34], sizes = [8, 256], strides = [1, 1]} : vector<8x384xf32> to vector<8x256xf32>
    %220 = vector.extract_strided_slice %0 {offsets = [0, 12], sizes = [8, 1], strides = [1, 1]} : vector<8x49xf32> to vector<8x1xf32>
    %221 = vector.broadcast %220 : vector<8x1xf32> to vector<8x256xf32>
    %222 = arith.mulf %219, %221 : vector<8x256xf32>
    %223 = arith.addf %218, %222 : vector<8x256xf32>
    %224 = vector.extract_strided_slice %9 {offsets = [0, 50], sizes = [8, 256], strides = [1, 1]} : vector<8x384xf32> to vector<8x256xf32>
    %225 = vector.extract_strided_slice %0 {offsets = [0, 19], sizes = [8, 1], strides = [1, 1]} : vector<8x49xf32> to vector<8x1xf32>
    %226 = vector.broadcast %225 : vector<8x1xf32> to vector<8x256xf32>
    %227 = arith.mulf %224, %226 : vector<8x256xf32>
    %228 = arith.addf %223, %227 : vector<8x256xf32>
    %229 = vector.extract_strided_slice %9 {offsets = [0, 66], sizes = [8, 256], strides = [1, 1]} : vector<8x384xf32> to vector<8x256xf32>
    %230 = vector.extract_strided_slice %0 {offsets = [0, 26], sizes = [8, 1], strides = [1, 1]} : vector<8x49xf32> to vector<8x1xf32>
    %231 = vector.broadcast %230 : vector<8x1xf32> to vector<8x256xf32>
    %232 = arith.mulf %229, %231 : vector<8x256xf32>
    %233 = arith.addf %228, %232 : vector<8x256xf32>
    %234 = vector.extract_strided_slice %9 {offsets = [0, 82], sizes = [8, 256], strides = [1, 1]} : vector<8x384xf32> to vector<8x256xf32>
    %235 = vector.extract_strided_slice %0 {offsets = [0, 33], sizes = [8, 1], strides = [1, 1]} : vector<8x49xf32> to vector<8x1xf32>
    %236 = vector.broadcast %235 : vector<8x1xf32> to vector<8x256xf32>
    %237 = arith.mulf %234, %236 : vector<8x256xf32>
    %238 = arith.addf %233, %237 : vector<8x256xf32>
    %239 = vector.extract_strided_slice %9 {offsets = [0, 98], sizes = [8, 256], strides = [1, 1]} : vector<8x384xf32> to vector<8x256xf32>
    %240 = vector.extract_strided_slice %0 {offsets = [0, 40], sizes = [8, 1], strides = [1, 1]} : vector<8x49xf32> to vector<8x1xf32>
    %241 = vector.broadcast %240 : vector<8x1xf32> to vector<8x256xf32>
    %242 = arith.mulf %239, %241 : vector<8x256xf32>
    %243 = arith.addf %238, %242 : vector<8x256xf32>
    %244 = vector.extract_strided_slice %9 {offsets = [0, 114], sizes = [8, 256], strides = [1, 1]} : vector<8x384xf32> to vector<8x256xf32>
    %245 = vector.extract_strided_slice %0 {offsets = [0, 47], sizes = [8, 1], strides = [1, 1]} : vector<8x49xf32> to vector<8x1xf32>
    %246 = vector.broadcast %245 : vector<8x1xf32> to vector<8x256xf32>
    %247 = arith.mulf %244, %246 : vector<8x256xf32>
    %248 = arith.addf %243, %247 : vector<8x256xf32>
    %c5 = arith.constant 5 : index
    %c0_33 = arith.constant 0 : index
    %c0_34 = arith.constant 0 : index
    %249 = vector.load %arg2[%c5, %c0_33, %c0_34] : memref<7x1x256xf32, #tpu.memory_space<vmem>>, vector<1x1x256xf32>
    %250 = vector.shape_cast %249 : vector<1x1x256xf32> to vector<1x256xf32>
    %251 = vector.broadcast %250 : vector<1x256xf32> to vector<8x256xf32>
    %252 = arith.mulf %248, %251 : vector<8x256xf32>
    %253 = arith.addf %212, %252 : vector<8x256xf32>
    %cst_35 = arith.constant 0.000000e+00 : f32
    %254 = vector.broadcast %cst_35 : f32 to vector<8x256xf32>
    %255 = vector.extract_strided_slice %9 {offsets = [0, 19], sizes = [8, 256], strides = [1, 1]} : vector<8x384xf32> to vector<8x256xf32>
    %256 = vector.extract_strided_slice %0 {offsets = [0, 6], sizes = [8, 1], strides = [1, 1]} : vector<8x49xf32> to vector<8x1xf32>
    %257 = vector.broadcast %256 : vector<8x1xf32> to vector<8x256xf32>
    %258 = arith.mulf %255, %257 : vector<8x256xf32>
    %259 = arith.addf %254, %258 : vector<8x256xf32>
    %260 = vector.extract_strided_slice %9 {offsets = [0, 35], sizes = [8, 256], strides = [1, 1]} : vector<8x384xf32> to vector<8x256xf32>
    %261 = vector.extract_strided_slice %0 {offsets = [0, 13], sizes = [8, 1], strides = [1, 1]} : vector<8x49xf32> to vector<8x1xf32>
    %262 = vector.broadcast %261 : vector<8x1xf32> to vector<8x256xf32>
    %263 = arith.mulf %260, %262 : vector<8x256xf32>
    %264 = arith.addf %259, %263 : vector<8x256xf32>
    %265 = vector.extract_strided_slice %9 {offsets = [0, 51], sizes = [8, 256], strides = [1, 1]} : vector<8x384xf32> to vector<8x256xf32>
    %266 = vector.extract_strided_slice %0 {offsets = [0, 20], sizes = [8, 1], strides = [1, 1]} : vector<8x49xf32> to vector<8x1xf32>
    %267 = vector.broadcast %266 : vector<8x1xf32> to vector<8x256xf32>
    %268 = arith.mulf %265, %267 : vector<8x256xf32>
    %269 = arith.addf %264, %268 : vector<8x256xf32>
    %270 = vector.extract_strided_slice %9 {offsets = [0, 67], sizes = [8, 256], strides = [1, 1]} : vector<8x384xf32> to vector<8x256xf32>
    %271 = vector.extract_strided_slice %0 {offsets = [0, 27], sizes = [8, 1], strides = [1, 1]} : vector<8x49xf32> to vector<8x1xf32>
    %272 = vector.broadcast %271 : vector<8x1xf32> to vector<8x256xf32>
    %273 = arith.mulf %270, %272 : vector<8x256xf32>
    %274 = arith.addf %269, %273 : vector<8x256xf32>
    %275 = vector.extract_strided_slice %9 {offsets = [0, 83], sizes = [8, 256], strides = [1, 1]} : vector<8x384xf32> to vector<8x256xf32>
    %276 = vector.extract_strided_slice %0 {offsets = [0, 34], sizes = [8, 1], strides = [1, 1]} : vector<8x49xf32> to vector<8x1xf32>
    %277 = vector.broadcast %276 : vector<8x1xf32> to vector<8x256xf32>
    %278 = arith.mulf %275, %277 : vector<8x256xf32>
    %279 = arith.addf %274, %278 : vector<8x256xf32>
    %280 = vector.extract_strided_slice %9 {offsets = [0, 99], sizes = [8, 256], strides = [1, 1]} : vector<8x384xf32> to vector<8x256xf32>
    %281 = vector.extract_strided_slice %0 {offsets = [0, 41], sizes = [8, 1], strides = [1, 1]} : vector<8x49xf32> to vector<8x1xf32>
    %282 = vector.broadcast %281 : vector<8x1xf32> to vector<8x256xf32>
    %283 = arith.mulf %280, %282 : vector<8x256xf32>
    %284 = arith.addf %279, %283 : vector<8x256xf32>
    %285 = vector.extract_strided_slice %9 {offsets = [0, 115], sizes = [8, 256], strides = [1, 1]} : vector<8x384xf32> to vector<8x256xf32>
    %286 = vector.extract_strided_slice %0 {offsets = [0, 48], sizes = [8, 1], strides = [1, 1]} : vector<8x49xf32> to vector<8x1xf32>
    %287 = vector.broadcast %286 : vector<8x1xf32> to vector<8x256xf32>
    %288 = arith.mulf %285, %287 : vector<8x256xf32>
    %289 = arith.addf %284, %288 : vector<8x256xf32>
    %c6 = arith.constant 6 : index
    %c0_36 = arith.constant 0 : index
    %c0_37 = arith.constant 0 : index
    %290 = vector.load %arg2[%c6, %c0_36, %c0_37] : memref<7x1x256xf32, #tpu.memory_space<vmem>>, vector<1x1x256xf32>
    %291 = vector.shape_cast %290 : vector<1x1x256xf32> to vector<1x256xf32>
    %292 = vector.broadcast %291 : vector<1x256xf32> to vector<8x256xf32>
    %293 = arith.mulf %289, %292 : vector<8x256xf32>
    %294 = arith.addf %253, %293 : vector<8x256xf32>
    %295 = vector.broadcast %1 : vector<8x1xf32> to vector<8x256xf32>
    %296 = arith.addf %294, %295 : vector<8x256xf32>
    %cst_38 = arith.constant dense<0.000000e+00> : vector<256xf32>
    %297 = vector.multi_reduction <add>, %296, %cst_38 [0] : vector<8x256xf32> to vector<256xf32>
    %298 = vector.shape_cast %297 : vector<256xf32> to vector<1x256xf32>
    %cst_39 = arith.constant 8.000000e+00 : f32
    %299 = vector.broadcast %cst_39 : f32 to vector<1x256xf32>
    %300 = arith.divf %298, %299 : vector<1x256xf32>
    %301 = vector.broadcast %300 : vector<1x256xf32> to vector<8x256xf32>
    %302 = arith.subf %296, %301 : vector<8x256xf32>
    %303 = arith.mulf %302, %302 : vector<8x256xf32>
    %cst_40 = arith.constant dense<0.000000e+00> : vector<256xf32>
    %304 = vector.multi_reduction <add>, %303, %cst_40 [0] : vector<8x256xf32> to vector<256xf32>
    %305 = vector.shape_cast %304 : vector<256xf32> to vector<1x256xf32>
    %cst_41 = arith.constant 8.000000e+00 : f32
    %306 = vector.broadcast %cst_41 : f32 to vector<1x256xf32>
    %307 = arith.divf %305, %306 : vector<1x256xf32>
    %308 = vector.broadcast %300 : vector<1x256xf32> to vector<8x256xf32>
    %309 = arith.subf %296, %308 : vector<8x256xf32>
    %cst_42 = arith.constant 9.99999974E-6 : f32
    %310 = vector.broadcast %cst_42 : f32 to vector<1x256xf32>
    %311 = arith.addf %307, %310 : vector<1x256xf32>
    %312 = math.rsqrt %311 : vector<1x256xf32>
    %313 = vector.broadcast %312 : vector<1x256xf32> to vector<8x256xf32>
    %314 = arith.mulf %309, %313 : vector<8x256xf32>
    %315 = vector.broadcast %2 : vector<8x1xf32> to vector<8x256xf32>
    %316 = arith.mulf %314, %315 : vector<8x256xf32>
    %317 = vector.broadcast %3 : vector<8x1xf32> to vector<8x256xf32>
    %318 = arith.addf %316, %317 : vector<8x256xf32>
    %cst_43 = arith.constant dense<0.000000e+00> : vector<32x256xf32>
    %319 = tpu.matmul %4, %318, %cst_43 {dimension_numbers = #tpu.dot_dimension_numbers<[1], [0], [0], [1], [0, 0, 1, 1], [], []>} : vector<32x8xf32>, vector<8x256xf32>, vector<32x256xf32> -> vector<32x256xf32>
    %320 = vector.broadcast %5 : vector<32x1xf32> to vector<32x256xf32>
    %321 = arith.addf %319, %320 : vector<32x256xf32>
    %cst_44 = arith.constant 5.000000e-01 : f32
    %322 = vector.broadcast %cst_44 : f32 to vector<32x256xf32>
    %323 = arith.mulf %322, %321 : vector<32x256xf32>
    %cst_45 = arith.constant 4.471500e-02 : f32
    %324 = vector.broadcast %cst_45 : f32 to vector<32x256xf32>
    %325 = arith.mulf %324, %321 : vector<32x256xf32>
    %326 = arith.mulf %325, %321 : vector<32x256xf32>
    %327 = arith.mulf %326, %321 : vector<32x256xf32>
    %328 = arith.addf %321, %327 : vector<32x256xf32>
    %cst_46 = arith.constant 0.797884583 : f32
    %329 = vector.broadcast %cst_46 : f32 to vector<32x256xf32>
    %330 = arith.mulf %329, %328 : vector<32x256xf32>
    %331 = math.tanh %330 : vector<32x256xf32>
    %cst_47 = arith.constant 1.000000e+00 : f32
    %332 = vector.broadcast %cst_47 : f32 to vector<32x256xf32>
    %333 = arith.addf %332, %331 : vector<32x256xf32>
    %334 = arith.mulf %323, %333 : vector<32x256xf32>
    %cst_48 = arith.constant dense<0.000000e+00> : vector<8x256xf32>
    %335 = tpu.matmul %6, %334, %cst_48 {dimension_numbers = #tpu.dot_dimension_numbers<[1], [0], [0], [1], [0, 0, 1, 1], [], []>} : vector<8x32xf32>, vector<32x256xf32>, vector<8x256xf32> -> vector<8x256xf32>
    %336 = vector.broadcast %7 : vector<8x1xf32> to vector<8x256xf32>
    %337 = arith.addf %335, %336 : vector<8x256xf32>
    %338 = arith.addf %10, %337 : vector<8x256xf32>
    %c0_49 = arith.constant 0 : index
    %c0_50 = arith.constant 0 : index
    %c0_51 = arith.constant 0 : index
    %339 = vector.load %arg11[%c0_49, %c0_50, %c0_51] : memref<2x8x256xf32, #tpu.memory_space<vmem>>, vector<1x8x256xf32>
    %340 = vector.shape_cast %339 : vector<1x8x256xf32> to vector<8x256xf32>
    %341 = vector.shape_cast %338 : vector<8x256xf32> to vector<1x8x256xf32>
    tpu.vector_store %arg11[%c0_49, %c0_50, %c0_51], %341 {strides = array<i32>} : memref<2x8x256xf32, #tpu.memory_space<vmem>>, vector<1x8x256xf32>,
    %c1_52 = arith.constant 1 : index
    %c0_53 = arith.constant 0 : index
    %c0_54 = arith.constant 0 : index
    %342 = vector.load %arg1[%c1_52, %c0_53, %c0_54] : memref<2x8x384xf32, #tpu.memory_space<vmem>>, vector<1x8x384xf32>
    %343 = vector.shape_cast %342 : vector<1x8x384xf32> to vector<8x384xf32>
    %344 = vector.extract_strided_slice %343 {offsets = [0, 64], sizes = [8, 256], strides = [1, 1]} : vector<8x384xf32> to vector<8x256xf32>
    %cst_55 = arith.constant 0.000000e+00 : f32
    %345 = vector.broadcast %cst_55 : f32 to vector<8x256xf32>
    %cst_56 = arith.constant 0.000000e+00 : f32
    %346 = vector.broadcast %cst_56 : f32 to vector<8x256xf32>
    %347 = vector.extract_strided_slice %343 {offsets = [0, 13], sizes = [8, 256], strides = [1, 1]} : vector<8x384xf32> to vector<8x256xf32>
    %348 = vector.extract_strided_slice %0 {offsets = [0, 0], sizes = [8, 1], strides = [1, 1]} : vector<8x49xf32> to vector<8x1xf32>
    %349 = vector.broadcast %348 : vector<8x1xf32> to vector<8x256xf32>
    %350 = arith.mulf %347, %349 : vector<8x256xf32>
    %351 = arith.addf %346, %350 : vector<8x256xf32>
    %352 = vector.extract_strided_slice %343 {offsets = [0, 29], sizes = [8, 256], strides = [1, 1]} : vector<8x384xf32> to vector<8x256xf32>
    %353 = vector.extract_strided_slice %0 {offsets = [0, 7], sizes = [8, 1], strides = [1, 1]} : vector<8x49xf32> to vector<8x1xf32>
    %354 = vector.broadcast %353 : vector<8x1xf32> to vector<8x256xf32>
    %355 = arith.mulf %352, %354 : vector<8x256xf32>
    %356 = arith.addf %351, %355 : vector<8x256xf32>
    %357 = vector.extract_strided_slice %343 {offsets = [0, 45], sizes = [8, 256], strides = [1, 1]} : vector<8x384xf32> to vector<8x256xf32>
    %358 = vector.extract_strided_slice %0 {offsets = [0, 14], sizes = [8, 1], strides = [1, 1]} : vector<8x49xf32> to vector<8x1xf32>
    %359 = vector.broadcast %358 : vector<8x1xf32> to vector<8x256xf32>
    %360 = arith.mulf %357, %359 : vector<8x256xf32>
    %361 = arith.addf %356, %360 : vector<8x256xf32>
    %362 = vector.extract_strided_slice %343 {offsets = [0, 61], sizes = [8, 256], strides = [1, 1]} : vector<8x384xf32> to vector<8x256xf32>
    %363 = vector.extract_strided_slice %0 {offsets = [0, 21], sizes = [8, 1], strides = [1, 1]} : vector<8x49xf32> to vector<8x1xf32>
    %364 = vector.broadcast %363 : vector<8x1xf32> to vector<8x256xf32>
    %365 = arith.mulf %362, %364 : vector<8x256xf32>
    %366 = arith.addf %361, %365 : vector<8x256xf32>
    %367 = vector.extract_strided_slice %343 {offsets = [0, 77], sizes = [8, 256], strides = [1, 1]} : vector<8x384xf32> to vector<8x256xf32>
    %368 = vector.extract_strided_slice %0 {offsets = [0, 28], sizes = [8, 1], strides = [1, 1]} : vector<8x49xf32> to vector<8x1xf32>
    %369 = vector.broadcast %368 : vector<8x1xf32> to vector<8x256xf32>
    %370 = arith.mulf %367, %369 : vector<8x256xf32>
    %371 = arith.addf %366, %370 : vector<8x256xf32>
    %372 = vector.extract_strided_slice %343 {offsets = [0, 93], sizes = [8, 256], strides = [1, 1]} : vector<8x384xf32> to vector<8x256xf32>
    %373 = vector.extract_strided_slice %0 {offsets = [0, 35], sizes = [8, 1], strides = [1, 1]} : vector<8x49xf32> to vector<8x1xf32>
    %374 = vector.broadcast %373 : vector<8x1xf32> to vector<8x256xf32>
    %375 = arith.mulf %372, %374 : vector<8x256xf32>
    %376 = arith.addf %371, %375 : vector<8x256xf32>
    %377 = vector.extract_strided_slice %343 {offsets = [0, 109], sizes = [8, 256], strides = [1, 1]} : vector<8x384xf32> to vector<8x256xf32>
    %378 = vector.extract_strided_slice %0 {offsets = [0, 42], sizes = [8, 1], strides = [1, 1]} : vector<8x49xf32> to vector<8x1xf32>
    %379 = vector.broadcast %378 : vector<8x1xf32> to vector<8x256xf32>
    %380 = arith.mulf %377, %379 : vector<8x256xf32>
    %381 = arith.addf %376, %380 : vector<8x256xf32>
    %c0_57 = arith.constant 0 : index
    %c0_58 = arith.constant 0 : index
    %c0_59 = arith.constant 0 : index
    %382 = vector.load %arg2[%c0_57, %c0_58, %c0_59] : memref<7x1x256xf32, #tpu.memory_space<vmem>>, vector<1x1x256xf32>
    %383 = vector.shape_cast %382 : vector<1x1x256xf32> to vector<1x256xf32>
    %384 = vector.broadcast %383 : vector<1x256xf32> to vector<8x256xf32>
    %385 = arith.mulf %381, %384 : vector<8x256xf32>
    %386 = arith.addf %345, %385 : vector<8x256xf32>
    %cst_60 = arith.constant 0.000000e+00 : f32
    %387 = vector.broadcast %cst_60 : f32 to vector<8x256xf32>
    %388 = vector.extract_strided_slice %343 {offsets = [0, 14], sizes = [8, 256], strides = [1, 1]} : vector<8x384xf32> to vector<8x256xf32>
    %389 = vector.extract_strided_slice %0 {offsets = [0, 1], sizes = [8, 1], strides = [1, 1]} : vector<8x49xf32> to vector<8x1xf32>
    %390 = vector.broadcast %389 : vector<8x1xf32> to vector<8x256xf32>
    %391 = arith.mulf %388, %390 : vector<8x256xf32>
    %392 = arith.addf %387, %391 : vector<8x256xf32>
    %393 = vector.extract_strided_slice %343 {offsets = [0, 30], sizes = [8, 256], strides = [1, 1]} : vector<8x384xf32> to vector<8x256xf32>
    %394 = vector.extract_strided_slice %0 {offsets = [0, 8], sizes = [8, 1], strides = [1, 1]} : vector<8x49xf32> to vector<8x1xf32>
    %395 = vector.broadcast %394 : vector<8x1xf32> to vector<8x256xf32>
    %396 = arith.mulf %393, %395 : vector<8x256xf32>
    %397 = arith.addf %392, %396 : vector<8x256xf32>
    %398 = vector.extract_strided_slice %343 {offsets = [0, 46], sizes = [8, 256], strides = [1, 1]} : vector<8x384xf32> to vector<8x256xf32>
    %399 = vector.extract_strided_slice %0 {offsets = [0, 15], sizes = [8, 1], strides = [1, 1]} : vector<8x49xf32> to vector<8x1xf32>
    %400 = vector.broadcast %399 : vector<8x1xf32> to vector<8x256xf32>
    %401 = arith.mulf %398, %400 : vector<8x256xf32>
    %402 = arith.addf %397, %401 : vector<8x256xf32>
    %403 = vector.extract_strided_slice %343 {offsets = [0, 62], sizes = [8, 256], strides = [1, 1]} : vector<8x384xf32> to vector<8x256xf32>
    %404 = vector.extract_strided_slice %0 {offsets = [0, 22], sizes = [8, 1], strides = [1, 1]} : vector<8x49xf32> to vector<8x1xf32>
    %405 = vector.broadcast %404 : vector<8x1xf32> to vector<8x256xf32>
    %406 = arith.mulf %403, %405 : vector<8x256xf32>
    %407 = arith.addf %402, %406 : vector<8x256xf32>
    %408 = vector.extract_strided_slice %343 {offsets = [0, 78], sizes = [8, 256], strides = [1, 1]} : vector<8x384xf32> to vector<8x256xf32>
    %409 = vector.extract_strided_slice %0 {offsets = [0, 29], sizes = [8, 1], strides = [1, 1]} : vector<8x49xf32> to vector<8x1xf32>
    %410 = vector.broadcast %409 : vector<8x1xf32> to vector<8x256xf32>
    %411 = arith.mulf %408, %410 : vector<8x256xf32>
    %412 = arith.addf %407, %411 : vector<8x256xf32>
    %413 = vector.extract_strided_slice %343 {offsets = [0, 94], sizes = [8, 256], strides = [1, 1]} : vector<8x384xf32> to vector<8x256xf32>
    %414 = vector.extract_strided_slice %0 {offsets = [0, 36], sizes = [8, 1], strides = [1, 1]} : vector<8x49xf32> to vector<8x1xf32>
    %415 = vector.broadcast %414 : vector<8x1xf32> to vector<8x256xf32>
    %416 = arith.mulf %413, %415 : vector<8x256xf32>
    %417 = arith.addf %412, %416 : vector<8x256xf32>
    %418 = vector.extract_strided_slice %343 {offsets = [0, 110], sizes = [8, 256], strides = [1, 1]} : vector<8x384xf32> to vector<8x256xf32>
    %419 = vector.extract_strided_slice %0 {offsets = [0, 43], sizes = [8, 1], strides = [1, 1]} : vector<8x49xf32> to vector<8x1xf32>
    %420 = vector.broadcast %419 : vector<8x1xf32> to vector<8x256xf32>
    %421 = arith.mulf %418, %420 : vector<8x256xf32>
    %422 = arith.addf %417, %421 : vector<8x256xf32>
    %c1_61 = arith.constant 1 : index
    %c0_62 = arith.constant 0 : index
    %c0_63 = arith.constant 0 : index
    %423 = vector.load %arg2[%c1_61, %c0_62, %c0_63] : memref<7x1x256xf32, #tpu.memory_space<vmem>>, vector<1x1x256xf32>
    %424 = vector.shape_cast %423 : vector<1x1x256xf32> to vector<1x256xf32>
    %425 = vector.broadcast %424 : vector<1x256xf32> to vector<8x256xf32>
    %426 = arith.mulf %422, %425 : vector<8x256xf32>
    %427 = arith.addf %386, %426 : vector<8x256xf32>
    %cst_64 = arith.constant 0.000000e+00 : f32
    %428 = vector.broadcast %cst_64 : f32 to vector<8x256xf32>
    %429 = vector.extract_strided_slice %343 {offsets = [0, 15], sizes = [8, 256], strides = [1, 1]} : vector<8x384xf32> to vector<8x256xf32>
    %430 = vector.extract_strided_slice %0 {offsets = [0, 2], sizes = [8, 1], strides = [1, 1]} : vector<8x49xf32> to vector<8x1xf32>
    %431 = vector.broadcast %430 : vector<8x1xf32> to vector<8x256xf32>
    %432 = arith.mulf %429, %431 : vector<8x256xf32>
    %433 = arith.addf %428, %432 : vector<8x256xf32>
    %434 = vector.extract_strided_slice %343 {offsets = [0, 31], sizes = [8, 256], strides = [1, 1]} : vector<8x384xf32> to vector<8x256xf32>
    %435 = vector.extract_strided_slice %0 {offsets = [0, 9], sizes = [8, 1], strides = [1, 1]} : vector<8x49xf32> to vector<8x1xf32>
    %436 = vector.broadcast %435 : vector<8x1xf32> to vector<8x256xf32>
    %437 = arith.mulf %434, %436 : vector<8x256xf32>
    %438 = arith.addf %433, %437 : vector<8x256xf32>
    %439 = vector.extract_strided_slice %343 {offsets = [0, 47], sizes = [8, 256], strides = [1, 1]} : vector<8x384xf32> to vector<8x256xf32>
    %440 = vector.extract_strided_slice %0 {offsets = [0, 16], sizes = [8, 1], strides = [1, 1]} : vector<8x49xf32> to vector<8x1xf32>
    %441 = vector.broadcast %440 : vector<8x1xf32> to vector<8x256xf32>
    %442 = arith.mulf %439, %441 : vector<8x256xf32>
    %443 = arith.addf %438, %442 : vector<8x256xf32>
    %444 = vector.extract_strided_slice %343 {offsets = [0, 63], sizes = [8, 256], strides = [1, 1]} : vector<8x384xf32> to vector<8x256xf32>
    %445 = vector.extract_strided_slice %0 {offsets = [0, 23], sizes = [8, 1], strides = [1, 1]} : vector<8x49xf32> to vector<8x1xf32>
    %446 = vector.broadcast %445 : vector<8x1xf32> to vector<8x256xf32>
    %447 = arith.mulf %444, %446 : vector<8x256xf32>
    %448 = arith.addf %443, %447 : vector<8x256xf32>
    %449 = vector.extract_strided_slice %343 {offsets = [0, 79], sizes = [8, 256], strides = [1, 1]} : vector<8x384xf32> to vector<8x256xf32>
    %450 = vector.extract_strided_slice %0 {offsets = [0, 30], sizes = [8, 1], strides = [1, 1]} : vector<8x49xf32> to vector<8x1xf32>
    %451 = vector.broadcast %450 : vector<8x1xf32> to vector<8x256xf32>
    %452 = arith.mulf %449, %451 : vector<8x256xf32>
    %453 = arith.addf %448, %452 : vector<8x256xf32>
    %454 = vector.extract_strided_slice %343 {offsets = [0, 95], sizes = [8, 256], strides = [1, 1]} : vector<8x384xf32> to vector<8x256xf32>
    %455 = vector.extract_strided_slice %0 {offsets = [0, 37], sizes = [8, 1], strides = [1, 1]} : vector<8x49xf32> to vector<8x1xf32>
    %456 = vector.broadcast %455 : vector<8x1xf32> to vector<8x256xf32>
    %457 = arith.mulf %454, %456 : vector<8x256xf32>
    %458 = arith.addf %453, %457 : vector<8x256xf32>
    %459 = vector.extract_strided_slice %343 {offsets = [0, 111], sizes = [8, 256], strides = [1, 1]} : vector<8x384xf32> to vector<8x256xf32>
    %460 = vector.extract_strided_slice %0 {offsets = [0, 44], sizes = [8, 1], strides = [1, 1]} : vector<8x49xf32> to vector<8x1xf32>
    %461 = vector.broadcast %460 : vector<8x1xf32> to vector<8x256xf32>
    %462 = arith.mulf %459, %461 : vector<8x256xf32>
    %463 = arith.addf %458, %462 : vector<8x256xf32>
    %c2_65 = arith.constant 2 : index
    %c0_66 = arith.constant 0 : index
    %c0_67 = arith.constant 0 : index
    %464 = vector.load %arg2[%c2_65, %c0_66, %c0_67] : memref<7x1x256xf32, #tpu.memory_space<vmem>>, vector<1x1x256xf32>
    %465 = vector.shape_cast %464 : vector<1x1x256xf32> to vector<1x256xf32>
    %466 = vector.broadcast %465 : vector<1x256xf32> to vector<8x256xf32>
    %467 = arith.mulf %463, %466 : vector<8x256xf32>
    %468 = arith.addf %427, %467 : vector<8x256xf32>
    %cst_68 = arith.constant 0.000000e+00 : f32
    %469 = vector.broadcast %cst_68 : f32 to vector<8x256xf32>
    %470 = vector.extract_strided_slice %343 {offsets = [0, 16], sizes = [8, 256], strides = [1, 1]} : vector<8x384xf32> to vector<8x256xf32>
    %471 = vector.extract_strided_slice %0 {offsets = [0, 3], sizes = [8, 1], strides = [1, 1]} : vector<8x49xf32> to vector<8x1xf32>
    %472 = vector.broadcast %471 : vector<8x1xf32> to vector<8x256xf32>
    %473 = arith.mulf %470, %472 : vector<8x256xf32>
    %474 = arith.addf %469, %473 : vector<8x256xf32>
    %475 = vector.extract_strided_slice %343 {offsets = [0, 32], sizes = [8, 256], strides = [1, 1]} : vector<8x384xf32> to vector<8x256xf32>
    %476 = vector.extract_strided_slice %0 {offsets = [0, 10], sizes = [8, 1], strides = [1, 1]} : vector<8x49xf32> to vector<8x1xf32>
    %477 = vector.broadcast %476 : vector<8x1xf32> to vector<8x256xf32>
    %478 = arith.mulf %475, %477 : vector<8x256xf32>
    %479 = arith.addf %474, %478 : vector<8x256xf32>
    %480 = vector.extract_strided_slice %343 {offsets = [0, 48], sizes = [8, 256], strides = [1, 1]} : vector<8x384xf32> to vector<8x256xf32>
    %481 = vector.extract_strided_slice %0 {offsets = [0, 17], sizes = [8, 1], strides = [1, 1]} : vector<8x49xf32> to vector<8x1xf32>
    %482 = vector.broadcast %481 : vector<8x1xf32> to vector<8x256xf32>
    %483 = arith.mulf %480, %482 : vector<8x256xf32>
    %484 = arith.addf %479, %483 : vector<8x256xf32>
    %485 = vector.extract_strided_slice %343 {offsets = [0, 64], sizes = [8, 256], strides = [1, 1]} : vector<8x384xf32> to vector<8x256xf32>
    %486 = vector.extract_strided_slice %0 {offsets = [0, 24], sizes = [8, 1], strides = [1, 1]} : vector<8x49xf32> to vector<8x1xf32>
    %487 = vector.broadcast %486 : vector<8x1xf32> to vector<8x256xf32>
    %488 = arith.mulf %485, %487 : vector<8x256xf32>
    %489 = arith.addf %484, %488 : vector<8x256xf32>
    %490 = vector.extract_strided_slice %343 {offsets = [0, 80], sizes = [8, 256], strides = [1, 1]} : vector<8x384xf32> to vector<8x256xf32>
    %491 = vector.extract_strided_slice %0 {offsets = [0, 31], sizes = [8, 1], strides = [1, 1]} : vector<8x49xf32> to vector<8x1xf32>
    %492 = vector.broadcast %491 : vector<8x1xf32> to vector<8x256xf32>
    %493 = arith.mulf %490, %492 : vector<8x256xf32>
    %494 = arith.addf %489, %493 : vector<8x256xf32>
    %495 = vector.extract_strided_slice %343 {offsets = [0, 96], sizes = [8, 256], strides = [1, 1]} : vector<8x384xf32> to vector<8x256xf32>
    %496 = vector.extract_strided_slice %0 {offsets = [0, 38], sizes = [8, 1], strides = [1, 1]} : vector<8x49xf32> to vector<8x1xf32>
    %497 = vector.broadcast %496 : vector<8x1xf32> to vector<8x256xf32>
    %498 = arith.mulf %495, %497 : vector<8x256xf32>
    %499 = arith.addf %494, %498 : vector<8x256xf32>
    %500 = vector.extract_strided_slice %343 {offsets = [0, 112], sizes = [8, 256], strides = [1, 1]} : vector<8x384xf32> to vector<8x256xf32>
    %501 = vector.extract_strided_slice %0 {offsets = [0, 45], sizes = [8, 1], strides = [1, 1]} : vector<8x49xf32> to vector<8x1xf32>
    %502 = vector.broadcast %501 : vector<8x1xf32> to vector<8x256xf32>
    %503 = arith.mulf %500, %502 : vector<8x256xf32>
    %504 = arith.addf %499, %503 : vector<8x256xf32>
    %505 = arith.addf %468, %504 : vector<8x256xf32>
    %cst_69 = arith.constant 0.000000e+00 : f32
    %506 = vector.broadcast %cst_69 : f32 to vector<8x256xf32>
    %507 = vector.extract_strided_slice %343 {offsets = [0, 17], sizes = [8, 256], strides = [1, 1]} : vector<8x384xf32> to vector<8x256xf32>
    %508 = vector.extract_strided_slice %0 {offsets = [0, 4], sizes = [8, 1], strides = [1, 1]} : vector<8x49xf32> to vector<8x1xf32>
    %509 = vector.broadcast %508 : vector<8x1xf32> to vector<8x256xf32>
    %510 = arith.mulf %507, %509 : vector<8x256xf32>
    %511 = arith.addf %506, %510 : vector<8x256xf32>
    %512 = vector.extract_strided_slice %343 {offsets = [0, 33], sizes = [8, 256], strides = [1, 1]} : vector<8x384xf32> to vector<8x256xf32>
    %513 = vector.extract_strided_slice %0 {offsets = [0, 11], sizes = [8, 1], strides = [1, 1]} : vector<8x49xf32> to vector<8x1xf32>
    %514 = vector.broadcast %513 : vector<8x1xf32> to vector<8x256xf32>
    %515 = arith.mulf %512, %514 : vector<8x256xf32>
    %516 = arith.addf %511, %515 : vector<8x256xf32>
    %517 = vector.extract_strided_slice %343 {offsets = [0, 49], sizes = [8, 256], strides = [1, 1]} : vector<8x384xf32> to vector<8x256xf32>
    %518 = vector.extract_strided_slice %0 {offsets = [0, 18], sizes = [8, 1], strides = [1, 1]} : vector<8x49xf32> to vector<8x1xf32>
    %519 = vector.broadcast %518 : vector<8x1xf32> to vector<8x256xf32>
    %520 = arith.mulf %517, %519 : vector<8x256xf32>
    %521 = arith.addf %516, %520 : vector<8x256xf32>
    %522 = vector.extract_strided_slice %343 {offsets = [0, 65], sizes = [8, 256], strides = [1, 1]} : vector<8x384xf32> to vector<8x256xf32>
    %523 = vector.extract_strided_slice %0 {offsets = [0, 25], sizes = [8, 1], strides = [1, 1]} : vector<8x49xf32> to vector<8x1xf32>
    %524 = vector.broadcast %523 : vector<8x1xf32> to vector<8x256xf32>
    %525 = arith.mulf %522, %524 : vector<8x256xf32>
    %526 = arith.addf %521, %525 : vector<8x256xf32>
    %527 = vector.extract_strided_slice %343 {offsets = [0, 81], sizes = [8, 256], strides = [1, 1]} : vector<8x384xf32> to vector<8x256xf32>
    %528 = vector.extract_strided_slice %0 {offsets = [0, 32], sizes = [8, 1], strides = [1, 1]} : vector<8x49xf32> to vector<8x1xf32>
    %529 = vector.broadcast %528 : vector<8x1xf32> to vector<8x256xf32>
    %530 = arith.mulf %527, %529 : vector<8x256xf32>
    %531 = arith.addf %526, %530 : vector<8x256xf32>
    %532 = vector.extract_strided_slice %343 {offsets = [0, 97], sizes = [8, 256], strides = [1, 1]} : vector<8x384xf32> to vector<8x256xf32>
    %533 = vector.extract_strided_slice %0 {offsets = [0, 39], sizes = [8, 1], strides = [1, 1]} : vector<8x49xf32> to vector<8x1xf32>
    %534 = vector.broadcast %533 : vector<8x1xf32> to vector<8x256xf32>
    %535 = arith.mulf %532, %534 : vector<8x256xf32>
    %536 = arith.addf %531, %535 : vector<8x256xf32>
    %537 = vector.extract_strided_slice %343 {offsets = [0, 113], sizes = [8, 256], strides = [1, 1]} : vector<8x384xf32> to vector<8x256xf32>
    %538 = vector.extract_strided_slice %0 {offsets = [0, 46], sizes = [8, 1], strides = [1, 1]} : vector<8x49xf32> to vector<8x1xf32>
    %539 = vector.broadcast %538 : vector<8x1xf32> to vector<8x256xf32>
    %540 = arith.mulf %537, %539 : vector<8x256xf32>
    %541 = arith.addf %536, %540 : vector<8x256xf32>
    %c4_70 = arith.constant 4 : index
    %c0_71 = arith.constant 0 : index
    %c0_72 = arith.constant 0 : index
    %542 = vector.load %arg2[%c4_70, %c0_71, %c0_72] : memref<7x1x256xf32, #tpu.memory_space<vmem>>, vector<1x1x256xf32>
    %543 = vector.shape_cast %542 : vector<1x1x256xf32> to vector<1x256xf32>
    %544 = vector.broadcast %543 : vector<1x256xf32> to vector<8x256xf32>
    %545 = arith.mulf %541, %544 : vector<8x256xf32>
    %546 = arith.addf %505, %545 : vector<8x256xf32>
    %cst_73 = arith.constant 0.000000e+00 : f32
    %547 = vector.broadcast %cst_73 : f32 to vector<8x256xf32>
    %548 = vector.extract_strided_slice %343 {offsets = [0, 18], sizes = [8, 256], strides = [1, 1]} : vector<8x384xf32> to vector<8x256xf32>
    %549 = vector.extract_strided_slice %0 {offsets = [0, 5], sizes = [8, 1], strides = [1, 1]} : vector<8x49xf32> to vector<8x1xf32>
    %550 = vector.broadcast %549 : vector<8x1xf32> to vector<8x256xf32>
    %551 = arith.mulf %548, %550 : vector<8x256xf32>
    %552 = arith.addf %547, %551 : vector<8x256xf32>
    %553 = vector.extract_strided_slice %343 {offsets = [0, 34], sizes = [8, 256], strides = [1, 1]} : vector<8x384xf32> to vector<8x256xf32>
    %554 = vector.extract_strided_slice %0 {offsets = [0, 12], sizes = [8, 1], strides = [1, 1]} : vector<8x49xf32> to vector<8x1xf32>
    %555 = vector.broadcast %554 : vector<8x1xf32> to vector<8x256xf32>
    %556 = arith.mulf %553, %555 : vector<8x256xf32>
    %557 = arith.addf %552, %556 : vector<8x256xf32>
    %558 = vector.extract_strided_slice %343 {offsets = [0, 50], sizes = [8, 256], strides = [1, 1]} : vector<8x384xf32> to vector<8x256xf32>
    %559 = vector.extract_strided_slice %0 {offsets = [0, 19], sizes = [8, 1], strides = [1, 1]} : vector<8x49xf32> to vector<8x1xf32>
    %560 = vector.broadcast %559 : vector<8x1xf32> to vector<8x256xf32>
    %561 = arith.mulf %558, %560 : vector<8x256xf32>
    %562 = arith.addf %557, %561 : vector<8x256xf32>
    %563 = vector.extract_strided_slice %343 {offsets = [0, 66], sizes = [8, 256], strides = [1, 1]} : vector<8x384xf32> to vector<8x256xf32>
    %564 = vector.extract_strided_slice %0 {offsets = [0, 26], sizes = [8, 1], strides = [1, 1]} : vector<8x49xf32> to vector<8x1xf32>
    %565 = vector.broadcast %564 : vector<8x1xf32> to vector<8x256xf32>
    %566 = arith.mulf %563, %565 : vector<8x256xf32>
    %567 = arith.addf %562, %566 : vector<8x256xf32>
    %568 = vector.extract_strided_slice %343 {offsets = [0, 82], sizes = [8, 256], strides = [1, 1]} : vector<8x384xf32> to vector<8x256xf32>
    %569 = vector.extract_strided_slice %0 {offsets = [0, 33], sizes = [8, 1], strides = [1, 1]} : vector<8x49xf32> to vector<8x1xf32>
    %570 = vector.broadcast %569 : vector<8x1xf32> to vector<8x256xf32>
    %571 = arith.mulf %568, %570 : vector<8x256xf32>
    %572 = arith.addf %567, %571 : vector<8x256xf32>
    %573 = vector.extract_strided_slice %343 {offsets = [0, 98], sizes = [8, 256], strides = [1, 1]} : vector<8x384xf32> to vector<8x256xf32>
    %574 = vector.extract_strided_slice %0 {offsets = [0, 40], sizes = [8, 1], strides = [1, 1]} : vector<8x49xf32> to vector<8x1xf32>
    %575 = vector.broadcast %574 : vector<8x1xf32> to vector<8x256xf32>
    %576 = arith.mulf %573, %575 : vector<8x256xf32>
    %577 = arith.addf %572, %576 : vector<8x256xf32>
    %578 = vector.extract_strided_slice %343 {offsets = [0, 114], sizes = [8, 256], strides = [1, 1]} : vector<8x384xf32> to vector<8x256xf32>
    %579 = vector.extract_strided_slice %0 {offsets = [0, 47], sizes = [8, 1], strides = [1, 1]} : vector<8x49xf32> to vector<8x1xf32>
    %580 = vector.broadcast %579 : vector<8x1xf32> to vector<8x256xf32>
    %581 = arith.mulf %578, %580 : vector<8x256xf32>
    %582 = arith.addf %577, %581 : vector<8x256xf32>
    %c5_74 = arith.constant 5 : index
    %c0_75 = arith.constant 0 : index
    %c0_76 = arith.constant 0 : index
    %583 = vector.load %arg2[%c5_74, %c0_75, %c0_76] : memref<7x1x256xf32, #tpu.memory_space<vmem>>, vector<1x1x256xf32>
    %584 = vector.shape_cast %583 : vector<1x1x256xf32> to vector<1x256xf32>
    %585 = vector.broadcast %584 : vector<1x256xf32> to vector<8x256xf32>
    %586 = arith.mulf %582, %585 : vector<8x256xf32>
    %587 = arith.addf %546, %586 : vector<8x256xf32>
    %cst_77 = arith.constant 0.000000e+00 : f32
    %588 = vector.broadcast %cst_77 : f32 to vector<8x256xf32>
    %589 = vector.extract_strided_slice %343 {offsets = [0, 19], sizes = [8, 256], strides = [1, 1]} : vector<8x384xf32> to vector<8x256xf32>
    %590 = vector.extract_strided_slice %0 {offsets = [0, 6], sizes = [8, 1], strides = [1, 1]} : vector<8x49xf32> to vector<8x1xf32>
    %591 = vector.broadcast %590 : vector<8x1xf32> to vector<8x256xf32>
    %592 = arith.mulf %589, %591 : vector<8x256xf32>
    %593 = arith.addf %588, %592 : vector<8x256xf32>
    %594 = vector.extract_strided_slice %343 {offsets = [0, 35], sizes = [8, 256], strides = [1, 1]} : vector<8x384xf32> to vector<8x256xf32>
    %595 = vector.extract_strided_slice %0 {offsets = [0, 13], sizes = [8, 1], strides = [1, 1]} : vector<8x49xf32> to vector<8x1xf32>
    %596 = vector.broadcast %595 : vector<8x1xf32> to vector<8x256xf32>
    %597 = arith.mulf %594, %596 : vector<8x256xf32>
    %598 = arith.addf %593, %597 : vector<8x256xf32>
    %599 = vector.extract_strided_slice %343 {offsets = [0, 51], sizes = [8, 256], strides = [1, 1]} : vector<8x384xf32> to vector<8x256xf32>
    %600 = vector.extract_strided_slice %0 {offsets = [0, 20], sizes = [8, 1], strides = [1, 1]} : vector<8x49xf32> to vector<8x1xf32>
    %601 = vector.broadcast %600 : vector<8x1xf32> to vector<8x256xf32>
    %602 = arith.mulf %599, %601 : vector<8x256xf32>
    %603 = arith.addf %598, %602 : vector<8x256xf32>
    %604 = vector.extract_strided_slice %343 {offsets = [0, 67], sizes = [8, 256], strides = [1, 1]} : vector<8x384xf32> to vector<8x256xf32>
    %605 = vector.extract_strided_slice %0 {offsets = [0, 27], sizes = [8, 1], strides = [1, 1]} : vector<8x49xf32> to vector<8x1xf32>
    %606 = vector.broadcast %605 : vector<8x1xf32> to vector<8x256xf32>
    %607 = arith.mulf %604, %606 : vector<8x256xf32>
    %608 = arith.addf %603, %607 : vector<8x256xf32>
    %609 = vector.extract_strided_slice %343 {offsets = [0, 83], sizes = [8, 256], strides = [1, 1]} : vector<8x384xf32> to vector<8x256xf32>
    %610 = vector.extract_strided_slice %0 {offsets = [0, 34], sizes = [8, 1], strides = [1, 1]} : vector<8x49xf32> to vector<8x1xf32>
    %611 = vector.broadcast %610 : vector<8x1xf32> to vector<8x256xf32>
    %612 = arith.mulf %609, %611 : vector<8x256xf32>
    %613 = arith.addf %608, %612 : vector<8x256xf32>
    %614 = vector.extract_strided_slice %343 {offsets = [0, 99], sizes = [8, 256], strides = [1, 1]} : vector<8x384xf32> to vector<8x256xf32>
    %615 = vector.extract_strided_slice %0 {offsets = [0, 41], sizes = [8, 1], strides = [1, 1]} : vector<8x49xf32> to vector<8x1xf32>
    %616 = vector.broadcast %615 : vector<8x1xf32> to vector<8x256xf32>
    %617 = arith.mulf %614, %616 : vector<8x256xf32>
    %618 = arith.addf %613, %617 : vector<8x256xf32>
    %619 = vector.extract_strided_slice %343 {offsets = [0, 115], sizes = [8, 256], strides = [1, 1]} : vector<8x384xf32> to vector<8x256xf32>
    %620 = vector.extract_strided_slice %0 {offsets = [0, 48], sizes = [8, 1], strides = [1, 1]} : vector<8x49xf32> to vector<8x1xf32>
    %621 = vector.broadcast %620 : vector<8x1xf32> to vector<8x256xf32>
    %622 = arith.mulf %619, %621 : vector<8x256xf32>
    %623 = arith.addf %618, %622 : vector<8x256xf32>
    %c6_78 = arith.constant 6 : index
    %c0_79 = arith.constant 0 : index
    %c0_80 = arith.constant 0 : index
    %624 = vector.load %arg2[%c6_78, %c0_79, %c0_80] : memref<7x1x256xf32, #tpu.memory_space<vmem>>, vector<1x1x256xf32>
    %625 = vector.shape_cast %624 : vector<1x1x256xf32> to vector<1x256xf32>
    %626 = vector.broadcast %625 : vector<1x256xf32> to vector<8x256xf32>
    %627 = arith.mulf %623, %626 : vector<8x256xf32>
    %628 = arith.addf %587, %627 : vector<8x256xf32>
    %629 = vector.broadcast %1 : vector<8x1xf32> to vector<8x256xf32>
    %630 = arith.addf %628, %629 : vector<8x256xf32>
    %cst_81 = arith.constant dense<0.000000e+00> : vector<256xf32>
    %631 = vector.multi_reduction <add>, %630, %cst_81 [0] : vector<8x256xf32> to vector<256xf32>
    %632 = vector.shape_cast %631 : vector<256xf32> to vector<1x256xf32>
    %cst_82 = arith.constant 8.000000e+00 : f32
    %633 = vector.broadcast %cst_82 : f32 to vector<1x256xf32>
    %634 = arith.divf %632, %633 : vector<1x256xf32>
    %635 = vector.broadcast %634 : vector<1x256xf32> to vector<8x256xf32>
    %636 = arith.subf %630, %635 : vector<8x256xf32>
    %637 = arith.mulf %636, %636 : vector<8x256xf32>
    %cst_83 = arith.constant dense<0.000000e+00> : vector<256xf32>
    %638 = vector.multi_reduction <add>, %637, %cst_83 [0] : vector<8x256xf32> to vector<256xf32>
    %639 = vector.shape_cast %638 : vector<256xf32> to vector<1x256xf32>
    %cst_84 = arith.constant 8.000000e+00 : f32
    %640 = vector.broadcast %cst_84 : f32 to vector<1x256xf32>
    %641 = arith.divf %639, %640 : vector<1x256xf32>
    %642 = vector.broadcast %634 : vector<1x256xf32> to vector<8x256xf32>
    %643 = arith.subf %630, %642 : vector<8x256xf32>
    %cst_85 = arith.constant 9.99999974E-6 : f32
    %644 = vector.broadcast %cst_85 : f32 to vector<1x256xf32>
    %645 = arith.addf %641, %644 : vector<1x256xf32>
    %646 = math.rsqrt %645 : vector<1x256xf32>
    %647 = vector.broadcast %646 : vector<1x256xf32> to vector<8x256xf32>
    %648 = arith.mulf %643, %647 : vector<8x256xf32>
    %649 = vector.broadcast %2 : vector<8x1xf32> to vector<8x256xf32>
    %650 = arith.mulf %648, %649 : vector<8x256xf32>
    %651 = vector.broadcast %3 : vector<8x1xf32> to vector<8x256xf32>
    %652 = arith.addf %650, %651 : vector<8x256xf32>
    %cst_86 = arith.constant dense<0.000000e+00> : vector<32x256xf32>
    %653 = tpu.matmul %4, %652, %cst_86 {dimension_numbers = #tpu.dot_dimension_numbers<[1], [0], [0], [1], [0, 0, 1, 1], [], []>} : vector<32x8xf32>, vector<8x256xf32>, vector<32x256xf32> -> vector<32x256xf32>
    %654 = vector.broadcast %5 : vector<32x1xf32> to vector<32x256xf32>
    %655 = arith.addf %653, %654 : vector<32x256xf32>
    %cst_87 = arith.constant 5.000000e-01 : f32
    %656 = vector.broadcast %cst_87 : f32 to vector<32x256xf32>
    %657 = arith.mulf %656, %655 : vector<32x256xf32>
    %cst_88 = arith.constant 4.471500e-02 : f32
    %658 = vector.broadcast %cst_88 : f32 to vector<32x256xf32>
    %659 = arith.mulf %658, %655 : vector<32x256xf32>
    %660 = arith.mulf %659, %655 : vector<32x256xf32>
    %661 = arith.mulf %660, %655 : vector<32x256xf32>
    %662 = arith.addf %655, %661 : vector<32x256xf32>
    %cst_89 = arith.constant 0.797884583 : f32
    %663 = vector.broadcast %cst_89 : f32 to vector<32x256xf32>
    %664 = arith.mulf %663, %662 : vector<32x256xf32>
    %665 = math.tanh %664 : vector<32x256xf32>
    %cst_90 = arith.constant 1.000000e+00 : f32
    %666 = vector.broadcast %cst_90 : f32 to vector<32x256xf32>
    %667 = arith.addf %666, %665 : vector<32x256xf32>
    %668 = arith.mulf %657, %667 : vector<32x256xf32>
    %cst_91 = arith.constant dense<0.000000e+00> : vector<8x256xf32>
    %669 = tpu.matmul %6, %668, %cst_91 {dimension_numbers = #tpu.dot_dimension_numbers<[1], [0], [0], [1], [0, 0, 1, 1], [], []>} : vector<8x32xf32>, vector<32x256xf32>, vector<8x256xf32> -> vector<8x256xf32>
    %670 = vector.broadcast %7 : vector<8x1xf32> to vector<8x256xf32>
    %671 = arith.addf %669, %670 : vector<8x256xf32>
    %672 = arith.addf %344, %671 : vector<8x256xf32>
    %c1_92 = arith.constant 1 : index
    %c0_93 = arith.constant 0 : index
    %c0_94 = arith.constant 0 : index
    %673 = vector.load %arg11[%c1_92, %c0_93, %c0_94] : memref<2x8x256xf32, #tpu.memory_space<vmem>>, vector<1x8x256xf32>
    %674 = vector.shape_cast %673 : vector<1x8x256xf32> to vector<8x256xf32>
    %675 = vector.shape_cast %672 : vector<8x256xf32> to vector<1x8x256xf32>
    tpu.vector_store %arg11[%c1_92, %c0_93, %c0_94], %675 {strides = array<i32>} : memref<2x8x256xf32, #tpu.memory_space<vmem>>, vector<1x8x256xf32>,
    return
  }
  func.func @transform_0(%arg0: i32) -> (i32, i32, i32) {
    %c0_i32 = arith.constant 0 : i32
    %c0_i32_0 = arith.constant 0 : i32
    %c0_i32_1 = arith.constant 0 : i32
    %c0_i32_2 = arith.constant 0 : i32
    return %c0_i32, %c0_i32_0, %c0_i32_1 : i32, i32, i32
  }
  func.func @transform_1(%arg0: i32) -> (i32, i32, i32) {
    %c0_i32 = arith.constant 0 : i32
    %c0_i32_0 = arith.constant 0 : i32
    %c0_i32_1 = arith.constant 0 : i32
    %c0_i32_2 = arith.constant 0 : i32
    return %c0_i32, %c0_i32_0, %c0_i32_1 : i32, i32, i32
  }
  func.func @transform_2(%arg0: i32) -> (i32, i32) {
    %c0_i32 = arith.constant 0 : i32
    %c0_i32_0 = arith.constant 0 : i32
    %c0_i32_1 = arith.constant 0 : i32
    return %c0_i32, %c0_i32_0 : i32, i32
  }
  func.func @transform_3(%arg0: i32) -> (i32, i32) {
    %c0_i32 = arith.constant 0 : i32
    %c0_i32_0 = arith.constant 0 : i32
    %c0_i32_1 = arith.constant 0 : i32
    return %c0_i32, %c0_i32_0 : i32, i32
  }
  func.func @transform_4(%arg0: i32) -> (i32, i32) {
    %c0_i32 = arith.constant 0 : i32
    %c0_i32_0 = arith.constant 0 : i32
    %c0_i32_1 = arith.constant 0 : i32
    return %c0_i32, %c0_i32_0 : i32, i32
  }
  func.func @transform_5(%arg0: i32) -> (i32, i32) {
    %c0_i32 = arith.constant 0 : i32
    %c0_i32_0 = arith.constant 0 : i32
    %c0_i32_1 = arith.constant 0 : i32
    return %c0_i32, %c0_i32_0 : i32, i32
  }
  func.func @transform_6(%arg0: i32) -> (i32, i32) {
    %c0_i32 = arith.constant 0 : i32
    %c0_i32_0 = arith.constant 0 : i32
    %c0_i32_1 = arith.constant 0 : i32
    return %c0_i32, %c0_i32_0 : i32, i32
  }
  func.func @transform_7(%arg0: i32) -> (i32, i32) {
    %c0_i32 = arith.constant 0 : i32
    %c0_i32_0 = arith.constant 0 : i32
    %c0_i32_1 = arith.constant 0 : i32
    return %c0_i32, %c0_i32_0 : i32, i32
  }
  func.func @transform_8(%arg0: i32) -> (i32, i32) {
    %c0_i32 = arith.constant 0 : i32
    %c0_i32_0 = arith.constant 0 : i32
    %c0_i32_1 = arith.constant 0 : i32
    return %c0_i32, %c0_i32_0 : i32, i32
  }
  func.func @transform_9(%arg0: i32) -> (i32, i32) {
    %c0_i32 = arith.constant 0 : i32
    %c0_i32_0 = arith.constant 0 : i32
    %c0_i32_1 = arith.constant 0 : i32
    return %c0_i32, %c0_i32_0 : i32, i32
  }
  func.func @transform_10(%arg0: i32) -> (i32, i32, i32) {
    %c0_i32 = arith.constant 0 : i32
    %c0_i32_0 = arith.constant 0 : i32
    %c0_i32_1 = arith.constant 0 : i32
    %c0_i32_2 = arith.constant 0 : i32
    return %c0_i32, %c0_i32_0, %c0_i32_1 : i32, i32, i32
  }
}

</mosaic_0001>

<llo_original>
// kernel: convnext_block.1
$region0: #{convnext_block.1}
  #allocation0 [shape = 'u32[]', space=smem, size = 0x4, offset = 0x4, fixed_abs, tag = 'smem constant byte address 0x4 - core index']
  #allocation1 [shape = 'u32[144,128]{1,0:T(1,128)}', space=vmem, size = 0x12000, scoped, tag = 'internal scratch']
  %s0 = inlined_call_operand.vmem [shape: f32[2,8,384], index: 0, kind: input, shape index: {}]
  %s1 = inlined_call_operand.vmem [shape: f32[7,1,256], index: 1, kind: input, shape index: {}]
  %s2 = inlined_call_operand.vmem [shape: f32[8,49], index: 2, kind: input, shape index: {}]
  %s3 = inlined_call_operand.vmem [shape: f32[8,1], index: 3, kind: input, shape index: {}]
  %s4 = inlined_call_operand.vmem [shape: f32[8,1], index: 4, kind: input, shape index: {}]
  %s5 = inlined_call_operand.vmem [shape: f32[8,1], index: 5, kind: input, shape index: {}]
  %s6 = inlined_call_operand.vmem [shape: f32[32,8], index: 6, kind: input, shape index: {}]
  %s7 = inlined_call_operand.vmem [shape: f32[32,1], index: 7, kind: input, shape index: {}]
  %s8 = inlined_call_operand.vmem [shape: f32[8,32], index: 8, kind: input, shape index: {}]
  %s9 = inlined_call_operand.vmem [shape: f32[8,1], index: 9, kind: input, shape index: {}]
  %s10 = inlined_call_operand.vmem [shape: f32[2,8,256], index: 10, kind: output, shape index: {}]
  %s11 = sld [smem:[#allocation0]]
  $region50: #{convnext_block.1} parent=0
    _
  %s13 = ssub.s32 1, %s11
  %s14 = scalar_select 0, %s13, %s11
  // Predicated region
  $region2: #{convnext_block.1} parent=0 // pred_check
    _
  $region3: #{convnext_block.1} parent=0 // pred_check_branch
    %16 = sbr.rel (0) target = $region5
  $region4: #{convnext_block.1} parent=0 // pred_region
    _
  $region5: #{convnext_block.1} parent=0 // pred_fallthru
    _
  // Predicated region
  $region6: #{convnext_block.1} parent=0 // pred_check
    _
  $region7: #{convnext_block.1} parent=0 // pred_check_branch
    %18 = sbr.rel (0) target = $region9
  $region8: #{convnext_block.1} parent=0 // pred_region
    _
  $region9: #{convnext_block.1} parent=0 // pred_fallthru
    _
  // Predicated region
  $region10: #{convnext_block.1} parent=0 // pred_check
    _
  $region11: #{convnext_block.1} parent=0 // pred_check_branch
    %20 = sbr.rel (0) target = $region13
  $region12: #{convnext_block.1} parent=0 // pred_region
    _
  $region13: #{convnext_block.1} parent=0 // pred_fallthru
    _
  // Predicated region
  $region14: #{convnext_block.1} parent=0 // pred_check
    _
  $region15: #{convnext_block.1} parent=0 // pred_check_branch
    %22 = sbr.rel (0) target = $region17
  $region16: #{convnext_block.1} parent=0 // pred_region
    _
  $region17: #{convnext_block.1} parent=0 // pred_fallthru
    _
  // Predicated region
  $region18: #{convnext_block.1} parent=0 // pred_check
    _
  $region19: #{convnext_block.1} parent=0 // pred_check_branch
    %24 = sbr.rel (0) target = $region21
  $region20: #{convnext_block.1} parent=0 // pred_region
    _
  $region21: #{convnext_block.1} parent=0 // pred_fallthru
    _
  // Predicated region
  $region22: #{convnext_block.1} parent=0 // pred_check
    _
  $region23: #{convnext_block.1} parent=0 // pred_check_branch
    %26 = sbr.rel (0) target = $region25
  $region24: #{convnext_block.1} parent=0 // pred_region
    _
  $region25: #{convnext_block.1} parent=0 // pred_fallthru
    _
  // Predicated region
  $region26: #{convnext_block.1} parent=0 // pred_check
    _
  $region27: #{convnext_block.1} parent=0 // pred_check_branch
    %28 = sbr.rel (0) target = $region29
  $region28: #{convnext_block.1} parent=0 // pred_region
    _
  $region29: #{convnext_block.1} parent=0 // pred_fallthru
    _
  // Predicated region
  $region30: #{convnext_block.1} parent=0 // pred_check
    _
  $region31: #{convnext_block.1} parent=0 // pred_check_branch
    %30 = sbr.rel (0) target = $region33
  $region32: #{convnext_block.1} parent=0 // pred_region
    _
  $region33: #{convnext_block.1} parent=0 // pred_fallthru
    _
  // Predicated region
  $region34: #{convnext_block.1} parent=0 // pred_check
    _
  $region35: #{convnext_block.1} parent=0 // pred_check_branch
    %32 = sbr.rel (0) target = $region37
  $region36: #{convnext_block.1} parent=0 // pred_region
    _
  $region37: #{convnext_block.1} parent=0 // pred_fallthru
    _
  // Predicated region
  $region38: #{convnext_block.1} parent=0 // pred_check
    _
  $region39: #{convnext_block.1} parent=0 // pred_check_branch
    %34 = sbr.rel (0) target = $region41
  $region40: #{convnext_block.1} parent=0 // pred_region
    _
  $region41: #{convnext_block.1} parent=0 // pred_fallthru
    _
  %v35 = vld [vmem:[%s2] sm:$0xff]
  %v36 = vld [vmem:[%s3] sm:$0xff]
  %v37 = vld [vmem:[%s4] sm:$0xff]
  %v38 = vld [vmem:[%s5] sm:$0xff]
  %v39 = vld [vmem:[%s6] sm:$0xff]
  %v40 = vld [vmem:[%s6 + $0x8] sm:$0xff]
  %v41 = vld [vmem:[%s6 + $0x10] sm:$0xff]
  %v42 = vld [vmem:[%s6 + $0x18] sm:$0xff]
  %v43 = vld [vmem:[%s7] sm:$0xff]
  %v44 = vld [vmem:[%s7 + $0x8] sm:$0xff]
  %v45 = vld [vmem:[%s7 + $0x10] sm:$0xff]
  %v46 = vld [vmem:[%s7 + $0x18] sm:$0xff]
  %v47 = vld [vmem:[%s8] sm:$0xff]
  %v48 = vld [vmem:[%s9] sm:$0xff]
  %v49 = vld [vmem:[%s0] sm:$0xff]
  %v50 = vld [vmem:[%s0 + $0x8] sm:$0xff]
  %v51 = vld [vmem:[%s0 + $0x10] sm:$0xff]
  %53 = vset.pattern.permute.xlu0 0
  %54 = vperm.xlu0 %53, %v35
  %v55 = vpop.permute.xlu0 %54
  %v57 = vmul.f32 %v49, %v55
  %v58 = vmul.f32 %v50, %v55
  %v59 = vmul.f32 %v51, %v55
  %v60 = vadd.f32 %v57, 0.0
  %v61 = vadd.f32 %v58, 0.0
  %v62 = vadd.f32 %v59, 0.0
  %63 = vset.pattern.permute.xlu0 7
  %64 = vperm.xlu0 %63, %v35
  %v65 = vpop.permute.xlu0 %64
  %v67 = vmul.f32 %v49, %v65
  %v68 = vmul.f32 %v50, %v65
  %v69 = vmul.f32 %v51, %v65
  %73 = vrot.lane.b32.xlu0 %v67, 112
  %v74 = vpop.permute.xlu0 %73
  %75 = vrot.lane.b32.xlu0 %v68, 112
  %v76 = vpop.permute.xlu0 %75
  %77 = vrot.lane.b32.xlu0 %v69, 112
  %v78 = vpop.permute.xlu0 %77
  %vm79 = vcmask 916480
  %v80 = vsel %vm79, %v74, %v76
  %v81 = vsel %vm79, %v76, %v78
  %v85 = vadd.f32 %v60, %v80
  %v86 = vadd.f32 %v61, %v81
  %v87 = vadd.f32 %v62, %v78
  %88 = vset.pattern.permute.xlu0 14
  %89 = vperm.xlu0 %88, %v35
  %v90 = vpop.permute.xlu0 %89
  %v92 = vmul.f32 %v49, %v90
  %v93 = vmul.f32 %v50, %v90
  %v94 = vmul.f32 %v51, %v90
  %98 = vrot.lane.b32.xlu0 %v92, 96
  %v99 = vpop.permute.xlu0 %98
  %100 = vrot.lane.b32.xlu0 %v93, 96
  %v101 = vpop.permute.xlu0 %100
  %102 = vrot.lane.b32.xlu0 %v94, 96
  %v103 = vpop.permute.xlu0 %102
  %vm104 = vcmask 785408
  %v105 = vsel %vm104, %v99, %v101
  %v106 = vsel %vm104, %v101, %v103
  %v110 = vadd.f32 %v85, %v105
  %v111 = vadd.f32 %v86, %v106
  %v112 = vadd.f32 %v87, %v103
  %113 = vset.pattern.permute.xlu0 21
  %114 = vperm.xlu0 %113, %v35
  %v115 = vpop.permute.xlu0 %114
  %v117 = vmul.f32 %v49, %v115
  %v118 = vmul.f32 %v50, %v115
  %v119 = vmul.f32 %v51, %v115
  %123 = vrot.lane.b32.xlu0 %v117, 80
  %v124 = vpop.permute.xlu0 %123
  %125 = vrot.lane.b32.xlu0 %v118, 80
  %v126 = vpop.permute.xlu0 %125
  %127 = vrot.lane.b32.xlu0 %v119, 80
  %v128 = vpop.permute.xlu0 %127
  %vm129 = vcmask 654336
  %v130 = vsel %vm129, %v124, %v126
  %v131 = vsel %vm129, %v126, %v128
  %v135 = vadd.f32 %v110, %v130
  %v136 = vadd.f32 %v111, %v131
  %v137 = vadd.f32 %v112, %v128
  %138 = vset.pattern.permute.xlu0 28
  %139 = vperm.xlu0 %138, %v35
  %v140 = vpop.permute.xlu0 %139
  %v142 = vmul.f32 %v49, %v140
  %v143 = vmul.f32 %v50, %v140
  %v144 = vmul.f32 %v51, %v140
  %148 = vrot.lane.b32.xlu0 %v142, 64
  %v149 = vpop.permute.xlu0 %148
  %150 = vrot.lane.b32.xlu0 %v143, 64
  %v151 = vpop.permute.xlu0 %150
  %152 = vrot.lane.b32.xlu0 %v144, 64
  %v153 = vpop.permute.xlu0 %152
  %vm154 = vcmask 523264
  %v155 = vsel %vm154, %v149, %v151
  %v156 = vsel %vm154, %v151, %v153
  %v160 = vadd.f32 %v135, %v155
  %v161 = vadd.f32 %v136, %v156
  %v162 = vadd.f32 %v137, %v153
  %163 = vset.pattern.permute.xlu0 35
  %164 = vperm.xlu0 %163, %v35
  %v165 = vpop.permute.xlu0 %164
  %v167 = vmul.f32 %v49, %v165
  %v168 = vmul.f32 %v50, %v165
  %v169 = vmul.f32 %v51, %v165
  %173 = vrot.lane.b32.xlu0 %v167, 48
  %v174 = vpop.permute.xlu0 %173
  %175 = vrot.lane.b32.xlu0 %v168, 48
  %v176 = vpop.permute.xlu0 %175
  %177 = vrot.lane.b32.xlu0 %v169, 48
  %v178 = vpop.permute.xlu0 %177
  %vm179 = vcmask 392192
  %v180 = vsel %vm179, %v174, %v176
  %v181 = vsel %vm179, %v176, %v178
  %v185 = vadd.f32 %v160, %v180
  %v186 = vadd.f32 %v161, %v181
  %v187 = vadd.f32 %v162, %v178
  %188 = vset.pattern.permute.xlu0 42
  %189 = vperm.xlu0 %188, %v35
  %v190 = vpop.permute.xlu0 %189
  %v192 = vmul.f32 %v49, %v190
  %v193 = vmul.f32 %v50, %v190
  %v194 = vmul.f32 %v51, %v190
  %198 = vrot.lane.b32.xlu0 %v192, 32
  %v199 = vpop.permute.xlu0 %198
  %200 = vrot.lane.b32.xlu0 %v193, 32
  %v201 = vpop.permute.xlu0 %200
  %202 = vrot.lane.b32.xlu0 %v194, 32
  %v203 = vpop.permute.xlu0 %202
  %vm204 = vcmask 261120
  %v205 = vsel %vm204, %v199, %v201
  %v206 = vsel %vm204, %v201, %v203
  %v210 = vadd.f32 %v185, %v205
  %v211 = vadd.f32 %v186, %v206
  %v212 = vadd.f32 %v187, %v203
  %v213 = vld [vmem:[%s1] sm:$0x3]
  %v215 = vlaneseq
  %v216 = vshrl.u32 %v215, 7
  %v217 = vsub.s32 0, %v216
  %v218 = vrot.slane %v213, %v217
  %v219 = vlaneseq
  %v220 = vshrl.u32 %v219, 7
  %v221 = vsub.s32 1, %v220
  %v222 = vrot.slane %v213, %v221
  %223 = vrot.lane.b32.xlu0 %v218, 13
  %v224 = vpop.permute.xlu0 %223
  %225 = vrot.lane.b32.xlu0 %v222, 13
  %v226 = vpop.permute.xlu0 %225
  %vm227 = vcmask 105472
  %v228 = vsel %vm227, %v224, %v226
  %v232 = vmul.f32 %v210, %v224
  %v233 = vmul.f32 %v211, %v228
  %v234 = vmul.f32 %v212, %v226
  %v235 = vadd.f32 %v232, 0.0
  %v236 = vadd.f32 %v233, 0.0
  %v237 = vadd.f32 %v234, 0.0
  %238 = vset.pattern.permute.xlu0 1
  %239 = vperm.xlu0 %238, %v35
  %v240 = vpop.permute.xlu0 %239
  %v242 = vmul.f32 %v49, %v240
  %v243 = vmul.f32 %v50, %v240
  %v244 = vmul.f32 %v51, %v240
  %v245 = vadd.f32 %v242, 0.0
  %v246 = vadd.f32 %v243, 0.0
  %v247 = vadd.f32 %v244, 0.0
  %248 = vset.pattern.permute.xlu0 8
  %249 = vperm.xlu0 %248, %v35
  %v250 = vpop.permute.xlu0 %249
  %v252 = vmul.f32 %v49, %v250
  %v253 = vmul.f32 %v50, %v250
  %v254 = vmul.f32 %v51, %v250
  %258 = vrot.lane.b32.xlu0 %v252, 112
  %v259 = vpop.permute.xlu0 %258
  %260 = vrot.lane.b32.xlu0 %v253, 112
  %v261 = vpop.permute.xlu0 %260
  %262 = vrot.lane.b32.xlu0 %v254, 112
  %v263 = vpop.permute.xlu0 %262
  %v264 = vsel %vm79, %v259, %v261
  %v265 = vsel %vm79, %v261, %v263
  %v269 = vadd.f32 %v245, %v264
  %v270 = vadd.f32 %v246, %v265
  %v271 = vadd.f32 %v247, %v263
  %272 = vset.pattern.permute.xlu0 15
  %273 = vperm.xlu0 %272, %v35
  %v274 = vpop.permute.xlu0 %273
  %v276 = vmul.f32 %v49, %v274
  %v277 = vmul.f32 %v50, %v274
  %v278 = vmul.f32 %v51, %v274
  %282 = vrot.lane.b32.xlu0 %v276, 96
  %v283 = vpop.permute.xlu0 %282
  %284 = vrot.lane.b32.xlu0 %v277, 96
  %v285 = vpop.permute.xlu0 %284
  %286 = vrot.lane.b32.xlu0 %v278, 96
  %v287 = vpop.permute.xlu0 %286
  %v288 = vsel %vm104, %v283, %v285
  %v289 = vsel %vm104, %v285, %v287
  %v293 = vadd.f32 %v269, %v288
  %v294 = vadd.f32 %v270, %v289
  %v295 = vadd.f32 %v271, %v287
  %296 = vset.pattern.permute.xlu0 22
  %297 = vperm.xlu0 %296, %v35
  %v298 = vpop.permute.xlu0 %297
  %v300 = vmul.f32 %v49, %v298
  %v301 = vmul.f32 %v50, %v298
  %v302 = vmul.f32 %v51, %v298
  %306 = vrot.lane.b32.xlu0 %v300, 80
  %v307 = vpop.permute.xlu0 %306
  %308 = vrot.lane.b32.xlu0 %v301, 80
  %v309 = vpop.permute.xlu0 %308
  %310 = vrot.lane.b32.xlu0 %v302, 80
  %v311 = vpop.permute.xlu0 %310
  %v312 = vsel %vm129, %v307, %v309
  %v313 = vsel %vm129, %v309, %v311
  %v317 = vadd.f32 %v293, %v312
  %v318 = vadd.f32 %v294, %v313
  %v319 = vadd.f32 %v295, %v311
  %320 = vset.pattern.permute.xlu0 29
  %321 = vperm.xlu0 %320, %v35
  %v322 = vpop.permute.xlu0 %321
  %v324 = vmul.f32 %v49, %v322
  %v325 = vmul.f32 %v50, %v322
  %v326 = vmul.f32 %v51, %v322
  %330 = vrot.lane.b32.xlu0 %v324, 64
  %v331 = vpop.permute.xlu0 %330
  %332 = vrot.lane.b32.xlu0 %v325, 64
  %v333 = vpop.permute.xlu0 %332
  %334 = vrot.lane.b32.xlu0 %v326, 64
  %v335 = vpop.permute.xlu0 %334
  %v336 = vsel %vm154, %v331, %v333
  %v337 = vsel %vm154, %v333, %v335
  %v341 = vadd.f32 %v317, %v336
  %v342 = vadd.f32 %v318, %v337
  %v343 = vadd.f32 %v319, %v335
  %344 = vset.pattern.permute.xlu0 36
  %345 = vperm.xlu0 %344, %v35
  %v346 = vpop.permute.xlu0 %345
  %v348 = vmul.f32 %v49, %v346
  %v349 = vmul.f32 %v50, %v346
  %v350 = vmul.f32 %v51, %v346
  %354 = vrot.lane.b32.xlu0 %v348, 48
  %v355 = vpop.permute.xlu0 %354
  %356 = vrot.lane.b32.xlu0 %v349, 48
  %v357 = vpop.permute.xlu0 %356
  %358 = vrot.lane.b32.xlu0 %v350, 48
  %v359 = vpop.permute.xlu0 %358
  %v360 = vsel %vm179, %v355, %v357
  %v361 = vsel %vm179, %v357, %v359
  %v365 = vadd.f32 %v341, %v360
  %v366 = vadd.f32 %v342, %v361
  %v367 = vadd.f32 %v343, %v359
  %368 = vset.pattern.permute.xlu0 43
  %369 = vperm.xlu0 %368, %v35
  %v370 = vpop.permute.xlu0 %369
  %v372 = vmul.f32 %v49, %v370
  %v373 = vmul.f32 %v50, %v370
  %v374 = vmul.f32 %v51, %v370
  %378 = vrot.lane.b32.xlu0 %v372, 32
  %v379 = vpop.permute.xlu0 %378
  %380 = vrot.lane.b32.xlu0 %v373, 32
  %v381 = vpop.permute.xlu0 %380
  %382 = vrot.lane.b32.xlu0 %v374, 32
  %v383 = vpop.permute.xlu0 %382
  %v384 = vsel %vm204, %v379, %v381
  %v385 = vsel %vm204, %v381, %v383
  %v389 = vadd.f32 %v365, %v384
  %v390 = vadd.f32 %v366, %v385
  %v391 = vadd.f32 %v367, %v383
  %s392 = scalar_lea.vmem %s1, 2
  %v393 = vld [vmem:[%s392] sm:$0x3]
  %v395 = vlaneseq
  %v396 = vshrl.u32 %v395, 7
  %v397 = vsub.s32 0, %v396
  %v398 = vrot.slane %v393, %v397
  %v399 = vlaneseq
  %v400 = vshrl.u32 %v399, 7
  %v401 = vsub.s32 1, %v400
  %v402 = vrot.slane %v393, %v401
  %403 = vrot.lane.b32.xlu0 %v398, 14
  %v404 = vpop.permute.xlu0 %403
  %405 = vrot.lane.b32.xlu0 %v402, 14
  %v406 = vpop.permute.xlu0 %405
  %vm407 = vcmask 113664
  %v408 = vsel %vm407, %v404, %v406
  %v412 = vmul.f32 %v389, %v404
  %v413 = vmul.f32 %v390, %v408
  %v414 = vmul.f32 %v391, %v406
  %418 = vrot.lane.b32.xlu0 %v412, 127
  %v419 = vpop.permute.xlu0 %418
  %420 = vrot.lane.b32.xlu0 %v413, 127
  %v421 = vpop.permute.xlu0 %420
  %422 = vrot.lane.b32.xlu0 %v414, 127
  %v423 = vpop.permute.xlu0 %422
  %vm424 = vcmask 1039360
  %v425 = vsel %vm424, %v419, %v421
  %v426 = vsel %vm424, %v421, %v423
  %v430 = vadd.f32 %v235, %v425
  %v431 = vadd.f32 %v236, %v426
  %v432 = vadd.f32 %v237, %v423
  %433 = vset.pattern.permute.xlu0 2
  %434 = vperm.xlu0 %433, %v35
  %v435 = vpop.permute.xlu0 %434
  %v437 = vmul.f32 %v49, %v435
  %v438 = vmul.f32 %v50, %v435
  %v439 = vmul.f32 %v51, %v435
  %v440 = vadd.f32 %v437, 0.0
  %v441 = vadd.f32 %v438, 0.0
  %v442 = vadd.f32 %v439, 0.0
  %443 = vset.pattern.permute.xlu0 9
  %444 = vperm.xlu0 %443, %v35
  %v445 = vpop.permute.xlu0 %444
  %v447 = vmul.f32 %v49, %v445
  %v448 = vmul.f32 %v50, %v445
  %v449 = vmul.f32 %v51, %v445
  %453 = vrot.lane.b32.xlu0 %v447, 112
  %v454 = vpop.permute.xlu0 %453
  %455 = vrot.lane.b32.xlu0 %v448, 112
  %v456 = vpop.permute.xlu0 %455
  %457 = vrot.lane.b32.xlu0 %v449, 112
  %v458 = vpop.permute.xlu0 %457
  %v459 = vsel %vm79, %v454, %v456
  %v460 = vsel %vm79, %v456, %v458
  %v464 = vadd.f32 %v440, %v459
  %v465 = vadd.f32 %v441, %v460
  %v466 = vadd.f32 %v442, %v458
  %467 = vset.pattern.permute.xlu0 16
  %468 = vperm.xlu0 %467, %v35
  %v469 = vpop.permute.xlu0 %468
  %v471 = vmul.f32 %v49, %v469
  %v472 = vmul.f32 %v50, %v469
  %v473 = vmul.f32 %v51, %v469
  %477 = vrot.lane.b32.xlu0 %v471, 96
  %v478 = vpop.permute.xlu0 %477
  %479 = vrot.lane.b32.xlu0 %v472, 96
  %v480 = vpop.permute.xlu0 %479
  %481 = vrot.lane.b32.xlu0 %v473, 96
  %v482 = vpop.permute.xlu0 %481
  %v483 = vsel %vm104, %v478, %v480
  %v484 = vsel %vm104, %v480, %v482
  %v488 = vadd.f32 %v464, %v483
  %v489 = vadd.f32 %v465, %v484
  %v490 = vadd.f32 %v466, %v482
  %491 = vset.pattern.permute.xlu0 23
  %492 = vperm.xlu0 %491, %v35
  %v493 = vpop.permute.xlu0 %492
  %v495 = vmul.f32 %v49, %v493
  %v496 = vmul.f32 %v50, %v493
  %v497 = vmul.f32 %v51, %v493
  %501 = vrot.lane.b32.xlu0 %v495, 80
  %v502 = vpop.permute.xlu0 %501
  %503 = vrot.lane.b32.xlu0 %v496, 80
  %v504 = vpop.permute.xlu0 %503
  %505 = vrot.lane.b32.xlu0 %v497, 80
  %v506 = vpop.permute.xlu0 %505
  %v507 = vsel %vm129, %v502, %v504
  %v508 = vsel %vm129, %v504, %v506
  %v512 = vadd.f32 %v488, %v507
  %v513 = vadd.f32 %v489, %v508
  %v514 = vadd.f32 %v490, %v506
  %515 = vset.pattern.permute.xlu0 30
  %516 = vperm.xlu0 %515, %v35
  %v517 = vpop.permute.xlu0 %516
  %v519 = vmul.f32 %v49, %v517
  %v520 = vmul.f32 %v50, %v517
  %v521 = vmul.f32 %v51, %v517
  %525 = vrot.lane.b32.xlu0 %v519, 64
  %v526 = vpop.permute.xlu0 %525
  %527 = vrot.lane.b32.xlu0 %v520, 64
  %v528 = vpop.permute.xlu0 %527
  %529 = vrot.lane.b32.xlu0 %v521, 64
  %v530 = vpop.permute.xlu0 %529
  %v531 = vsel %vm154, %v526, %v528
  %v532 = vsel %vm154, %v528, %v530
  %v536 = vadd.f32 %v512, %v531
  %v537 = vadd.f32 %v513, %v532
  %v538 = vadd.f32 %v514, %v530
  %539 = vset.pattern.permute.xlu0 37
  %540 = vperm.xlu0 %539, %v35
  %v541 = vpop.permute.xlu0 %540
  %v543 = vmul.f32 %v49, %v541
  %v544 = vmul.f32 %v50, %v541
  %v545 = vmul.f32 %v51, %v541
  %549 = vrot.lane.b32.xlu0 %v543, 48
  %v550 = vpop.permute.xlu0 %549
  %551 = vrot.lane.b32.xlu0 %v544, 48
  %v552 = vpop.permute.xlu0 %551
  %553 = vrot.lane.b32.xlu0 %v545, 48
  %v554 = vpop.permute.xlu0 %553
  %v555 = vsel %vm179, %v550, %v552
  %v556 = vsel %vm179, %v552, %v554
  %v560 = vadd.f32 %v536, %v555
  %v561 = vadd.f32 %v537, %v556
  %v562 = vadd.f32 %v538, %v554
  %563 = vset.pattern.permute.xlu0 44
  %564 = vperm.xlu0 %563, %v35
  %v565 = vpop.permute.xlu0 %564
  %v567 = vmul.f32 %v49, %v565
  %v568 = vmul.f32 %v50, %v565
  %v569 = vmul.f32 %v51, %v565
  %573 = vrot.lane.b32.xlu0 %v567, 32
  %v574 = vpop.permute.xlu0 %573
  %575 = vrot.lane.b32.xlu0 %v568, 32
  %v576 = vpop.permute.xlu0 %575
  %577 = vrot.lane.b32.xlu0 %v569, 32
  %v578 = vpop.permute.xlu0 %577
  %v579 = vsel %vm204, %v574, %v576
  %v580 = vsel %vm204, %v576, %v578
  %v584 = vadd.f32 %v560, %v579
  %v585 = vadd.f32 %v561, %v580
  %v586 = vadd.f32 %v562, %v578
  %s587 = scalar_lea.vmem %s1, 4
  %v588 = vld [vmem:[%s587] sm:$0x3]
  %v590 = vlaneseq
  %v591 = vshrl.u32 %v590, 7
  %v592 = vsub.s32 0, %v591
  %v593 = vrot.slane %v588, %v592
  %v594 = vlaneseq
  %v595 = vshrl.u32 %v594, 7
  %v596 = vsub.s32 1, %v595
  %v597 = vrot.slane %v588, %v596
  %598 = vrot.lane.b32.xlu0 %v593, 15
  %v599 = vpop.permute.xlu0 %598
  %600 = vrot.lane.b32.xlu0 %v597, 15
  %v601 = vpop.permute.xlu0 %600
  %vm602 = vcmask 121856
  %v603 = vsel %vm602, %v599, %v601
  %v607 = vmul.f32 %v584, %v599
  %v608 = vmul.f32 %v585, %v603
  %v609 = vmul.f32 %v586, %v601
  %613 = vrot.lane.b32.xlu0 %v607, 126
  %v614 = vpop.permute.xlu0 %613
  %615 = vrot.lane.b32.xlu0 %v608, 126
  %v616 = vpop.permute.xlu0 %615
  %617 = vrot.lane.b32.xlu0 %v609, 126
  %v618 = vpop.permute.xlu0 %617
  %vm619 = vcmask 1031168
  %v620 = vsel %vm619, %v614, %v616
  %v621 = vsel %vm619, %v616, %v618
  %v625 = vadd.f32 %v430, %v620
  %v626 = vadd.f32 %v431, %v621
  %v627 = vadd.f32 %v432, %v618
  %628 = vset.pattern.permute.xlu0 3
  %629 = vperm.xlu0 %628, %v35
  %v630 = vpop.permute.xlu0 %629
  %v632 = vmul.f32 %v49, %v630
  %v633 = vmul.f32 %v50, %v630
  %v634 = vmul.f32 %v51, %v630
  %v635 = vadd.f32 %v632, 0.0
  %v636 = vadd.f32 %v633, 0.0
  %v637 = vadd.f32 %v634, 0.0
  %638 = vset.pattern.permute.xlu0 10
  %639 = vperm.xlu0 %638, %v35
  %v640 = vpop.permute.xlu0 %639
  %v642 = vmul.f32 %v49, %v640
  %v643 = vmul.f32 %v50, %v640
  %v644 = vmul.f32 %v51, %v640
  %648 = vrot.lane.b32.xlu0 %v642, 112
  %v649 = vpop.permute.xlu0 %648
  %650 = vrot.lane.b32.xlu0 %v643, 112
  %v651 = vpop.permute.xlu0 %650
  %652 = vrot.lane.b32.xlu0 %v644, 112
  %v653 = vpop.permute.xlu0 %652
  %v654 = vsel %vm79, %v649, %v651
  %v655 = vsel %vm79, %v651, %v653
  %v659 = vadd.f32 %v635, %v654
  %v660 = vadd.f32 %v636, %v655
  %v661 = vadd.f32 %v637, %v653
  %662 = vset.pattern.permute.xlu0 17
  %663 = vperm.xlu0 %662, %v35
  %v664 = vpop.permute.xlu0 %663
  %v666 = vmul.f32 %v49, %v664
  %v667 = vmul.f32 %v50, %v664
  %v668 = vmul.f32 %v51, %v664
  %672 = vrot.lane.b32.xlu0 %v666, 96
  %v673 = vpop.permute.xlu0 %672
  %674 = vrot.lane.b32.xlu0 %v667, 96
  %v675 = vpop.permute.xlu0 %674
  %676 = vrot.lane.b32.xlu0 %v668, 96
  %v677 = vpop.permute.xlu0 %676
  %v678 = vsel %vm104, %v673, %v675
  %v679 = vsel %vm104, %v675, %v677
  %v683 = vadd.f32 %v659, %v678
  %v684 = vadd.f32 %v660, %v679
  %v685 = vadd.f32 %v661, %v677
  %686 = vset.pattern.permute.xlu0 24
  %687 = vperm.xlu0 %686, %v35
  %v688 = vpop.permute.xlu0 %687
  %v690 = vmul.f32 %v49, %v688
  %v691 = vmul.f32 %v50, %v688
  %v692 = vmul.f32 %v51, %v688
  %696 = vrot.lane.b32.xlu0 %v690, 80
  %v697 = vpop.permute.xlu0 %696
  %698 = vrot.lane.b32.xlu0 %v691, 80
  %v699 = vpop.permute.xlu0 %698
  %700 = vrot.lane.b32.xlu0 %v692, 80
  %v701 = vpop.permute.xlu0 %700
  %v702 = vsel %vm129, %v697, %v699
  %v703 = vsel %vm129, %v699, %v701
  %v707 = vadd.f32 %v683, %v702
  %v708 = vadd.f32 %v684, %v703
  %v709 = vadd.f32 %v685, %v701
  %710 = vset.pattern.permute.xlu0 31
  %711 = vperm.xlu0 %710, %v35
  %v712 = vpop.permute.xlu0 %711
  %v714 = vmul.f32 %v49, %v712
  %v715 = vmul.f32 %v50, %v712
  %v716 = vmul.f32 %v51, %v712
  %720 = vrot.lane.b32.xlu0 %v714, 64
  %v721 = vpop.permute.xlu0 %720
  %722 = vrot.lane.b32.xlu0 %v715, 64
  %v723 = vpop.permute.xlu0 %722
  %724 = vrot.lane.b32.xlu0 %v716, 64
  %v725 = vpop.permute.xlu0 %724
  %v726 = vsel %vm154, %v721, %v723
  %v727 = vsel %vm154, %v723, %v725
  %v731 = vadd.f32 %v707, %v726
  %v732 = vadd.f32 %v708, %v727
  %v733 = vadd.f32 %v709, %v725
  %734 = vset.pattern.permute.xlu0 38
  %735 = vperm.xlu0 %734, %v35
  %v736 = vpop.permute.xlu0 %735
  %v738 = vmul.f32 %v49, %v736
  %v739 = vmul.f32 %v50, %v736
  %v740 = vmul.f32 %v51, %v736
  %744 = vrot.lane.b32.xlu0 %v738, 48
  %v745 = vpop.permute.xlu0 %744
  %746 = vrot.lane.b32.xlu0 %v739, 48
  %v747 = vpop.permute.xlu0 %746
  %748 = vrot.lane.b32.xlu0 %v740, 48
  %v749 = vpop.permute.xlu0 %748
  %v750 = vsel %vm179, %v745, %v747
  %v751 = vsel %vm179, %v747, %v749
  %v755 = vadd.f32 %v731, %v750
  %v756 = vadd.f32 %v732, %v751
  %v757 = vadd.f32 %v733, %v749
  %758 = vset.pattern.permute.xlu0 45
  %759 = vperm.xlu0 %758, %v35
  %v760 = vpop.permute.xlu0 %759
  %v762 = vmul.f32 %v49, %v760
  %v763 = vmul.f32 %v50, %v760
  %v764 = vmul.f32 %v51, %v760
  %768 = vrot.lane.b32.xlu0 %v762, 32
  %v769 = vpop.permute.xlu0 %768
  %770 = vrot.lane.b32.xlu0 %v763, 32
  %v771 = vpop.permute.xlu0 %770
  %772 = vrot.lane.b32.xlu0 %v764, 32
  %v773 = vpop.permute.xlu0 %772
  %v774 = vsel %vm204, %v769, %v771
  %v775 = vsel %vm204, %v771, %v773
  %v779 = vadd.f32 %v755, %v774
  %v780 = vadd.f32 %v756, %v775
  %v781 = vadd.f32 %v757, %v773
  %785 = vrot.lane.b32.xlu0 %v779, 125
  %v786 = vpop.permute.xlu0 %785
  %787 = vrot.lane.b32.xlu0 %v780, 125
  %v788 = vpop.permute.xlu0 %787
  %789 = vrot.lane.b32.xlu0 %v781, 125
  %v790 = vpop.permute.xlu0 %789
  %vm791 = vcmask 1022976
  %v792 = vsel %vm791, %v786, %v788
  %v793 = vsel %vm791, %v788, %v790
  %v797 = vadd.f32 %v625, %v792
  %v798 = vadd.f32 %v626, %v793
  %v799 = vadd.f32 %v627, %v790
  %800 = vset.pattern.permute.xlu0 4
  %801 = vperm.xlu0 %800, %v35
  %v802 = vpop.permute.xlu0 %801
  %v804 = vmul.f32 %v49, %v802
  %v805 = vmul.f32 %v50, %v802
  %v806 = vmul.f32 %v51, %v802
  %v807 = vadd.f32 %v804, 0.0
  %v808 = vadd.f32 %v805, 0.0
  %v809 = vadd.f32 %v806, 0.0
  %810 = vset.pattern.permute.xlu0 11
  %811 = vperm.xlu0 %810, %v35
  %v812 = vpop.permute.xlu0 %811
  %v814 = vmul.f32 %v49, %v812
  %v815 = vmul.f32 %v50, %v812
  %v816 = vmul.f32 %v51, %v812
  %820 = vrot.lane.b32.xlu0 %v814, 112
  %v821 = vpop.permute.xlu0 %820
  %822 = vrot.lane.b32.xlu0 %v815, 112
  %v823 = vpop.permute.xlu0 %822
  %824 = vrot.lane.b32.xlu0 %v816, 112
  %v825 = vpop.permute.xlu0 %824
  %v826 = vsel %vm79, %v821, %v823
  %v827 = vsel %vm79, %v823, %v825
  %v831 = vadd.f32 %v807, %v826
  %v832 = vadd.f32 %v808, %v827
  %v833 = vadd.f32 %v809, %v825
  %834 = vset.pattern.permute.xlu0 18
  %835 = vperm.xlu0 %834, %v35
  %v836 = vpop.permute.xlu0 %835
  %v838 = vmul.f32 %v49, %v836
  %v839 = vmul.f32 %v50, %v836
  %v840 = vmul.f32 %v51, %v836
  %844 = vrot.lane.b32.xlu0 %v838, 96
  %v845 = vpop.permute.xlu0 %844
  %846 = vrot.lane.b32.xlu0 %v839, 96
  %v847 = vpop.permute.xlu0 %846
  %848 = vrot.lane.b32.xlu0 %v840, 96
  %v849 = vpop.permute.xlu0 %848
  %v850 = vsel %vm104, %v845, %v847
  %v851 = vsel %vm104, %v847, %v849
  %v855 = vadd.f32 %v831, %v850
  %v856 = vadd.f32 %v832, %v851
  %v857 = vadd.f32 %v833, %v849
  %858 = vset.pattern.permute.xlu0 25
  %859 = vperm.xlu0 %858, %v35
  %v860 = vpop.permute.xlu0 %859
  %v862 = vmul.f32 %v49, %v860
  %v863 = vmul.f32 %v50, %v860
  %v864 = vmul.f32 %v51, %v860
  %868 = vrot.lane.b32.xlu0 %v862, 80
  %v869 = vpop.permute.xlu0 %868
  %870 = vrot.lane.b32.xlu0 %v863, 80
  %v871 = vpop.permute.xlu0 %870
  %872 = vrot.lane.b32.xlu0 %v864, 80
  %v873 = vpop.permute.xlu0 %872
  %v874 = vsel %vm129, %v869, %v871
  %v875 = vsel %vm129, %v871, %v873
  %v879 = vadd.f32 %v855, %v874
  %v880 = vadd.f32 %v856, %v875
  %v881 = vadd.f32 %v857, %v873
  %882 = vset.pattern.permute.xlu0 32
  %883 = vperm.xlu0 %882, %v35
  %v884 = vpop.permute.xlu0 %883
  %v886 = vmul.f32 %v49, %v884
  %v887 = vmul.f32 %v50, %v884
  %v888 = vmul.f32 %v51, %v884
  %892 = vrot.lane.b32.xlu0 %v886, 64
  %v893 = vpop.permute.xlu0 %892
  %894 = vrot.lane.b32.xlu0 %v887, 64
  %v895 = vpop.permute.xlu0 %894
  %896 = vrot.lane.b32.xlu0 %v888, 64
  %v897 = vpop.permute.xlu0 %896
  %v898 = vsel %vm154, %v893, %v895
  %v899 = vsel %vm154, %v895, %v897
  %v903 = vadd.f32 %v879, %v898
  %v904 = vadd.f32 %v880, %v899
  %v905 = vadd.f32 %v881, %v897
  %906 = vset.pattern.permute.xlu0 39
  %907 = vperm.xlu0 %906, %v35
  %v908 = vpop.permute.xlu0 %907
  %v910 = vmul.f32 %v49, %v908
  %v911 = vmul.f32 %v50, %v908
  %v912 = vmul.f32 %v51, %v908
  %916 = vrot.lane.b32.xlu0 %v910, 48
  %v917 = vpop.permute.xlu0 %916
  %918 = vrot.lane.b32.xlu0 %v911, 48
  %v919 = vpop.permute.xlu0 %918
  %920 = vrot.lane.b32.xlu0 %v912, 48
  %v921 = vpop.permute.xlu0 %920
  %v922 = vsel %vm179, %v917, %v919
  %v923 = vsel %vm179, %v919, %v921
  %v927 = vadd.f32 %v903, %v922
  %v928 = vadd.f32 %v904, %v923
  %v929 = vadd.f32 %v905, %v921
  %930 = vset.pattern.permute.xlu0 46
  %931 = vperm.xlu0 %930, %v35
  %v932 = vpop.permute.xlu0 %931
  %v934 = vmul.f32 %v49, %v932
  %v935 = vmul.f32 %v50, %v932
  %v936 = vmul.f32 %v51, %v932
  %940 = vrot.lane.b32.xlu0 %v934, 32
  %v941 = vpop.permute.xlu0 %940
  %942 = vrot.lane.b32.xlu0 %v935, 32
  %v943 = vpop.permute.xlu0 %942
  %944 = vrot.lane.b32.xlu0 %v936, 32
  %v945 = vpop.permute.xlu0 %944
  %v946 = vsel %vm204, %v941, %v943
  %v947 = vsel %vm204, %v943, %v945
  %v951 = vadd.f32 %v927, %v946
  %v952 = vadd.f32 %v928, %v947
  %v953 = vadd.f32 %v929, %v945
  %s954 = scalar_lea.vmem %s1, 8
  %v955 = vld [vmem:[%s954] sm:$0x3]
  %v957 = vlaneseq
  %v958 = vshrl.u32 %v957, 7
  %v959 = vsub.s32 0, %v958
  %v960 = vrot.slane %v955, %v959
  %v961 = vlaneseq
  %v962 = vshrl.u32 %v961, 7
  %v963 = vsub.s32 1, %v962
  %v964 = vrot.slane %v955, %v963
  %965 = vrot.lane.b32.xlu0 %v960, 17
  %v966 = vpop.permute.xlu0 %965
  %967 = vrot.lane.b32.xlu0 %v964, 17
  %v968 = vpop.permute.xlu0 %967
  %vm969 = vcmask 138240
  %v970 = vsel %vm969, %v966, %v968
  %v974 = vmul.f32 %v951, %v966
  %v975 = vmul.f32 %v952, %v970
  %v976 = vmul.f32 %v953, %v968
  %980 = vrot.lane.b32.xlu0 %v974, 124
  %v981 = vpop.permute.xlu0 %980
  %982 = vrot.lane.b32.xlu0 %v975, 124
  %v983 = vpop.permute.xlu0 %982
  %984 = vrot.lane.b32.xlu0 %v976, 124
  %v985 = vpop.permute.xlu0 %984
  %vm986 = vcmask 1014784
  %v987 = vsel %vm986, %v981, %v983
  %v988 = vsel %vm986, %v983, %v985
  %v992 = vadd.f32 %v797, %v987
  %v993 = vadd.f32 %v798, %v988
  %v994 = vadd.f32 %v799, %v985
  %995 = vset.pattern.permute.xlu0 5
  %996 = vperm.xlu0 %995, %v35
  %v997 = vpop.permute.xlu0 %996
  %v999 = vmul.f32 %v49, %v997
  %v1000 = vmul.f32 %v50, %v997
  %v1001 = vmul.f32 %v51, %v997
  %v1002 = vadd.f32 %v999, 0.0
  %v1003 = vadd.f32 %v1000, 0.0
  %v1004 = vadd.f32 %v1001, 0.0
  %1005 = vset.pattern.permute.xlu0 12
  %1006 = vperm.xlu0 %1005, %v35
  %v1007 = vpop.permute.xlu0 %1006
  %v1009 = vmul.f32 %v49, %v1007
  %v1010 = vmul.f32 %v50, %v1007
  %v1011 = vmul.f32 %v51, %v1007
  %1015 = vrot.lane.b32.xlu0 %v1009, 112
  %v1016 = vpop.permute.xlu0 %1015
  %1017 = vrot.lane.b32.xlu0 %v1010, 112
  %v1018 = vpop.permute.xlu0 %1017
  %1019 = vrot.lane.b32.xlu0 %v1011, 112
  %v1020 = vpop.permute.xlu0 %1019
  %v1021 = vsel %vm79, %v1016, %v1018
  %v1022 = vsel %vm79, %v1018, %v1020
  %v1026 = vadd.f32 %v1002, %v1021
  %v1027 = vadd.f32 %v1003, %v1022
  %v1028 = vadd.f32 %v1004, %v1020
  %1029 = vset.pattern.permute.xlu0 19
  %1030 = vperm.xlu0 %1029, %v35
  %v1031 = vpop.permute.xlu0 %1030
  %v1033 = vmul.f32 %v49, %v1031
  %v1034 = vmul.f32 %v50, %v1031
  %v1035 = vmul.f32 %v51, %v1031
  %1039 = vrot.lane.b32.xlu0 %v1033, 96
  %v1040 = vpop.permute.xlu0 %1039
  %1041 = vrot.lane.b32.xlu0 %v1034, 96
  %v1042 = vpop.permute.xlu0 %1041
  %1043 = vrot.lane.b32.xlu0 %v1035, 96
  %v1044 = vpop.permute.xlu0 %1043
  %v1045 = vsel %vm104, %v1040, %v1042
  %v1046 = vsel %vm104, %v1042, %v1044
  %v1050 = vadd.f32 %v1026, %v1045
  %v1051 = vadd.f32 %v1027, %v1046
  %v1052 = vadd.f32 %v1028, %v1044
  %1053 = vset.pattern.permute.xlu0 26
  %1054 = vperm.xlu0 %1053, %v35
  %v1055 = vpop.permute.xlu0 %1054
  %v1057 = vmul.f32 %v49, %v1055
  %v1058 = vmul.f32 %v50, %v1055
  %v1059 = vmul.f32 %v51, %v1055
  %1063 = vrot.lane.b32.xlu0 %v1057, 80
  %v1064 = vpop.permute.xlu0 %1063
  %1065 = vrot.lane.b32.xlu0 %v1058, 80
  %v1066 = vpop.permute.xlu0 %1065
  %1067 = vrot.lane.b32.xlu0 %v1059, 80
  %v1068 = vpop.permute.xlu0 %1067
  %v1069 = vsel %vm129, %v1064, %v1066
  %v1070 = vsel %vm129, %v1066, %v1068
  %v1074 = vadd.f32 %v1050, %v1069
  %v1075 = vadd.f32 %v1051, %v1070
  %v1076 = vadd.f32 %v1052, %v1068
  %1077 = vset.pattern.permute.xlu0 33
  %1078 = vperm.xlu0 %1077, %v35
  %v1079 = vpop.permute.xlu0 %1078
  %v1081 = vmul.f32 %v49, %v1079
  %v1082 = vmul.f32 %v50, %v1079
  %v1083 = vmul.f32 %v51, %v1079
  %1087 = vrot.lane.b32.xlu0 %v1081, 64
  %v1088 = vpop.permute.xlu0 %1087
  %1089 = vrot.lane.b32.xlu0 %v1082, 64
  %v1090 = vpop.permute.xlu0 %1089
  %1091 = vrot.lane.b32.xlu0 %v1083, 64
  %v1092 = vpop.permute.xlu0 %1091
  %v1093 = vsel %vm154, %v1088, %v1090
  %v1094 = vsel %vm154, %v1090, %v1092
  %v1098 = vadd.f32 %v1074, %v1093
  %v1099 = vadd.f32 %v1075, %v1094
  %v1100 = vadd.f32 %v1076, %v1092
  %1101 = vset.pattern.permute.xlu0 40
  %1102 = vperm.xlu0 %1101, %v35
  %v1103 = vpop.permute.xlu0 %1102
  %v1105 = vmul.f32 %v49, %v1103
  %v1106 = vmul.f32 %v50, %v1103
  %v1107 = vmul.f32 %v51, %v1103
  %1111 = vrot.lane.b32.xlu0 %v1105, 48
  %v1112 = vpop.permute.xlu0 %1111
  %1113 = vrot.lane.b32.xlu0 %v1106, 48
  %v1114 = vpop.permute.xlu0 %1113
  %1115 = vrot.lane.b32.xlu0 %v1107, 48
  %v1116 = vpop.permute.xlu0 %1115
  %v1117 = vsel %vm179, %v1112, %v1114
  %v1118 = vsel %vm179, %v1114, %v1116
  %v1122 = vadd.f32 %v1098, %v1117
  %v1123 = vadd.f32 %v1099, %v1118
  %v1124 = vadd.f32 %v1100, %v1116
  %1125 = vset.pattern.permute.xlu0 47
  %1126 = vperm.xlu0 %1125, %v35
  %v1127 = vpop.permute.xlu0 %1126
  %v1129 = vmul.f32 %v49, %v1127
  %v1130 = vmul.f32 %v50, %v1127
  %v1131 = vmul.f32 %v51, %v1127
  %1135 = vrot.lane.b32.xlu0 %v1129, 32
  %v1136 = vpop.permute.xlu0 %1135
  %1137 = vrot.lane.b32.xlu0 %v1130, 32
  %v1138 = vpop.permute.xlu0 %1137
  %1139 = vrot.lane.b32.xlu0 %v1131, 32
  %v1140 = vpop.permute.xlu0 %1139
  %v1141 = vsel %vm204, %v1136, %v1138
  %v1142 = vsel %vm204, %v1138, %v1140
  %v1146 = vadd.f32 %v1122, %v1141
  %v1147 = vadd.f32 %v1123, %v1142
  %v1148 = vadd.f32 %v1124, %v1140
  %s1149 = scalar_lea.vmem %s1, 10
  %v1150 = vld [vmem:[%s1149] sm:$0x3]
  %v1152 = vlaneseq
  %v1153 = vshrl.u32 %v1152, 7
  %v1154 = vsub.s32 0, %v1153
  %v1155 = vrot.slane %v1150, %v1154
  %v1156 = vlaneseq
  %v1157 = vshrl.u32 %v1156, 7
  %v1158 = vsub.s32 1, %v1157
  %v1159 = vrot.slane %v1150, %v1158
  %1160 = vrot.lane.b32.xlu0 %v1155, 18
  %v1161 = vpop.permute.xlu0 %1160
  %1162 = vrot.lane.b32.xlu0 %v1159, 18
  %v1163 = vpop.permute.xlu0 %1162
  %vm1164 = vcmask 146432
  %v1165 = vsel %vm1164, %v1161, %v1163
  %v1169 = vmul.f32 %v1146, %v1161
  %v1170 = vmul.f32 %v1147, %v1165
  %v1171 = vmul.f32 %v1148, %v1163
  %1175 = vrot.lane.b32.xlu0 %v1169, 123
  %v1176 = vpop.permute.xlu0 %1175
  %1177 = vrot.lane.b32.xlu0 %v1170, 123
  %v1178 = vpop.permute.xlu0 %1177
  %1179 = vrot.lane.b32.xlu0 %v1171, 123
  %v1180 = vpop.permute.xlu0 %1179
  %vm1181 = vcmask 1006592
  %v1182 = vsel %vm1181, %v1176, %v1178
  %v1183 = vsel %vm1181, %v1178, %v1180
  %v1187 = vadd.f32 %v992, %v1182
  %v1188 = vadd.f32 %v993, %v1183
  %v1189 = vadd.f32 %v994, %v1180
  %1190 = vset.pattern.permute.xlu0 6
  %1191 = vperm.xlu0 %1190, %v35
  %v1192 = vpop.permute.xlu0 %1191
  %v1194 = vmul.f32 %v49, %v1192
  %v1195 = vmul.f32 %v50, %v1192
  %v1196 = vmul.f32 %v51, %v1192
  %v1197 = vadd.f32 %v1194, 0.0
  %v1198 = vadd.f32 %v1195, 0.0
  %v1199 = vadd.f32 %v1196, 0.0
  %1200 = vset.pattern.permute.xlu0 13
  %1201 = vperm.xlu0 %1200, %v35
  %v1202 = vpop.permute.xlu0 %1201
  %v1204 = vmul.f32 %v49, %v1202
  %v1205 = vmul.f32 %v50, %v1202
  %v1206 = vmul.f32 %v51, %v1202
  %1210 = vrot.lane.b32.xlu0 %v1204, 112
  %v1211 = vpop.permute.xlu0 %1210
  %1212 = vrot.lane.b32.xlu0 %v1205, 112
  %v1213 = vpop.permute.xlu0 %1212
  %1214 = vrot.lane.b32.xlu0 %v1206, 112
  %v1215 = vpop.permute.xlu0 %1214
  %v1216 = vsel %vm79, %v1211, %v1213
  %v1217 = vsel %vm79, %v1213, %v1215
  %v1221 = vadd.f32 %v1197, %v1216
  %v1222 = vadd.f32 %v1198, %v1217
  %v1223 = vadd.f32 %v1199, %v1215
  %1224 = vset.pattern.permute.xlu0 20
  %1225 = vperm.xlu0 %1224, %v35
  %v1226 = vpop.permute.xlu0 %1225
  %v1228 = vmul.f32 %v49, %v1226
  %v1229 = vmul.f32 %v50, %v1226
  %v1230 = vmul.f32 %v51, %v1226
  %1234 = vrot.lane.b32.xlu0 %v1228, 96
  %v1235 = vpop.permute.xlu0 %1234
  %1236 = vrot.lane.b32.xlu0 %v1229, 96
  %v1237 = vpop.permute.xlu0 %1236
  %1238 = vrot.lane.b32.xlu0 %v1230, 96
  %v1239 = vpop.permute.xlu0 %1238
  %v1240 = vsel %vm104, %v1235, %v1237
  %v1241 = vsel %vm104, %v1237, %v1239
  %v1245 = vadd.f32 %v1221, %v1240
  %v1246 = vadd.f32 %v1222, %v1241
  %v1247 = vadd.f32 %v1223, %v1239
  %1248 = vset.pattern.permute.xlu0 27
  %1249 = vperm.xlu0 %1248, %v35
  %v1250 = vpop.permute.xlu0 %1249
  %v1252 = vmul.f32 %v49, %v1250
  %v1253 = vmul.f32 %v50, %v1250
  %v1254 = vmul.f32 %v51, %v1250
  %1258 = vrot.lane.b32.xlu0 %v1252, 80
  %v1259 = vpop.permute.xlu0 %1258
  %1260 = vrot.lane.b32.xlu0 %v1253, 80
  %v1261 = vpop.permute.xlu0 %1260
  %1262 = vrot.lane.b32.xlu0 %v1254, 80
  %v1263 = vpop.permute.xlu0 %1262
  %v1264 = vsel %vm129, %v1259, %v1261
  %v1265 = vsel %vm129, %v1261, %v1263
  %v1269 = vadd.f32 %v1245, %v1264
  %v1270 = vadd.f32 %v1246, %v1265
  %v1271 = vadd.f32 %v1247, %v1263
  %1272 = vset.pattern.permute.xlu0 34
  %1273 = vperm.xlu0 %1272, %v35
  %v1274 = vpop.permute.xlu0 %1273
  %v1276 = vmul.f32 %v49, %v1274
  %v1277 = vmul.f32 %v50, %v1274
  %v1278 = vmul.f32 %v51, %v1274
  %1282 = vrot.lane.b32.xlu0 %v1276, 64
  %v1283 = vpop.permute.xlu0 %1282
  %1284 = vrot.lane.b32.xlu0 %v1277, 64
  %v1285 = vpop.permute.xlu0 %1284
  %1286 = vrot.lane.b32.xlu0 %v1278, 64
  %v1287 = vpop.permute.xlu0 %1286
  %v1288 = vsel %vm154, %v1283, %v1285
  %v1289 = vsel %vm154, %v1285, %v1287
  %v1293 = vadd.f32 %v1269, %v1288
  %v1294 = vadd.f32 %v1270, %v1289
  %v1295 = vadd.f32 %v1271, %v1287
  %1296 = vset.pattern.permute.xlu0 41
  %1297 = vperm.xlu0 %1296, %v35
  %v1298 = vpop.permute.xlu0 %1297
  %v1300 = vmul.f32 %v49, %v1298
  %v1301 = vmul.f32 %v50, %v1298
  %v1302 = vmul.f32 %v51, %v1298
  %1306 = vrot.lane.b32.xlu0 %v1300, 48
  %v1307 = vpop.permute.xlu0 %1306
  %1308 = vrot.lane.b32.xlu0 %v1301, 48
  %v1309 = vpop.permute.xlu0 %1308
  %1310 = vrot.lane.b32.xlu0 %v1302, 48
  %v1311 = vpop.permute.xlu0 %1310
  %v1312 = vsel %vm179, %v1307, %v1309
  %v1313 = vsel %vm179, %v1309, %v1311
  %v1317 = vadd.f32 %v1293, %v1312
  %v1318 = vadd.f32 %v1294, %v1313
  %v1319 = vadd.f32 %v1295, %v1311
  %1320 = vset.pattern.permute.xlu0 48
  %1321 = vperm.xlu0 %1320, %v35
  %v1322 = vpop.permute.xlu0 %1321
  %v1324 = vmul.f32 %v49, %v1322
  %v1325 = vmul.f32 %v50, %v1322
  %v1326 = vmul.f32 %v51, %v1322
  %1330 = vrot.lane.b32.xlu0 %v1324, 32
  %v1331 = vpop.permute.xlu0 %1330
  %1332 = vrot.lane.b32.xlu0 %v1325, 32
  %v1333 = vpop.permute.xlu0 %1332
  %1334 = vrot.lane.b32.xlu0 %v1326, 32
  %v1335 = vpop.permute.xlu0 %1334
  %v1336 = vsel %vm204, %v1331, %v1333
  %v1337 = vsel %vm204, %v1333, %v1335
  %v1341 = vadd.f32 %v1317, %v1336
  %v1342 = vadd.f32 %v1318, %v1337
  %v1343 = vadd.f32 %v1319, %v1335
  %s1344 = scalar_lea.vmem %s1, 12
  %v1345 = vld [vmem:[%s1344] sm:$0x3]
  %v1347 = vlaneseq
  %v1348 = vshrl.u32 %v1347, 7
  %v1349 = vsub.s32 0, %v1348
  %v1350 = vrot.slane %v1345, %v1349
  %v1351 = vlaneseq
  %v1352 = vshrl.u32 %v1351, 7
  %v1353 = vsub.s32 1, %v1352
  %v1354 = vrot.slane %v1345, %v1353
  %1355 = vrot.lane.b32.xlu0 %v1350, 19
  %v1356 = vpop.permute.xlu0 %1355
  %1357 = vrot.lane.b32.xlu0 %v1354, 19
  %v1358 = vpop.permute.xlu0 %1357
  %vm1359 = vcmask 154624
  %v1360 = vsel %vm1359, %v1356, %v1358
  %v1364 = vmul.f32 %v1341, %v1356
  %v1365 = vmul.f32 %v1342, %v1360
  %v1366 = vmul.f32 %v1343, %v1358
  %1370 = vrot.lane.b32.xlu0 %v1364, 122
  %v1371 = vpop.permute.xlu0 %1370
  %1372 = vrot.lane.b32.xlu0 %v1365, 122
  %v1373 = vpop.permute.xlu0 %1372
  %1374 = vrot.lane.b32.xlu0 %v1366, 122
  %v1375 = vpop.permute.xlu0 %1374
  %vm1376 = vcmask 998400
  %v1377 = vsel %vm1376, %v1371, %v1373
  %v1378 = vsel %vm1376, %v1373, %v1375
  %v1382 = vadd.f32 %v1187, %v1377
  %v1383 = vadd.f32 %v1188, %v1378
  %v1384 = vadd.f32 %v1189, %v1375
  %1386 = vset.pattern.permute.xlu0 0
  %1387 = vperm.xlu0 %1386, %v36
  %v1388 = vpop.permute.xlu0 %1387
  %v1390 = vadd.f32 %v1382, %v1388
  %v1391 = vadd.f32 %v1383, %v1388
  %v1392 = vadd.f32 %v1384, %v1388
  %vm1393 = vcmask 1047656
  %v1394 = vsel %vm1393, %v1390, 0.0
  %v1395 = vrot.slane %v1394, 4
  %v1396 = vadd.f32 %v1394, %v1395
  %v1397 = vrot.slane %v1396, 2
  %v1398 = vadd.f32 %v1396, %v1397
  %v1399 = vrot.slane %v1398, 1
  %v1400 = vadd.f32 %v1398, %v1399
  %v1401 = vrot.slane %v1391, 4
  %v1402 = vadd.f32 %v1391, %v1401
  %v1403 = vrot.slane %v1402, 2
  %v1404 = vadd.f32 %v1402, %v1403
  %v1405 = vrot.slane %v1404, 1
  %v1406 = vadd.f32 %v1404, %v1405
  %v1407 = vsel %vm227, %v1392, 0.0
  %v1408 = vrot.slane %v1407, 4
  %v1409 = vadd.f32 %v1407, %v1408
  %v1410 = vrot.slane %v1409, 2
  %v1411 = vadd.f32 %v1409, %v1410
  %v1412 = vrot.slane %v1411, 1
  %v1413 = vadd.f32 %v1411, %v1412
  %v1414 = vrcp.pop 8.0
  %v1415 = vmul.f32 %v1400, %v1414
  %v1416 = vmul.f32 %v1406, %v1414
  %v1417 = vmul.f32 %v1413, %v1414
  %v1418 = vsub.f32 %v1390, %v1415
  %v1419 = vsub.f32 %v1391, %v1416
  %v1420 = vsub.f32 %v1392, %v1417
  %v1421 = vmul.f32 %v1418, %v1418
  %v1422 = vmul.f32 %v1419, %v1419
  %v1423 = vmul.f32 %v1420, %v1420
  %v1424 = vsel %vm1393, %v1421, 0.0
  %v1425 = vrot.slane %v1424, 4
  %v1426 = vadd.f32 %v1424, %v1425
  %v1427 = vrot.slane %v1426, 2
  %v1428 = vadd.f32 %v1426, %v1427
  %v1429 = vrot.slane %v1428, 1
  %v1430 = vadd.f32 %v1428, %v1429
  %v1431 = vrot.slane %v1422, 4
  %v1432 = vadd.f32 %v1422, %v1431
  %v1433 = vrot.slane %v1432, 2
  %v1434 = vadd.f32 %v1432, %v1433
  %v1435 = vrot.slane %v1434, 1
  %v1436 = vadd.f32 %v1434, %v1435
  %v1437 = vsel %vm227, %v1423, 0.0
  %v1438 = vrot.slane %v1437, 4
  %v1439 = vadd.f32 %v1437, %v1438
  %v1440 = vrot.slane %v1439, 2
  %v1441 = vadd.f32 %v1439, %v1440
  %v1442 = vrot.slane %v1441, 1
  %v1443 = vadd.f32 %v1441, %v1442
  %v1444 = vmul.f32 %v1430, %v1414
  %v1445 = vmul.f32 %v1436, %v1414
  %v1446 = vmul.f32 %v1443, %v1414
  %v1447 = vadd.f32 %v1444, 1e-05
  %v1448 = vadd.f32 %v1445, 1e-05
  %v1449 = vadd.f32 %v1446, 1e-05
  %v1450 = vrsqrt.pop %v1447
  %v1451 = vrsqrt.pop %v1448
  %v1452 = vrsqrt.pop %v1449
  %v1453 = vmul.f32 %v1418, %v1450
  %v1454 = vmul.f32 %v1419, %v1451
  %v1455 = vmul.f32 %v1420, %v1452
  %1457 = vset.pattern.permute.xlu0 0
  %1458 = vperm.xlu0 %1457, %v37
  %v1459 = vpop.permute.xlu0 %1458
  %v1461 = vmul.f32 %v1453, %v1459
  %v1462 = vmul.f32 %v1454, %v1459
  %v1463 = vmul.f32 %v1455, %v1459
  %1465 = vset.pattern.permute.xlu0 0
  %1466 = vperm.xlu0 %1465, %v38
  %v1467 = vpop.permute.xlu0 %1466
  %v1469 = vadd.f32 %v1461, %v1467
  %v1470 = vadd.f32 %v1462, %v1467
  %v1471 = vadd.f32 %v1463, %v1467
  %1473 = vset.pattern.permute.xlu0 0
  %1474 = vperm.xlu0 %1473, %v43
  %v1475 = vpop.permute.xlu0 %1474
  %1478 = vset.pattern.permute.xlu0 0
  %1479 = vperm.xlu0 %1478, %v44
  %v1480 = vpop.permute.xlu0 %1479
  %1483 = vset.pattern.permute.xlu0 0
  %1484 = vperm.xlu0 %1483, %v45
  %v1485 = vpop.permute.xlu0 %1484
  %1488 = vset.pattern.permute.xlu0 0
  %1489 = vperm.xlu0 %1488, %v46
  %v1490 = vpop.permute.xlu0 %1489
  %1495 = vrot.lane.b32.xlu0 %v1469, 115
  %v1496 = vpop.permute.xlu0 %1495
  %1497 = vrot.lane.b32.xlu0 %v1470, 115
  %v1498 = vpop.permute.xlu0 %1497
  %1499 = vrot.lane.b32.xlu0 %v1471, 115
  %v1500 = vpop.permute.xlu0 %1499
  %vm1501 = vcmask 941056
  %v1502 = vsel %vm1501, %v1496, %v1498
  %v1503 = vsel %vm1501, %v1498, %v1500
  %vm1506 = vcmask 64512
  %v1508 = vsel %vm1506, %v39, 0
  %v1511 = vsel %vm1506, %v40, 0
  %v1514 = vsel %vm1506, %v41, 0
  %v1517 = vsel %vm1506, %v42, 0
  %1519 = vmatprep.subr.mxu0 %v1503
  %1520 = vmatpush1.msra.mxu0 %v1502
  %1521 = vmatprep.subr.mxu0 0.0
  %1522 = vmatpush1.msra.mxu0 0.0
  %1523 = vmatprep.subr.mxu0 0.0
  %1524 = vmatpush1.msra.mxu0 0.0
  %1525 = vmatprep.subr.mxu0 0.0
  %1526 = vmatpush1.msra.mxu0 0.0
  %1527 = vmatprep.subr.mxu0 0.0
  %1528 = vmatpush1.msra.mxu0 0.0
  %1529 = vmatprep.subr.mxu0 0.0
  %1530 = vmatpush1.msra.mxu0 0.0
  %1531 = vmatprep.subr.mxu0 0.0
  %1532 = vmatpush1.msra.mxu0 0.0
  %1533 = vmatprep.subr.mxu0 0.0
  %1534 = vmatpush1.msra.mxu0 0.0
  %1535 = vmatprep.subr.mxu0 0.0
  %1536 = vmatpush1.msra.mxu0 0.0
  %1537 = vmatprep.subr.mxu0 0.0
  %1538 = vmatpush1.msra.mxu0 0.0
  %1539 = vmatprep.subr.mxu0 0.0
  %1540 = vmatpush1.msra.mxu0 0.0
  %1541 = vmatprep.subr.mxu0 0.0
  %1542 = vmatpush1.msra.mxu0 0.0
  %1543 = vmatprep.subr.mxu0 0.0
  %1544 = vmatpush1.msra.mxu0 0.0
  %1545 = vmatprep.subr.mxu0 0.0
  %1546 = vmatpush1.msra.mxu0 0.0
  %1547 = vmatprep.subr.mxu0 0.0
  %1548 = vmatpush1.msra.mxu0 0.0
  %1549 = vmatprep.subr.mxu0 0.0
  %1550 = vmatpush1.msra.mxu0 0.0
  %1551 = vmatprep.subr.mxu0 0.0
  %1552 = vmatpush1.msra.mxu0 0.0
  %1553 = vmatprep.subr.mxu0 0.0
  %1554 = vmatpush1.msra.mxu0 0.0
  %1555 = vmatprep.subr.mxu0 0.0
  %1556 = vmatpush1.msra.mxu0 0.0
  %1557 = vmatprep.subr.mxu0 0.0
  %1558 = vmatpush1.msra.mxu0 0.0
  %1559 = vmatprep.subr.mxu0 0.0
  %1560 = vmatpush1.msra.mxu0 0.0
  %1561 = vmatprep.subr.mxu0 0.0
  %1562 = vmatpush1.msra.mxu0 0.0
  %1563 = vmatprep.subr.mxu0 0.0
  %1564 = vmatpush1.msra.mxu0 0.0
  %1565 = vmatprep.subr.mxu0 0.0
  %1566 = vmatpush1.msra.mxu0 0.0
  %1567 = vmatprep.subr.mxu0 0.0
  %1568 = vmatpush1.msra.mxu0 0.0
  %1569 = vmatprep.subr.mxu0 0.0
  %1570 = vmatpush1.msra.mxu0 0.0
  %1571 = vmatprep.subr.mxu0 0.0
  %1572 = vmatpush1.msra.mxu0 0.0
  %1573 = vmatprep.subr.mxu0 0.0
  %1574 = vmatpush1.msra.mxu0 0.0
  %1575 = vmatprep.subr.mxu0 0.0
  %1576 = vmatpush1.msra.mxu0 0.0
  %1577 = vmatprep.subr.mxu0 0.0
  %1578 = vmatpush1.msra.mxu0 0.0
  %1579 = vmatprep.subr.mxu0 0.0
  %1580 = vmatpush1.msra.mxu0 0.0
  %1581 = vmatprep.subr.mxu0 0.0
  %1582 = vmatpush1.msra.mxu0 0.0
  %1583 = vmatprep.mubr.f32.mxu0 0.0
  %1584 = vmatmul.mubr.f32.gmra.mrb[0].mxu0 %v1508
  %v1585 = vpop.f32.mrb[0].mxu0
  %v1586 = vadd.f32 %v1475, %v1585
  %v1587 = vpop.f32.mrb[0].mxu0
  %v1588 = vadd.f32 %v1475, %v1587
  %1589 = vmatprep.mubr.f32.mxu0 0.0
  %1590 = vmatmul.mubr.f32.gmra.mrb[0].mxu0 %v1511
  %v1591 = vpop.f32.mrb[0].mxu0
  %v1592 = vadd.f32 %v1480, %v1591
  %v1593 = vpop.f32.mrb[0].mxu0
  %v1594 = vadd.f32 %v1480, %v1593
  %1595 = vmatprep.mubr.f32.mxu0 0.0
  %1596 = vmatmul.mubr.f32.gmra.mrb[0].mxu0 %v1514
  %v1597 = vpop.f32.mrb[0].mxu0
  %v1598 = vadd.f32 %v1485, %v1597
  %v1599 = vpop.f32.mrb[0].mxu0
  %v1600 = vadd.f32 %v1485, %v1599
  %1601 = vmatprep.mubr.f32.mxu0 0.0
  %1602 = vmatmul.mubr.f32.gmra.mrb[0].mxu0 %v1517
  %v1603 = vpop.f32.mrb[0].mxu0
  %v1604 = vadd.f32 %v1490, %v1603
  %v1605 = vpop.f32.mrb[0].mxu0
  %v1606 = vadd.f32 %v1490, %v1605
  %1607 = vdwg.mxu0
  %v1608 = vmul.f32 %v1586, 0.5
  %v1609 = vmul.f32 %v1588, 0.5
  %v1610 = vmul.f32 %v1592, 0.5
  %v1611 = vmul.f32 %v1594, 0.5
  %v1612 = vmul.f32 %v1598, 0.5
  %v1613 = vmul.f32 %v1600, 0.5
  %v1614 = vmul.f32 %v1604, 0.5
  %v1615 = vmul.f32 %v1606, 0.5
  %v1616 = vmul.f32 %v1586, 0.044715
  %v1617 = vmul.f32 %v1588, 0.044715
  %v1618 = vmul.f32 %v1592, 0.044715
  %v1619 = vmul.f32 %v1594, 0.044715
  %v1620 = vmul.f32 %v1598, 0.044715
  %v1621 = vmul.f32 %v1600, 0.044715
  %v1622 = vmul.f32 %v1604, 0.044715
  %v1623 = vmul.f32 %v1606, 0.044715
  %v1624 = vmul.f32 %v1616, %v1586
  %v1625 = vmul.f32 %v1617, %v1588
  %v1626 = vmul.f32 %v1618, %v1592
  %v1627 = vmul.f32 %v1619, %v1594
  %v1628 = vmul.f32 %v1620, %v1598
  %v1629 = vmul.f32 %v1621, %v1600
  %v1630 = vmul.f32 %v1622, %v1604
  %v1631 = vmul.f32 %v1623, %v1606
  %v1632 = vmul.f32 %v1624, %v1586
  %v1633 = vmul.f32 %v1625, %v1588
  %v1634 = vmul.f32 %v1626, %v1592
  %v1635 = vmul.f32 %v1627, %v1594
  %v1636 = vmul.f32 %v1628, %v1598
  %v1637 = vmul.f32 %v1629, %v1600
  %v1638 = vmul.f32 %v1630, %v1604
  %v1639 = vmul.f32 %v1631, %v1606
  %v1640 = vadd.f32 %v1586, %v1632
  %v1641 = vadd.f32 %v1588, %v1633
  %v1642 = vadd.f32 %v1592, %v1634
  %v1643 = vadd.f32 %v1594, %v1635
  %v1644 = vadd.f32 %v1598, %v1636
  %v1645 = vadd.f32 %v1600, %v1637
  %v1646 = vadd.f32 %v1604, %v1638
  %v1647 = vadd.f32 %v1606, %v1639
  %v1648 = vmul.f32 %v1640, 0.7978846
  %v1649 = vmul.f32 %v1641, 0.7978846
  %v1650 = vmul.f32 %v1642, 0.7978846
  %v1651 = vmul.f32 %v1643, 0.7978846
  %v1652 = vmul.f32 %v1644, 0.7978846
  %v1653 = vmul.f32 %v1645, 0.7978846
  %v1654 = vmul.f32 %v1646, 0.7978846
  %v1655 = vmul.f32 %v1647, 0.7978846
  %v1656 = vtanh.pop %v1648
  %v1657 = vtanh.pop %v1649
  %v1658 = vtanh.pop %v1650
  %v1659 = vtanh.pop %v1651
  %v1660 = vtanh.pop %v1652
  %v1661 = vtanh.pop %v1653
  %v1662 = vtanh.pop %v1654
  %v1663 = vtanh.pop %v1655
  %v1664 = vadd.f32 %v1656, 1.0
  %v1665 = vadd.f32 %v1657, 1.0
  %v1666 = vadd.f32 %v1658, 1.0
  %v1667 = vadd.f32 %v1659, 1.0
  %v1668 = vadd.f32 %v1660, 1.0
  %v1669 = vadd.f32 %v1661, 1.0
  %v1670 = vadd.f32 %v1662, 1.0
  %v1671 = vadd.f32 %v1663, 1.0
  %v1672 = vmul.f32 %v1608, %v1664
  %v1673 = vmul.f32 %v1609, %v1665
  %v1674 = vmul.f32 %v1610, %v1666
  %v1675 = vmul.f32 %v1611, %v1667
  %v1676 = vmul.f32 %v1612, %v1668
  %v1677 = vmul.f32 %v1613, %v1669
  %v1678 = vmul.f32 %v1614, %v1670
  %v1679 = vmul.f32 %v1615, %v1671
  %1681 = vset.pattern.permute.xlu0 0
  %1682 = vperm.xlu0 %1681, %v48
  %v1683 = vpop.permute.xlu0 %1682
  %v1686 = vsel %vm204, %v47, 0
  %1688 = vmatprep.subr.mxu0 %v1673
  %1689 = vmatpush1.msra.mxu0 %v1672
  %1690 = vmatprep.subr.mxu0 %v1675
  %1691 = vmatpush1.msra.mxu0 %v1674
  %1692 = vmatprep.subr.mxu0 %v1677
  %1693 = vmatpush1.msra.mxu0 %v1676
  %1694 = vmatprep.subr.mxu0 %v1679
  %1695 = vmatpush1.msra.mxu0 %v1678
  %1696 = vmatprep.subr.mxu0 0.0
  %1697 = vmatpush1.msra.mxu0 0.0
  %1698 = vmatprep.subr.mxu0 0.0
  %1699 = vmatpush1.msra.mxu0 0.0
  %1700 = vmatprep.subr.mxu0 0.0
  %1701 = vmatpush1.msra.mxu0 0.0
  %1702 = vmatprep.subr.mxu0 0.0
  %1703 = vmatpush1.msra.mxu0 0.0
  %1704 = vmatprep.subr.mxu0 0.0
  %1705 = vmatpush1.msra.mxu0 0.0
  %1706 = vmatprep.subr.mxu0 0.0
  %1707 = vmatpush1.msra.mxu0 0.0
  %1708 = vmatprep.subr.mxu0 0.0
  %1709 = vmatpush1.msra.mxu0 0.0
  %1710 = vmatprep.subr.mxu0 0.0
  %1711 = vmatpush1.msra.mxu0 0.0
  %1712 = vmatprep.subr.mxu0 0.0
  %1713 = vmatpush1.msra.mxu0 0.0
  %1714 = vmatprep.subr.mxu0 0.0
  %1715 = vmatpush1.msra.mxu0 0.0
  %1716 = vmatprep.subr.mxu0 0.0
  %1717 = vmatpush1.msra.mxu0 0.0
  %1718 = vmatprep.subr.mxu0 0.0
  %1719 = vmatpush1.msra.mxu0 0.0
  %1720 = vmatprep.subr.mxu0 0.0
  %1721 = vmatpush1.msra.mxu0 0.0
  %1722 = vmatprep.subr.mxu0 0.0
  %1723 = vmatpush1.msra.mxu0 0.0
  %1724 = vmatprep.subr.mxu0 0.0
  %1725 = vmatpush1.msra.mxu0 0.0
  %1726 = vmatprep.subr.mxu0 0.0
  %1727 = vmatpush1.msra.mxu0 0.0
  %1728 = vmatprep.subr.mxu0 0.0
  %1729 = vmatpush1.msra.mxu0 0.0
  %1730 = vmatprep.subr.mxu0 0.0
  %1731 = vmatpush1.msra.mxu0 0.0
  %1732 = vmatprep.subr.mxu0 0.0
  %1733 = vmatpush1.msra.mxu0 0.0
  %1734 = vmatprep.subr.mxu0 0.0
  %1735 = vmatpush1.msra.mxu0 0.0
  %1736 = vmatprep.subr.mxu0 0.0
  %1737 = vmatpush1.msra.mxu0 0.0
  %1738 = vmatprep.subr.mxu0 0.0
  %1739 = vmatpush1.msra.mxu0 0.0
  %1740 = vmatprep.subr.mxu0 0.0
  %1741 = vmatpush1.msra.mxu0 0.0
  %1742 = vmatprep.subr.mxu0 0.0
  %1743 = vmatpush1.msra.mxu0 0.0
  %1744 = vmatprep.subr.mxu0 0.0
  %1745 = vmatpush1.msra.mxu0 0.0
  %1746 = vmatprep.subr.mxu0 0.0
  %1747 = vmatpush1.msra.mxu0 0.0
  %1748 = vmatprep.subr.mxu0 0.0
  %1749 = vmatpush1.msra.mxu0 0.0
  %1750 = vmatprep.subr.mxu0 0.0
  %1751 = vmatpush1.msra.mxu0 0.0
  %1752 = vmatprep.mubr.f32.mxu0 0.0
  %1753 = vmatmul.mubr.f32.gmra.mrb[0].mxu0 %v1686
  %v1754 = vpop.f32.mrb[0].mxu0
  %v1755 = vadd.f32 %v1683, %v1754
  %v1756 = vpop.f32.mrb[0].mxu0
  %v1757 = vadd.f32 %v1683, %v1756
  %1758 = vdwg.mxu0
  %1761 = vrot.lane.b32.xlu0 %v1755, 64
  %v1762 = vpop.permute.xlu0 %1761
  %1763 = vrot.lane.b32.xlu0 %v1757, 64
  %v1764 = vpop.permute.xlu0 %1763
  %v1765 = vsel %vm154, %v1762, %v1764
  %v1769 = vadd.f32 %v49, %v1762
  %v1770 = vadd.f32 %v50, %v1765
  %v1771 = vadd.f32 %v51, %v1764
  %1775 = vrot.lane.b32.xlu0 %v1769, 64
  %v1776 = vpop.permute.xlu0 %1775
  %1777 = vrot.lane.b32.xlu0 %v1770, 64
  %v1778 = vpop.permute.xlu0 %1777
  %1779 = vrot.lane.b32.xlu0 %v1771, 64
  %v1780 = vpop.permute.xlu0 %1779
  %v1781 = vsel %vm154, %v1776, %v1778
  %v1782 = vsel %vm154, %v1778, %v1780
  %1785 = vst [vmem:[%s10] sm:$0xff] %v1781
  %1786 = vst [vmem:[%s10 + $0x8] sm:$0xff] %v1782
  %s1787 = scalar_lea.vmem %s0, 24
  %v1788 = vld [vmem:[%s1787] sm:$0xff]
  %v1789 = vld [vmem:[%s1787 + $0x8] sm:$0xff]
  %v1790 = vld [vmem:[%s1787 + $0x10] sm:$0xff]
  %v1791 = vmul.f32 %v1788, %v55
  %v1792 = vmul.f32 %v1789, %v55
  %v1793 = vmul.f32 %v1790, %v55
  %v1794 = vadd.f32 %v1791, 0.0
  %v1795 = vadd.f32 %v1792, 0.0
  %v1796 = vadd.f32 %v1793, 0.0
  %v1797 = vmul.f32 %v1788, %v65
  %v1798 = vmul.f32 %v1789, %v65
  %v1799 = vmul.f32 %v1790, %v65
  %1803 = vrot.lane.b32.xlu0 %v1797, 112
  %v1804 = vpop.permute.xlu0 %1803
  %1805 = vrot.lane.b32.xlu0 %v1798, 112
  %v1806 = vpop.permute.xlu0 %1805
  %1807 = vrot.lane.b32.xlu0 %v1799, 112
  %v1808 = vpop.permute.xlu0 %1807
  %v1809 = vsel %vm79, %v1804, %v1806
  %v1810 = vsel %vm79, %v1806, %v1808
  %v1814 = vadd.f32 %v1794, %v1809
  %v1815 = vadd.f32 %v1795, %v1810
  %v1816 = vadd.f32 %v1796, %v1808
  %v1817 = vmul.f32 %v1788, %v90
  %v1818 = vmul.f32 %v1789, %v90
  %v1819 = vmul.f32 %v1790, %v90
  %1823 = vrot.lane.b32.xlu0 %v1817, 96
  %v1824 = vpop.permute.xlu0 %1823
  %1825 = vrot.lane.b32.xlu0 %v1818, 96
  %v1826 = vpop.permute.xlu0 %1825
  %1827 = vrot.lane.b32.xlu0 %v1819, 96
  %v1828 = vpop.permute.xlu0 %1827
  %v1829 = vsel %vm104, %v1824, %v1826
  %v1830 = vsel %vm104, %v1826, %v1828
  %v1834 = vadd.f32 %v1814, %v1829
  %v1835 = vadd.f32 %v1815, %v1830
  %v1836 = vadd.f32 %v1816, %v1828
  %v1837 = vmul.f32 %v1788, %v115
  %v1838 = vmul.f32 %v1789, %v115
  %v1839 = vmul.f32 %v1790, %v115
  %1843 = vrot.lane.b32.xlu0 %v1837, 80
  %v1844 = vpop.permute.xlu0 %1843
  %1845 = vrot.lane.b32.xlu0 %v1838, 80
  %v1846 = vpop.permute.xlu0 %1845
  %1847 = vrot.lane.b32.xlu0 %v1839, 80
  %v1848 = vpop.permute.xlu0 %1847
  %v1849 = vsel %vm129, %v1844, %v1846
  %v1850 = vsel %vm129, %v1846, %v1848
  %v1854 = vadd.f32 %v1834, %v1849
  %v1855 = vadd.f32 %v1835, %v1850
  %v1856 = vadd.f32 %v1836, %v1848
  %v1857 = vmul.f32 %v1788, %v140
  %v1858 = vmul.f32 %v1789, %v140
  %v1859 = vmul.f32 %v1790, %v140
  %1863 = vrot.lane.b32.xlu0 %v1857, 64
  %v1864 = vpop.permute.xlu0 %1863
  %1865 = vrot.lane.b32.xlu0 %v1858, 64
  %v1866 = vpop.permute.xlu0 %1865
  %1867 = vrot.lane.b32.xlu0 %v1859, 64
  %v1868 = vpop.permute.xlu0 %1867
  %v1869 = vsel %vm154, %v1864, %v1866
  %v1870 = vsel %vm154, %v1866, %v1868
  %v1874 = vadd.f32 %v1854, %v1869
  %v1875 = vadd.f32 %v1855, %v1870
  %v1876 = vadd.f32 %v1856, %v1868
  %v1877 = vmul.f32 %v1788, %v165
  %v1878 = vmul.f32 %v1789, %v165
  %v1879 = vmul.f32 %v1790, %v165
  %1883 = vrot.lane.b32.xlu0 %v1877, 48
  %v1884 = vpop.permute.xlu0 %1883
  %1885 = vrot.lane.b32.xlu0 %v1878, 48
  %v1886 = vpop.permute.xlu0 %1885
  %1887 = vrot.lane.b32.xlu0 %v1879, 48
  %v1888 = vpop.permute.xlu0 %1887
  %v1889 = vsel %vm179, %v1884, %v1886
  %v1890 = vsel %vm179, %v1886, %v1888
  %v1894 = vadd.f32 %v1874, %v1889
  %v1895 = vadd.f32 %v1875, %v1890
  %v1896 = vadd.f32 %v1876, %v1888
  %v1897 = vmul.f32 %v1788, %v190
  %v1898 = vmul.f32 %v1789, %v190
  %v1899 = vmul.f32 %v1790, %v190
  %1903 = vrot.lane.b32.xlu0 %v1897, 32
  %v1904 = vpop.permute.xlu0 %1903
  %1905 = vrot.lane.b32.xlu0 %v1898, 32
  %v1906 = vpop.permute.xlu0 %1905
  %1907 = vrot.lane.b32.xlu0 %v1899, 32
  %v1908 = vpop.permute.xlu0 %1907
  %v1909 = vsel %vm204, %v1904, %v1906
  %v1910 = vsel %vm204, %v1906, %v1908
  %v1914 = vadd.f32 %v1894, %v1909
  %v1915 = vadd.f32 %v1895, %v1910
  %v1916 = vadd.f32 %v1896, %v1908
  %v1917 = vld [vmem:[%s1] sm:$0x3]
  %v1919 = vlaneseq
  %v1920 = vshrl.u32 %v1919, 7
  %v1921 = vsub.s32 0, %v1920
  %v1922 = vrot.slane %v1917, %v1921
  %v1923 = vlaneseq
  %v1924 = vshrl.u32 %v1923, 7
  %v1925 = vsub.s32 1, %v1924
  %v1926 = vrot.slane %v1917, %v1925
  %1927 = vrot.lane.b32.xlu0 %v1922, 13
  %v1928 = vpop.permute.xlu0 %1927
  %1929 = vrot.lane.b32.xlu0 %v1926, 13
  %v1930 = vpop.permute.xlu0 %1929
  %v1931 = vsel %vm227, %v1928, %v1930
  %v1935 = vmul.f32 %v1914, %v1928
  %v1936 = vmul.f32 %v1915, %v1931
  %v1937 = vmul.f32 %v1916, %v1930
  %v1938 = vadd.f32 %v1935, 0.0
  %v1939 = vadd.f32 %v1936, 0.0
  %v1940 = vadd.f32 %v1937, 0.0
  %v1941 = vmul.f32 %v1788, %v240
  %v1942 = vmul.f32 %v1789, %v240
  %v1943 = vmul.f32 %v1790, %v240
  %v1944 = vadd.f32 %v1941, 0.0
  %v1945 = vadd.f32 %v1942, 0.0
  %v1946 = vadd.f32 %v1943, 0.0
  %v1947 = vmul.f32 %v1788, %v250
  %v1948 = vmul.f32 %v1789, %v250
  %v1949 = vmul.f32 %v1790, %v250
  %1953 = vrot.lane.b32.xlu0 %v1947, 112
  %v1954 = vpop.permute.xlu0 %1953
  %1955 = vrot.lane.b32.xlu0 %v1948, 112
  %v1956 = vpop.permute.xlu0 %1955
  %1957 = vrot.lane.b32.xlu0 %v1949, 112
  %v1958 = vpop.permute.xlu0 %1957
  %v1959 = vsel %vm79, %v1954, %v1956
  %v1960 = vsel %vm79, %v1956, %v1958
  %v1964 = vadd.f32 %v1944, %v1959
  %v1965 = vadd.f32 %v1945, %v1960
  %v1966 = vadd.f32 %v1946, %v1958
  %v1967 = vmul.f32 %v1788, %v274
  %v1968 = vmul.f32 %v1789, %v274
  %v1969 = vmul.f32 %v1790, %v274
  %1973 = vrot.lane.b32.xlu0 %v1967, 96
  %v1974 = vpop.permute.xlu0 %1973
  %1975 = vrot.lane.b32.xlu0 %v1968, 96
  %v1976 = vpop.permute.xlu0 %1975
  %1977 = vrot.lane.b32.xlu0 %v1969, 96
  %v1978 = vpop.permute.xlu0 %1977
  %v1979 = vsel %vm104, %v1974, %v1976
  %v1980 = vsel %vm104, %v1976, %v1978
  %v1984 = vadd.f32 %v1964, %v1979
  %v1985 = vadd.f32 %v1965, %v1980
  %v1986 = vadd.f32 %v1966, %v1978
  %v1987 = vmul.f32 %v1788, %v298
  %v1988 = vmul.f32 %v1789, %v298
  %v1989 = vmul.f32 %v1790, %v298
  %1993 = vrot.lane.b32.xlu0 %v1987, 80
  %v1994 = vpop.permute.xlu0 %1993
  %1995 = vrot.lane.b32.xlu0 %v1988, 80
  %v1996 = vpop.permute.xlu0 %1995
  %1997 = vrot.lane.b32.xlu0 %v1989, 80
  %v1998 = vpop.permute.xlu0 %1997
  %v1999 = vsel %vm129, %v1994, %v1996
  %v2000 = vsel %vm129, %v1996, %v1998
  %v2004 = vadd.f32 %v1984, %v1999
  %v2005 = vadd.f32 %v1985, %v2000
  %v2006 = vadd.f32 %v1986, %v1998
  %v2007 = vmul.f32 %v1788, %v322
  %v2008 = vmul.f32 %v1789, %v322
  %v2009 = vmul.f32 %v1790, %v322
  %2013 = vrot.lane.b32.xlu0 %v2007, 64
  %v2014 = vpop.permute.xlu0 %2013
  %2015 = vrot.lane.b32.xlu0 %v2008, 64
  %v2016 = vpop.permute.xlu0 %2015
  %2017 = vrot.lane.b32.xlu0 %v2009, 64
  %v2018 = vpop.permute.xlu0 %2017
  %v2019 = vsel %vm154, %v2014, %v2016
  %v2020 = vsel %vm154, %v2016, %v2018
  %v2024 = vadd.f32 %v2004, %v2019
  %v2025 = vadd.f32 %v2005, %v2020
  %v2026 = vadd.f32 %v2006, %v2018
  %v2027 = vmul.f32 %v1788, %v346
  %v2028 = vmul.f32 %v1789, %v346
  %v2029 = vmul.f32 %v1790, %v346
  %2033 = vrot.lane.b32.xlu0 %v2027, 48
  %v2034 = vpop.permute.xlu0 %2033
  %2035 = vrot.lane.b32.xlu0 %v2028, 48
  %v2036 = vpop.permute.xlu0 %2035
  %2037 = vrot.lane.b32.xlu0 %v2029, 48
  %v2038 = vpop.permute.xlu0 %2037
  %v2039 = vsel %vm179, %v2034, %v2036
  %v2040 = vsel %vm179, %v2036, %v2038
  %v2044 = vadd.f32 %v2024, %v2039
  %v2045 = vadd.f32 %v2025, %v2040
  %v2046 = vadd.f32 %v2026, %v2038
  %v2047 = vmul.f32 %v1788, %v370
  %v2048 = vmul.f32 %v1789, %v370
  %v2049 = vmul.f32 %v1790, %v370
  %2053 = vrot.lane.b32.xlu0 %v2047, 32
  %v2054 = vpop.permute.xlu0 %2053
  %2055 = vrot.lane.b32.xlu0 %v2048, 32
  %v2056 = vpop.permute.xlu0 %2055
  %2057 = vrot.lane.b32.xlu0 %v2049, 32
  %v2058 = vpop.permute.xlu0 %2057
  %v2059 = vsel %vm204, %v2054, %v2056
  %v2060 = vsel %vm204, %v2056, %v2058
  %v2064 = vadd.f32 %v2044, %v2059
  %v2065 = vadd.f32 %v2045, %v2060
  %v2066 = vadd.f32 %v2046, %v2058
  %v2067 = vld [vmem:[%s392] sm:$0x3]
  %v2069 = vlaneseq
  %v2070 = vshrl.u32 %v2069, 7
  %v2071 = vsub.s32 0, %v2070
  %v2072 = vrot.slane %v2067, %v2071
  %v2073 = vlaneseq
  %v2074 = vshrl.u32 %v2073, 7
  %v2075 = vsub.s32 1, %v2074
  %v2076 = vrot.slane %v2067, %v2075
  %2077 = vrot.lane.b32.xlu0 %v2072, 14
  %v2078 = vpop.permute.xlu0 %2077
  %2079 = vrot.lane.b32.xlu0 %v2076, 14
  %v2080 = vpop.permute.xlu0 %2079
  %v2081 = vsel %vm407, %v2078, %v2080
  %v2085 = vmul.f32 %v2064, %v2078
  %v2086 = vmul.f32 %v2065, %v2081
  %v2087 = vmul.f32 %v2066, %v2080
  %2091 = vrot.lane.b32.xlu0 %v2085, 127
  %v2092 = vpop.permute.xlu0 %2091
  %2093 = vrot.lane.b32.xlu0 %v2086, 127
  %v2094 = vpop.permute.xlu0 %2093
  %2095 = vrot.lane.b32.xlu0 %v2087, 127
  %v2096 = vpop.permute.xlu0 %2095
  %v2097 = vsel %vm424, %v2092, %v2094
  %v2098 = vsel %vm424, %v2094, %v2096
  %v2102 = vadd.f32 %v1938, %v2097
  %v2103 = vadd.f32 %v1939, %v2098
  %v2104 = vadd.f32 %v1940, %v2096
  %v2105 = vmul.f32 %v1788, %v435
  %v2106 = vmul.f32 %v1789, %v435
  %v2107 = vmul.f32 %v1790, %v435
  %v2108 = vadd.f32 %v2105, 0.0
  %v2109 = vadd.f32 %v2106, 0.0
  %v2110 = vadd.f32 %v2107, 0.0
  %v2111 = vmul.f32 %v1788, %v445
  %v2112 = vmul.f32 %v1789, %v445
  %v2113 = vmul.f32 %v1790, %v445
  %2117 = vrot.lane.b32.xlu0 %v2111, 112
  %v2118 = vpop.permute.xlu0 %2117
  %2119 = vrot.lane.b32.xlu0 %v2112, 112
  %v2120 = vpop.permute.xlu0 %2119
  %2121 = vrot.lane.b32.xlu0 %v2113, 112
  %v2122 = vpop.permute.xlu0 %2121
  %v2123 = vsel %vm79, %v2118, %v2120
  %v2124 = vsel %vm79, %v2120, %v2122
  %v2128 = vadd.f32 %v2108, %v2123
  %v2129 = vadd.f32 %v2109, %v2124
  %v2130 = vadd.f32 %v2110, %v2122
  %v2131 = vmul.f32 %v1788, %v469
  %v2132 = vmul.f32 %v1789, %v469
  %v2133 = vmul.f32 %v1790, %v469
  %2137 = vrot.lane.b32.xlu0 %v2131, 96
  %v2138 = vpop.permute.xlu0 %2137
  %2139 = vrot.lane.b32.xlu0 %v2132, 96
  %v2140 = vpop.permute.xlu0 %2139
  %2141 = vrot.lane.b32.xlu0 %v2133, 96
  %v2142 = vpop.permute.xlu0 %2141
  %v2143 = vsel %vm104, %v2138, %v2140
  %v2144 = vsel %vm104, %v2140, %v2142
  %v2148 = vadd.f32 %v2128, %v2143
  %v2149 = vadd.f32 %v2129, %v2144
  %v2150 = vadd.f32 %v2130, %v2142
  %v2151 = vmul.f32 %v1788, %v493
  %v2152 = vmul.f32 %v1789, %v493
  %v2153 = vmul.f32 %v1790, %v493
  %2157 = vrot.lane.b32.xlu0 %v2151, 80
  %v2158 = vpop.permute.xlu0 %2157
  %2159 = vrot.lane.b32.xlu0 %v2152, 80
  %v2160 = vpop.permute.xlu0 %2159
  %2161 = vrot.lane.b32.xlu0 %v2153, 80
  %v2162 = vpop.permute.xlu0 %2161
  %v2163 = vsel %vm129, %v2158, %v2160
  %v2164 = vsel %vm129, %v2160, %v2162
  %v2168 = vadd.f32 %v2148, %v2163
  %v2169 = vadd.f32 %v2149, %v2164
  %v2170 = vadd.f32 %v2150, %v2162
  %v2171 = vmul.f32 %v1788, %v517
  %v2172 = vmul.f32 %v1789, %v517
  %v2173 = vmul.f32 %v1790, %v517
  %2177 = vrot.lane.b32.xlu0 %v2171, 64
  %v2178 = vpop.permute.xlu0 %2177
  %2179 = vrot.lane.b32.xlu0 %v2172, 64
  %v2180 = vpop.permute.xlu0 %2179
  %2181 = vrot.lane.b32.xlu0 %v2173, 64
  %v2182 = vpop.permute.xlu0 %2181
  %v2183 = vsel %vm154, %v2178, %v2180
  %v2184 = vsel %vm154, %v2180, %v2182
  %v2188 = vadd.f32 %v2168, %v2183
  %v2189 = vadd.f32 %v2169, %v2184
  %v2190 = vadd.f32 %v2170, %v2182
  %v2191 = vmul.f32 %v1788, %v541
  %v2192 = vmul.f32 %v1789, %v541
  %v2193 = vmul.f32 %v1790, %v541
  %2197 = vrot.lane.b32.xlu0 %v2191, 48
  %v2198 = vpop.permute.xlu0 %2197
  %2199 = vrot.lane.b32.xlu0 %v2192, 48
  %v2200 = vpop.permute.xlu0 %2199
  %2201 = vrot.lane.b32.xlu0 %v2193, 48
  %v2202 = vpop.permute.xlu0 %2201
  %v2203 = vsel %vm179, %v2198, %v2200
  %v2204 = vsel %vm179, %v2200, %v2202
  %v2208 = vadd.f32 %v2188, %v2203
  %v2209 = vadd.f32 %v2189, %v2204
  %v2210 = vadd.f32 %v2190, %v2202
  %v2211 = vmul.f32 %v1788, %v565
  %v2212 = vmul.f32 %v1789, %v565
  %v2213 = vmul.f32 %v1790, %v565
  %2217 = vrot.lane.b32.xlu0 %v2211, 32
  %v2218 = vpop.permute.xlu0 %2217
  %2219 = vrot.lane.b32.xlu0 %v2212, 32
  %v2220 = vpop.permute.xlu0 %2219
  %2221 = vrot.lane.b32.xlu0 %v2213, 32
  %v2222 = vpop.permute.xlu0 %2221
  %v2223 = vsel %vm204, %v2218, %v2220
  %v2224 = vsel %vm204, %v2220, %v2222
  %v2228 = vadd.f32 %v2208, %v2223
  %v2229 = vadd.f32 %v2209, %v2224
  %v2230 = vadd.f32 %v2210, %v2222
  %v2231 = vld [vmem:[%s587] sm:$0x3]
  %v2233 = vlaneseq
  %v2234 = vshrl.u32 %v2233, 7
  %v2235 = vsub.s32 0, %v2234
  %v2236 = vrot.slane %v2231, %v2235
  %v2237 = vlaneseq
  %v2238 = vshrl.u32 %v2237, 7
  %v2239 = vsub.s32 1, %v2238
  %v2240 = vrot.slane %v2231, %v2239
  %2241 = vrot.lane.b32.xlu0 %v2236, 15
  %v2242 = vpop.permute.xlu0 %2241
  %2243 = vrot.lane.b32.xlu0 %v2240, 15
  %v2244 = vpop.permute.xlu0 %2243
  %v2245 = vsel %vm602, %v2242, %v2244
  %v2249 = vmul.f32 %v2228, %v2242
  %v2250 = vmul.f32 %v2229, %v2245
  %v2251 = vmul.f32 %v2230, %v2244
  %2255 = vrot.lane.b32.xlu0 %v2249, 126
  %v2256 = vpop.permute.xlu0 %2255
  %2257 = vrot.lane.b32.xlu0 %v2250, 126
  %v2258 = vpop.permute.xlu0 %2257
  %2259 = vrot.lane.b32.xlu0 %v2251, 126
  %v2260 = vpop.permute.xlu0 %2259
  %v2261 = vsel %vm619, %v2256, %v2258
  %v2262 = vsel %vm619, %v2258, %v2260
  %v2266 = vadd.f32 %v2102, %v2261
  %v2267 = vadd.f32 %v2103, %v2262
  %v2268 = vadd.f32 %v2104, %v2260
  %v2269 = vmul.f32 %v1788, %v630
  %v2270 = vmul.f32 %v1789, %v630
  %v2271 = vmul.f32 %v1790, %v630
  %v2272 = vadd.f32 %v2269, 0.0
  %v2273 = vadd.f32 %v2270, 0.0
  %v2274 = vadd.f32 %v2271, 0.0
  %v2275 = vmul.f32 %v1788, %v640
  %v2276 = vmul.f32 %v1789, %v640
  %v2277 = vmul.f32 %v1790, %v640
  %2281 = vrot.lane.b32.xlu0 %v2275, 112
  %v2282 = vpop.permute.xlu0 %2281
  %2283 = vrot.lane.b32.xlu0 %v2276, 112
  %v2284 = vpop.permute.xlu0 %2283
  %2285 = vrot.lane.b32.xlu0 %v2277, 112
  %v2286 = vpop.permute.xlu0 %2285
  %v2287 = vsel %vm79, %v2282, %v2284
  %v2288 = vsel %vm79, %v2284, %v2286
  %v2292 = vadd.f32 %v2272, %v2287
  %v2293 = vadd.f32 %v2273, %v2288
  %v2294 = vadd.f32 %v2274, %v2286
  %v2295 = vmul.f32 %v1788, %v664
  %v2296 = vmul.f32 %v1789, %v664
  %v2297 = vmul.f32 %v1790, %v664
  %2301 = vrot.lane.b32.xlu0 %v2295, 96
  %v2302 = vpop.permute.xlu0 %2301
  %2303 = vrot.lane.b32.xlu0 %v2296, 96
  %v2304 = vpop.permute.xlu0 %2303
  %2305 = vrot.lane.b32.xlu0 %v2297, 96
  %v2306 = vpop.permute.xlu0 %2305
  %v2307 = vsel %vm104, %v2302, %v2304
  %v2308 = vsel %vm104, %v2304, %v2306
  %v2312 = vadd.f32 %v2292, %v2307
  %v2313 = vadd.f32 %v2293, %v2308
  %v2314 = vadd.f32 %v2294, %v2306
  %v2315 = vmul.f32 %v1788, %v688
  %v2316 = vmul.f32 %v1789, %v688
  %v2317 = vmul.f32 %v1790, %v688
  %2321 = vrot.lane.b32.xlu0 %v2315, 80
  %v2322 = vpop.permute.xlu0 %2321
  %2323 = vrot.lane.b32.xlu0 %v2316, 80
  %v2324 = vpop.permute.xlu0 %2323
  %2325 = vrot.lane.b32.xlu0 %v2317, 80
  %v2326 = vpop.permute.xlu0 %2325
  %v2327 = vsel %vm129, %v2322, %v2324
  %v2328 = vsel %vm129, %v2324, %v2326
  %v2332 = vadd.f32 %v2312, %v2327
  %v2333 = vadd.f32 %v2313, %v2328
  %v2334 = vadd.f32 %v2314, %v2326
  %v2335 = vmul.f32 %v1788, %v712
  %v2336 = vmul.f32 %v1789, %v712
  %v2337 = vmul.f32 %v1790, %v712
  %2341 = vrot.lane.b32.xlu0 %v2335, 64
  %v2342 = vpop.permute.xlu0 %2341
  %2343 = vrot.lane.b32.xlu0 %v2336, 64
  %v2344 = vpop.permute.xlu0 %2343
  %2345 = vrot.lane.b32.xlu0 %v2337, 64
  %v2346 = vpop.permute.xlu0 %2345
  %v2347 = vsel %vm154, %v2342, %v2344
  %v2348 = vsel %vm154, %v2344, %v2346
  %v2352 = vadd.f32 %v2332, %v2347
  %v2353 = vadd.f32 %v2333, %v2348
  %v2354 = vadd.f32 %v2334, %v2346
  %v2355 = vmul.f32 %v1788, %v736
  %v2356 = vmul.f32 %v1789, %v736
  %v2357 = vmul.f32 %v1790, %v736
  %2361 = vrot.lane.b32.xlu0 %v2355, 48
  %v2362 = vpop.permute.xlu0 %2361
  %2363 = vrot.lane.b32.xlu0 %v2356, 48
  %v2364 = vpop.permute.xlu0 %2363
  %2365 = vrot.lane.b32.xlu0 %v2357, 48
  %v2366 = vpop.permute.xlu0 %2365
  %v2367 = vsel %vm179, %v2362, %v2364
  %v2368 = vsel %vm179, %v2364, %v2366
  %v2372 = vadd.f32 %v2352, %v2367
  %v2373 = vadd.f32 %v2353, %v2368
  %v2374 = vadd.f32 %v2354, %v2366
  %v2375 = vmul.f32 %v1788, %v760
  %v2376 = vmul.f32 %v1789, %v760
  %v2377 = vmul.f32 %v1790, %v760
  %2381 = vrot.lane.b32.xlu0 %v2375, 32
  %v2382 = vpop.permute.xlu0 %2381
  %2383 = vrot.lane.b32.xlu0 %v2376, 32
  %v2384 = vpop.permute.xlu0 %2383
  %2385 = vrot.lane.b32.xlu0 %v2377, 32
  %v2386 = vpop.permute.xlu0 %2385
  %v2387 = vsel %vm204, %v2382, %v2384
  %v2388 = vsel %vm204, %v2384, %v2386
  %v2392 = vadd.f32 %v2372, %v2387
  %v2393 = vadd.f32 %v2373, %v2388
  %v2394 = vadd.f32 %v2374, %v2386
  %2398 = vrot.lane.b32.xlu0 %v2392, 125
  %v2399 = vpop.permute.xlu0 %2398
  %2400 = vrot.lane.b32.xlu0 %v2393, 125
  %v2401 = vpop.permute.xlu0 %2400
  %2402 = vrot.lane.b32.xlu0 %v2394, 125
  %v2403 = vpop.permute.xlu0 %2402
  %v2404 = vsel %vm791, %v2399, %v2401
  %v2405 = vsel %vm791, %v2401, %v2403
  %v2409 = vadd.f32 %v2266, %v2404
  %v2410 = vadd.f32 %v2267, %v2405
  %v2411 = vadd.f32 %v2268, %v2403
  %v2412 = vmul.f32 %v1788, %v802
  %v2413 = vmul.f32 %v1789, %v802
  %v2414 = vmul.f32 %v1790, %v802
  %v2415 = vadd.f32 %v2412, 0.0
  %v2416 = vadd.f32 %v2413, 0.0
  %v2417 = vadd.f32 %v2414, 0.0
  %v2418 = vmul.f32 %v1788, %v812
  %v2419 = vmul.f32 %v1789, %v812
  %v2420 = vmul.f32 %v1790, %v812
  %2424 = vrot.lane.b32.xlu0 %v2418, 112
  %v2425 = vpop.permute.xlu0 %2424
  %2426 = vrot.lane.b32.xlu0 %v2419, 112
  %v2427 = vpop.permute.xlu0 %2426
  %2428 = vrot.lane.b32.xlu0 %v2420, 112
  %v2429 = vpop.permute.xlu0 %2428
  %v2430 = vsel %vm79, %v2425, %v2427
  %v2431 = vsel %vm79, %v2427, %v2429
  %v2435 = vadd.f32 %v2415, %v2430
  %v2436 = vadd.f32 %v2416, %v2431
  %v2437 = vadd.f32 %v2417, %v2429
  %v2438 = vmul.f32 %v1788, %v836
  %v2439 = vmul.f32 %v1789, %v836
  %v2440 = vmul.f32 %v1790, %v836
  %2444 = vrot.lane.b32.xlu0 %v2438, 96
  %v2445 = vpop.permute.xlu0 %2444
  %2446 = vrot.lane.b32.xlu0 %v2439, 96
  %v2447 = vpop.permute.xlu0 %2446
  %2448 = vrot.lane.b32.xlu0 %v2440, 96
  %v2449 = vpop.permute.xlu0 %2448
  %v2450 = vsel %vm104, %v2445, %v2447
  %v2451 = vsel %vm104, %v2447, %v2449
  %v2455 = vadd.f32 %v2435, %v2450
  %v2456 = vadd.f32 %v2436, %v2451
  %v2457 = vadd.f32 %v2437, %v2449
  %v2458 = vmul.f32 %v1788, %v860
  %v2459 = vmul.f32 %v1789, %v860
  %v2460 = vmul.f32 %v1790, %v860
  %2464 = vrot.lane.b32.xlu0 %v2458, 80
  %v2465 = vpop.permute.xlu0 %2464
  %2466 = vrot.lane.b32.xlu0 %v2459, 80
  %v2467 = vpop.permute.xlu0 %2466
  %2468 = vrot.lane.b32.xlu0 %v2460, 80
  %v2469 = vpop.permute.xlu0 %2468
  %v2470 = vsel %vm129, %v2465, %v2467
  %v2471 = vsel %vm129, %v2467, %v2469
  %v2475 = vadd.f32 %v2455, %v2470
  %v2476 = vadd.f32 %v2456, %v2471
  %v2477 = vadd.f32 %v2457, %v2469
  %v2478 = vmul.f32 %v1788, %v884
  %v2479 = vmul.f32 %v1789, %v884
  %v2480 = vmul.f32 %v1790, %v884
  %2484 = vrot.lane.b32.xlu0 %v2478, 64
  %v2485 = vpop.permute.xlu0 %2484
  %2486 = vrot.lane.b32.xlu0 %v2479, 64
  %v2487 = vpop.permute.xlu0 %2486
  %2488 = vrot.lane.b32.xlu0 %v2480, 64
  %v2489 = vpop.permute.xlu0 %2488
  %v2490 = vsel %vm154, %v2485, %v2487
  %v2491 = vsel %vm154, %v2487, %v2489
  %v2495 = vadd.f32 %v2475, %v2490
  %v2496 = vadd.f32 %v2476, %v2491
  %v2497 = vadd.f32 %v2477, %v2489
  %v2498 = vmul.f32 %v1788, %v908
  %v2499 = vmul.f32 %v1789, %v908
  %v2500 = vmul.f32 %v1790, %v908
  %2504 = vrot.lane.b32.xlu0 %v2498, 48
  %v2505 = vpop.permute.xlu0 %2504
  %2506 = vrot.lane.b32.xlu0 %v2499, 48
  %v2507 = vpop.permute.xlu0 %2506
  %2508 = vrot.lane.b32.xlu0 %v2500, 48
  %v2509 = vpop.permute.xlu0 %2508
  %v2510 = vsel %vm179, %v2505, %v2507
  %v2511 = vsel %vm179, %v2507, %v2509
  %v2515 = vadd.f32 %v2495, %v2510
  %v2516 = vadd.f32 %v2496, %v2511
  %v2517 = vadd.f32 %v2497, %v2509
  %v2518 = vmul.f32 %v1788, %v932
  %v2519 = vmul.f32 %v1789, %v932
  %v2520 = vmul.f32 %v1790, %v932
  %2524 = vrot.lane.b32.xlu0 %v2518, 32
  %v2525 = vpop.permute.xlu0 %2524
  %2526 = vrot.lane.b32.xlu0 %v2519, 32
  %v2527 = vpop.permute.xlu0 %2526
  %2528 = vrot.lane.b32.xlu0 %v2520, 32
  %v2529 = vpop.permute.xlu0 %2528
  %v2530 = vsel %vm204, %v2525, %v2527
  %v2531 = vsel %vm204, %v2527, %v2529
  %v2535 = vadd.f32 %v2515, %v2530
  %v2536 = vadd.f32 %v2516, %v2531
  %v2537 = vadd.f32 %v2517, %v2529
  %v2538 = vld [vmem:[%s954] sm:$0x3]
  %v2540 = vlaneseq
  %v2541 = vshrl.u32 %v2540, 7
  %v2542 = vsub.s32 0, %v2541
  %v2543 = vrot.slane %v2538, %v2542
  %v2544 = vlaneseq
  %v2545 = vshrl.u32 %v2544, 7
  %v2546 = vsub.s32 1, %v2545
  %v2547 = vrot.slane %v2538, %v2546
  %2548 = vrot.lane.b32.xlu0 %v2543, 17
  %v2549 = vpop.permute.xlu0 %2548
  %2550 = vrot.lane.b32.xlu0 %v2547, 17
  %v2551 = vpop.permute.xlu0 %2550
  %v2552 = vsel %vm969, %v2549, %v2551
  %v2556 = vmul.f32 %v2535, %v2549
  %v2557 = vmul.f32 %v2536, %v2552
  %v2558 = vmul.f32 %v2537, %v2551
  %2562 = vrot.lane.b32.xlu0 %v2556, 124
  %v2563 = vpop.permute.xlu0 %2562
  %2564 = vrot.lane.b32.xlu0 %v2557, 124
  %v2565 = vpop.permute.xlu0 %2564
  %2566 = vrot.lane.b32.xlu0 %v2558, 124
  %v2567 = vpop.permute.xlu0 %2566
  %v2568 = vsel %vm986, %v2563, %v2565
  %v2569 = vsel %vm986, %v2565, %v2567
  %v2573 = vadd.f32 %v2409, %v2568
  %v2574 = vadd.f32 %v2410, %v2569
  %v2575 = vadd.f32 %v2411, %v2567
  %v2576 = vmul.f32 %v1788, %v997
  %v2577 = vmul.f32 %v1789, %v997
  %v2578 = vmul.f32 %v1790, %v997
  %v2579 = vadd.f32 %v2576, 0.0
  %v2580 = vadd.f32 %v2577, 0.0
  %v2581 = vadd.f32 %v2578, 0.0
  %v2582 = vmul.f32 %v1788, %v1007
  %v2583 = vmul.f32 %v1789, %v1007
  %v2584 = vmul.f32 %v1790, %v1007
  %2588 = vrot.lane.b32.xlu0 %v2582, 112
  %v2589 = vpop.permute.xlu0 %2588
  %2590 = vrot.lane.b32.xlu0 %v2583, 112
  %v2591 = vpop.permute.xlu0 %2590
  %2592 = vrot.lane.b32.xlu0 %v2584, 112
  %v2593 = vpop.permute.xlu0 %2592
  %v2594 = vsel %vm79, %v2589, %v2591
  %v2595 = vsel %vm79, %v2591, %v2593
  %v2599 = vadd.f32 %v2579, %v2594
  %v2600 = vadd.f32 %v2580, %v2595
  %v2601 = vadd.f32 %v2581, %v2593
  %v2602 = vmul.f32 %v1788, %v1031
  %v2603 = vmul.f32 %v1789, %v1031
  %v2604 = vmul.f32 %v1790, %v1031
  %2608 = vrot.lane.b32.xlu0 %v2602, 96
  %v2609 = vpop.permute.xlu0 %2608
  %2610 = vrot.lane.b32.xlu0 %v2603, 96
  %v2611 = vpop.permute.xlu0 %2610
  %2612 = vrot.lane.b32.xlu0 %v2604, 96
  %v2613 = vpop.permute.xlu0 %2612
  %v2614 = vsel %vm104, %v2609, %v2611
  %v2615 = vsel %vm104, %v2611, %v2613
  %v2619 = vadd.f32 %v2599, %v2614
  %v2620 = vadd.f32 %v2600, %v2615
  %v2621 = vadd.f32 %v2601, %v2613
  %v2622 = vmul.f32 %v1788, %v1055
  %v2623 = vmul.f32 %v1789, %v1055
  %v2624 = vmul.f32 %v1790, %v1055
  %2628 = vrot.lane.b32.xlu0 %v2622, 80
  %v2629 = vpop.permute.xlu0 %2628
  %2630 = vrot.lane.b32.xlu0 %v2623, 80
  %v2631 = vpop.permute.xlu0 %2630
  %2632 = vrot.lane.b32.xlu0 %v2624, 80
  %v2633 = vpop.permute.xlu0 %2632
  %v2634 = vsel %vm129, %v2629, %v2631
  %v2635 = vsel %vm129, %v2631, %v2633
  %v2639 = vadd.f32 %v2619, %v2634
  %v2640 = vadd.f32 %v2620, %v2635
  %v2641 = vadd.f32 %v2621, %v2633
  %v2642 = vmul.f32 %v1788, %v1079
  %v2643 = vmul.f32 %v1789, %v1079
  %v2644 = vmul.f32 %v1790, %v1079
  %2648 = vrot.lane.b32.xlu0 %v2642, 64
  %v2649 = vpop.permute.xlu0 %2648
  %2650 = vrot.lane.b32.xlu0 %v2643, 64
  %v2651 = vpop.permute.xlu0 %2650
  %2652 = vrot.lane.b32.xlu0 %v2644, 64
  %v2653 = vpop.permute.xlu0 %2652
  %v2654 = vsel %vm154, %v2649, %v2651
  %v2655 = vsel %vm154, %v2651, %v2653
  %v2659 = vadd.f32 %v2639, %v2654
  %v2660 = vadd.f32 %v2640, %v2655
  %v2661 = vadd.f32 %v2641, %v2653
  %v2662 = vmul.f32 %v1788, %v1103
  %v2663 = vmul.f32 %v1789, %v1103
  %v2664 = vmul.f32 %v1790, %v1103
  %2668 = vrot.lane.b32.xlu0 %v2662, 48
  %v2669 = vpop.permute.xlu0 %2668
  %2670 = vrot.lane.b32.xlu0 %v2663, 48
  %v2671 = vpop.permute.xlu0 %2670
  %2672 = vrot.lane.b32.xlu0 %v2664, 48
  %v2673 = vpop.permute.xlu0 %2672
  %v2674 = vsel %vm179, %v2669, %v2671
  %v2675 = vsel %vm179, %v2671, %v2673
  %v2679 = vadd.f32 %v2659, %v2674
  %v2680 = vadd.f32 %v2660, %v2675
  %v2681 = vadd.f32 %v2661, %v2673
  %v2682 = vmul.f32 %v1788, %v1127
  %v2683 = vmul.f32 %v1789, %v1127
  %v2684 = vmul.f32 %v1790, %v1127
  %2688 = vrot.lane.b32.xlu0 %v2682, 32
  %v2689 = vpop.permute.xlu0 %2688
  %2690 = vrot.lane.b32.xlu0 %v2683, 32
  %v2691 = vpop.permute.xlu0 %2690
  %2692 = vrot.lane.b32.xlu0 %v2684, 32
  %v2693 = vpop.permute.xlu0 %2692
  %v2694 = vsel %vm204, %v2689, %v2691
  %v2695 = vsel %vm204, %v2691, %v2693
  %v2699 = vadd.f32 %v2679, %v2694
  %v2700 = vadd.f32 %v2680, %v2695
  %v2701 = vadd.f32 %v2681, %v2693
  %v2702 = vld [vmem:[%s1149] sm:$0x3]
  %v2704 = vlaneseq
  %v2705 = vshrl.u32 %v2704, 7
  %v2706 = vsub.s32 0, %v2705
  %v2707 = vrot.slane %v2702, %v2706
  %v2708 = vlaneseq
  %v2709 = vshrl.u32 %v2708, 7
  %v2710 = vsub.s32 1, %v2709
  %v2711 = vrot.slane %v2702, %v2710
  %2712 = vrot.lane.b32.xlu0 %v2707, 18
  %v2713 = vpop.permute.xlu0 %2712
  %2714 = vrot.lane.b32.xlu0 %v2711, 18
  %v2715 = vpop.permute.xlu0 %2714
  %v2716 = vsel %vm1164, %v2713, %v2715
  %v2720 = vmul.f32 %v2699, %v2713
  %v2721 = vmul.f32 %v2700, %v2716
  %v2722 = vmul.f32 %v2701, %v2715
  %2726 = vrot.lane.b32.xlu0 %v2720, 123
  %v2727 = vpop.permute.xlu0 %2726
  %2728 = vrot.lane.b32.xlu0 %v2721, 123
  %v2729 = vpop.permute.xlu0 %2728
  %2730 = vrot.lane.b32.xlu0 %v2722, 123
  %v2731 = vpop.permute.xlu0 %2730
  %v2732 = vsel %vm1181, %v2727, %v2729
  %v2733 = vsel %vm1181, %v2729, %v2731
  %v2737 = vadd.f32 %v2573, %v2732
  %v2738 = vadd.f32 %v2574, %v2733
  %v2739 = vadd.f32 %v2575, %v2731
  %v2740 = vmul.f32 %v1788, %v1192
  %v2741 = vmul.f32 %v1789, %v1192
  %v2742 = vmul.f32 %v1790, %v1192
  %v2743 = vadd.f32 %v2740, 0.0
  %v2744 = vadd.f32 %v2741, 0.0
  %v2745 = vadd.f32 %v2742, 0.0
  %v2746 = vmul.f32 %v1788, %v1202
  %v2747 = vmul.f32 %v1789, %v1202
  %v2748 = vmul.f32 %v1790, %v1202
  %2752 = vrot.lane.b32.xlu0 %v2746, 112
  %v2753 = vpop.permute.xlu0 %2752
  %2754 = vrot.lane.b32.xlu0 %v2747, 112
  %v2755 = vpop.permute.xlu0 %2754
  %2756 = vrot.lane.b32.xlu0 %v2748, 112
  %v2757 = vpop.permute.xlu0 %2756
  %v2758 = vsel %vm79, %v2753, %v2755
  %v2759 = vsel %vm79, %v2755, %v2757
  %v2763 = vadd.f32 %v2743, %v2758
  %v2764 = vadd.f32 %v2744, %v2759
  %v2765 = vadd.f32 %v2745, %v2757
  %v2766 = vmul.f32 %v1788, %v1226
  %v2767 = vmul.f32 %v1789, %v1226
  %v2768 = vmul.f32 %v1790, %v1226
  %2772 = vrot.lane.b32.xlu0 %v2766, 96
  %v2773 = vpop.permute.xlu0 %2772
  %2774 = vrot.lane.b32.xlu0 %v2767, 96
  %v2775 = vpop.permute.xlu0 %2774
  %2776 = vrot.lane.b32.xlu0 %v2768, 96
  %v2777 = vpop.permute.xlu0 %2776
  %v2778 = vsel %vm104, %v2773, %v2775
  %v2779 = vsel %vm104, %v2775, %v2777
  %v2783 = vadd.f32 %v2763, %v2778
  %v2784 = vadd.f32 %v2764, %v2779
  %v2785 = vadd.f32 %v2765, %v2777
  %v2786 = vmul.f32 %v1788, %v1250
  %v2787 = vmul.f32 %v1789, %v1250
  %v2788 = vmul.f32 %v1790, %v1250
  %2792 = vrot.lane.b32.xlu0 %v2786, 80
  %v2793 = vpop.permute.xlu0 %2792
  %2794 = vrot.lane.b32.xlu0 %v2787, 80
  %v2795 = vpop.permute.xlu0 %2794
  %2796 = vrot.lane.b32.xlu0 %v2788, 80
  %v2797 = vpop.permute.xlu0 %2796
  %v2798 = vsel %vm129, %v2793, %v2795
  %v2799 = vsel %vm129, %v2795, %v2797
  %v2803 = vadd.f32 %v2783, %v2798
  %v2804 = vadd.f32 %v2784, %v2799
  %v2805 = vadd.f32 %v2785, %v2797
  %v2806 = vmul.f32 %v1788, %v1274
  %v2807 = vmul.f32 %v1789, %v1274
  %v2808 = vmul.f32 %v1790, %v1274
  %2812 = vrot.lane.b32.xlu0 %v2806, 64
  %v2813 = vpop.permute.xlu0 %2812
  %2814 = vrot.lane.b32.xlu0 %v2807, 64
  %v2815 = vpop.permute.xlu0 %2814
  %2816 = vrot.lane.b32.xlu0 %v2808, 64
  %v2817 = vpop.permute.xlu0 %2816
  %v2818 = vsel %vm154, %v2813, %v2815
  %v2819 = vsel %vm154, %v2815, %v2817
  %v2823 = vadd.f32 %v2803, %v2818
  %v2824 = vadd.f32 %v2804, %v2819
  %v2825 = vadd.f32 %v2805, %v2817
  %v2826 = vmul.f32 %v1788, %v1298
  %v2827 = vmul.f32 %v1789, %v1298
  %v2828 = vmul.f32 %v1790, %v1298
  %2832 = vrot.lane.b32.xlu0 %v2826, 48
  %v2833 = vpop.permute.xlu0 %2832
  %2834 = vrot.lane.b32.xlu0 %v2827, 48
  %v2835 = vpop.permute.xlu0 %2834
  %2836 = vrot.lane.b32.xlu0 %v2828, 48
  %v2837 = vpop.permute.xlu0 %2836
  %v2838 = vsel %vm179, %v2833, %v2835
  %v2839 = vsel %vm179, %v2835, %v2837
  %v2843 = vadd.f32 %v2823, %v2838
  %v2844 = vadd.f32 %v2824, %v2839
  %v2845 = vadd.f32 %v2825, %v2837
  %v2846 = vmul.f32 %v1788, %v1322
  %v2847 = vmul.f32 %v1789, %v1322
  %v2848 = vmul.f32 %v1790, %v1322
  %2852 = vrot.lane.b32.xlu0 %v2846, 32
  %v2853 = vpop.permute.xlu0 %2852
  %2854 = vrot.lane.b32.xlu0 %v2847, 32
  %v2855 = vpop.permute.xlu0 %2854
  %2856 = vrot.lane.b32.xlu0 %v2848, 32
  %v2857 = vpop.permute.xlu0 %2856
  %v2858 = vsel %vm204, %v2853, %v2855
  %v2859 = vsel %vm204, %v2855, %v2857
  %v2863 = vadd.f32 %v2843, %v2858
  %v2864 = vadd.f32 %v2844, %v2859
  %v2865 = vadd.f32 %v2845, %v2857
  %v2866 = vld [vmem:[%s1344] sm:$0x3]
  %v2868 = vlaneseq
  %v2869 = vshrl.u32 %v2868, 7
  %v2870 = vsub.s32 0, %v2869
  %v2871 = vrot.slane %v2866, %v2870
  %v2872 = vlaneseq
  %v2873 = vshrl.u32 %v2872, 7
  %v2874 = vsub.s32 1, %v2873
  %v2875 = vrot.slane %v2866, %v2874
  %2876 = vrot.lane.b32.xlu0 %v2871, 19
  %v2877 = vpop.permute.xlu0 %2876
  %2878 = vrot.lane.b32.xlu0 %v2875, 19
  %v2879 = vpop.permute.xlu0 %2878
  %v2880 = vsel %vm1359, %v2877, %v2879
  %v2884 = vmul.f32 %v2863, %v2877
  %v2885 = vmul.f32 %v2864, %v2880
  %v2886 = vmul.f32 %v2865, %v2879
  %2890 = vrot.lane.b32.xlu0 %v2884, 122
  %v2891 = vpop.permute.xlu0 %2890
  %2892 = vrot.lane.b32.xlu0 %v2885, 122
  %v2893 = vpop.permute.xlu0 %2892
  %2894 = vrot.lane.b32.xlu0 %v2886, 122
  %v2895 = vpop.permute.xlu0 %2894
  %v2896 = vsel %vm1376, %v2891, %v2893
  %v2897 = vsel %vm1376, %v2893, %v2895
  %v2901 = vadd.f32 %v2737, %v2896
  %v2902 = vadd.f32 %v2738, %v2897
  %v2903 = vadd.f32 %v2739, %v2895
  %v2904 = vadd.f32 %v2901, %v1388
  %v2905 = vadd.f32 %v2902, %v1388
  %v2906 = vadd.f32 %v2903, %v1388
  %v2907 = vsel %vm1393, %v2904, 0.0
  %v2908 = vrot.slane %v2907, 4
  %v2909 = vadd.f32 %v2907, %v2908
  %v2910 = vrot.slane %v2909, 2
  %v2911 = vadd.f32 %v2909, %v2910
  %v2912 = vrot.slane %v2911, 1
  %v2913 = vadd.f32 %v2911, %v2912
  %v2914 = vrot.slane %v2905, 4
  %v2915 = vadd.f32 %v2905, %v2914
  %v2916 = vrot.slane %v2915, 2
  %v2917 = vadd.f32 %v2915, %v2916
  %v2918 = vrot.slane %v2917, 1
  %v2919 = vadd.f32 %v2917, %v2918
  %v2920 = vsel %vm227, %v2906, 0.0
  %v2921 = vrot.slane %v2920, 4
  %v2922 = vadd.f32 %v2920, %v2921
  %v2923 = vrot.slane %v2922, 2
  %v2924 = vadd.f32 %v2922, %v2923
  %v2925 = vrot.slane %v2924, 1
  %v2926 = vadd.f32 %v2924, %v2925
  %v2927 = vmul.f32 %v2913, %v1414
  %v2928 = vmul.f32 %v2919, %v1414
  %v2929 = vmul.f32 %v2926, %v1414
  %v2930 = vsub.f32 %v2904, %v2927
  %v2931 = vsub.f32 %v2905, %v2928
  %v2932 = vsub.f32 %v2906, %v2929
  %v2933 = vmul.f32 %v2930, %v2930
  %v2934 = vmul.f32 %v2931, %v2931
  %v2935 = vmul.f32 %v2932, %v2932
  %v2936 = vsel %vm1393, %v2933, 0.0
  %v2937 = vrot.slane %v2936, 4
  %v2938 = vadd.f32 %v2936, %v2937
  %v2939 = vrot.slane %v2938, 2
  %v2940 = vadd.f32 %v2938, %v2939
  %v2941 = vrot.slane %v2940, 1
  %v2942 = vadd.f32 %v2940, %v2941
  %v2943 = vrot.slane %v2934, 4
  %v2944 = vadd.f32 %v2934, %v2943
  %v2945 = vrot.slane %v2944, 2
  %v2946 = vadd.f32 %v2944, %v2945
  %v2947 = vrot.slane %v2946, 1
  %v2948 = vadd.f32 %v2946, %v2947
  %v2949 = vsel %vm227, %v2935, 0.0
  %v2950 = vrot.slane %v2949, 4
  %v2951 = vadd.f32 %v2949, %v2950
  %v2952 = vrot.slane %v2951, 2
  %v2953 = vadd.f32 %v2951, %v2952
  %v2954 = vrot.slane %v2953, 1
  %v2955 = vadd.f32 %v2953, %v2954
  %v2956 = vmul.f32 %v2942, %v1414
  %v2957 = vmul.f32 %v2948, %v1414
  %v2958 = vmul.f32 %v2955, %v1414
  %v2959 = vadd.f32 %v2956, 1e-05
  %v2960 = vadd.f32 %v2957, 1e-05
  %v2961 = vadd.f32 %v2958, 1e-05
  %v2962 = vrsqrt.pop %v2959
  %v2963 = vrsqrt.pop %v2960
  %v2964 = vrsqrt.pop %v2961
  %v2965 = vmul.f32 %v2930, %v2962
  %v2966 = vmul.f32 %v2931, %v2963
  %v2967 = vmul.f32 %v2932, %v2964
  %v2968 = vmul.f32 %v2965, %v1459
  %v2969 = vmul.f32 %v2966, %v1459
  %v2970 = vmul.f32 %v2967, %v1459
  %v2971 = vadd.f32 %v2968, %v1467
  %v2972 = vadd.f32 %v2969, %v1467
  %v2973 = vadd.f32 %v2970, %v1467
  %2977 = vrot.lane.b32.xlu0 %v2971, 115
  %v2978 = vpop.permute.xlu0 %2977
  %2979 = vrot.lane.b32.xlu0 %v2972, 115
  %v2980 = vpop.permute.xlu0 %2979
  %2981 = vrot.lane.b32.xlu0 %v2973, 115
  %v2982 = vpop.permute.xlu0 %2981
  %v2983 = vsel %vm1501, %v2978, %v2980
  %v2984 = vsel %vm1501, %v2980, %v2982
  %2987 = vmatprep.subr.mxu0 %v2984
  %2988 = vmatpush1.msra.mxu0 %v2983
  %2989 = vmatprep.subr.mxu0 0.0
  %2990 = vmatpush1.msra.mxu0 0.0
  %2991 = vmatprep.subr.mxu0 0.0
  %2992 = vmatpush1.msra.mxu0 0.0
  %2993 = vmatprep.subr.mxu0 0.0
  %2994 = vmatpush1.msra.mxu0 0.0
  %2995 = vmatprep.subr.mxu0 0.0
  %2996 = vmatpush1.msra.mxu0 0.0
  %2997 = vmatprep.subr.mxu0 0.0
  %2998 = vmatpush1.msra.mxu0 0.0
  %2999 = vmatprep.subr.mxu0 0.0
  %3000 = vmatpush1.msra.mxu0 0.0
  %3001 = vmatprep.subr.mxu0 0.0
  %3002 = vmatpush1.msra.mxu0 0.0
  %3003 = vmatprep.subr.mxu0 0.0
  %3004 = vmatpush1.msra.mxu0 0.0
  %3005 = vmatprep.subr.mxu0 0.0
  %3006 = vmatpush1.msra.mxu0 0.0
  %3007 = vmatprep.subr.mxu0 0.0
  %3008 = vmatpush1.msra.mxu0 0.0
  %3009 = vmatprep.subr.mxu0 0.0
  %3010 = vmatpush1.msra.mxu0 0.0
  %3011 = vmatprep.subr.mxu0 0.0
  %3012 = vmatpush1.msra.mxu0 0.0
  %3013 = vmatprep.subr.mxu0 0.0
  %3014 = vmatpush1.msra.mxu0 0.0
  %3015 = vmatprep.subr.mxu0 0.0
  %3016 = vmatpush1.msra.mxu0 0.0
  %3017 = vmatprep.subr.mxu0 0.0
  %3018 = vmatpush1.msra.mxu0 0.0
  %3019 = vmatprep.subr.mxu0 0.0
  %3020 = vmatpush1.msra.mxu0 0.0
  %3021 = vmatprep.subr.mxu0 0.0
  %3022 = vmatpush1.msra.mxu0 0.0
  %3023 = vmatprep.subr.mxu0 0.0
  %3024 = vmatpush1.msra.mxu0 0.0
  %3025 = vmatprep.subr.mxu0 0.0
  %3026 = vmatpush1.msra.mxu0 0.0
  %3027 = vmatprep.subr.mxu0 0.0
  %3028 = vmatpush1.msra.mxu0 0.0
  %3029 = vmatprep.subr.mxu0 0.0
  %3030 = vmatpush1.msra.mxu0 0.0
  %3031 = vmatprep.subr.mxu0 0.0
  %3032 = vmatpush1.msra.mxu0 0.0
  %3033 = vmatprep.subr.mxu0 0.0
  %3034 = vmatpush1.msra.mxu0 0.0
  %3035 = vmatprep.subr.mxu0 0.0
  %3036 = vmatpush1.msra.mxu0 0.0
  %3037 = vmatprep.subr.mxu0 0.0
  %3038 = vmatpush1.msra.mxu0 0.0
  %3039 = vmatprep.subr.mxu0 0.0
  %3040 = vmatpush1.msra.mxu0 0.0
  %3041 = vmatprep.subr.mxu0 0.0
  %3042 = vmatpush1.msra.mxu0 0.0
  %3043 = vmatprep.subr.mxu0 0.0
  %3044 = vmatpush1.msra.mxu0 0.0
  %3045 = vmatprep.subr.mxu0 0.0
  %3046 = vmatpush1.msra.mxu0 0.0
  %3047 = vmatprep.subr.mxu0 0.0
  %3048 = vmatpush1.msra.mxu0 0.0
  %3049 = vmatprep.subr.mxu0 0.0
  %3050 = vmatpush1.msra.mxu0 0.0
  %3051 = vmatprep.mubr.f32.mxu0 0.0
  %3052 = vmatmul.mubr.f32.gmra.mrb[0].mxu0 %v1508
  %v3053 = vpop.f32.mrb[0].mxu0
  %v3054 = vadd.f32 %v1475, %v3053
  %v3055 = vpop.f32.mrb[0].mxu0
  %v3056 = vadd.f32 %v1475, %v3055
  %3057 = vmatprep.mubr.f32.mxu0 0.0
  %3058 = vmatmul.mubr.f32.gmra.mrb[0].mxu0 %v1511
  %v3059 = vpop.f32.mrb[0].mxu0
  %v3060 = vadd.f32 %v1480, %v3059
  %v3061 = vpop.f32.mrb[0].mxu0
  %v3062 = vadd.f32 %v1480, %v3061
  %3063 = vmatprep.mubr.f32.mxu0 0.0
  %3064 = vmatmul.mubr.f32.gmra.mrb[0].mxu0 %v1514
  %v3065 = vpop.f32.mrb[0].mxu0
  %v3066 = vadd.f32 %v1485, %v3065
  %v3067 = vpop.f32.mrb[0].mxu0
  %v3068 = vadd.f32 %v1485, %v3067
  %3069 = vmatprep.mubr.f32.mxu0 0.0
  %3070 = vmatmul.mubr.f32.gmra.mrb[0].mxu0 %v1517
  %v3071 = vpop.f32.mrb[0].mxu0
  %v3072 = vadd.f32 %v1490, %v3071
  %v3073 = vpop.f32.mrb[0].mxu0
  %v3074 = vadd.f32 %v1490, %v3073
  %3075 = vdwg.mxu0
  %v3076 = vmul.f32 %v3054, 0.5
  %v3077 = vmul.f32 %v3056, 0.5
  %v3078 = vmul.f32 %v3060, 0.5
  %v3079 = vmul.f32 %v3062, 0.5
  %v3080 = vmul.f32 %v3066, 0.5
  %v3081 = vmul.f32 %v3068, 0.5
  %v3082 = vmul.f32 %v3072, 0.5
  %v3083 = vmul.f32 %v3074, 0.5
  %v3084 = vmul.f32 %v3054, 0.044715
  %v3085 = vmul.f32 %v3056, 0.044715
  %v3086 = vmul.f32 %v3060, 0.044715
  %v3087 = vmul.f32 %v3062, 0.044715
  %v3088 = vmul.f32 %v3066, 0.044715
  %v3089 = vmul.f32 %v3068, 0.044715
  %v3090 = vmul.f32 %v3072, 0.044715
  %v3091 = vmul.f32 %v3074, 0.044715
  %v3092 = vmul.f32 %v3084, %v3054
  %v3093 = vmul.f32 %v3085, %v3056
  %v3094 = vmul.f32 %v3086, %v3060
  %v3095 = vmul.f32 %v3087, %v3062
  %v3096 = vmul.f32 %v3088, %v3066
  %v3097 = vmul.f32 %v3089, %v3068
  %v3098 = vmul.f32 %v3090, %v3072
  %v3099 = vmul.f32 %v3091, %v3074
  %v3100 = vmul.f32 %v3092, %v3054
  %v3101 = vmul.f32 %v3093, %v3056
  %v3102 = vmul.f32 %v3094, %v3060
  %v3103 = vmul.f32 %v3095, %v3062
  %v3104 = vmul.f32 %v3096, %v3066
  %v3105 = vmul.f32 %v3097, %v3068
  %v3106 = vmul.f32 %v3098, %v3072
  %v3107 = vmul.f32 %v3099, %v3074
  %v3108 = vadd.f32 %v3054, %v3100
  %v3109 = vadd.f32 %v3056, %v3101
  %v3110 = vadd.f32 %v3060, %v3102
  %v3111 = vadd.f32 %v3062, %v3103
  %v3112 = vadd.f32 %v3066, %v3104
  %v3113 = vadd.f32 %v3068, %v3105
  %v3114 = vadd.f32 %v3072, %v3106
  %v3115 = vadd.f32 %v3074, %v3107
  %v3116 = vmul.f32 %v3108, 0.7978846
  %v3117 = vmul.f32 %v3109, 0.7978846
  %v3118 = vmul.f32 %v3110, 0.7978846
  %v3119 = vmul.f32 %v3111, 0.7978846
  %v3120 = vmul.f32 %v3112, 0.7978846
  %v3121 = vmul.f32 %v3113, 0.7978846
  %v3122 = vmul.f32 %v3114, 0.7978846
  %v3123 = vmul.f32 %v3115, 0.7978846
  %v3124 = vtanh.pop %v3116
  %v3125 = vtanh.pop %v3117
  %v3126 = vtanh.pop %v3118
  %v3127 = vtanh.pop %v3119
  %v3128 = vtanh.pop %v3120
  %v3129 = vtanh.pop %v3121
  %v3130 = vtanh.pop %v3122
  %v3131 = vtanh.pop %v3123
  %v3132 = vadd.f32 %v3124, 1.0
  %v3133 = vadd.f32 %v3125, 1.0
  %v3134 = vadd.f32 %v3126, 1.0
  %v3135 = vadd.f32 %v3127, 1.0
  %v3136 = vadd.f32 %v3128, 1.0
  %v3137 = vadd.f32 %v3129, 1.0
  %v3138 = vadd.f32 %v3130, 1.0
  %v3139 = vadd.f32 %v3131, 1.0
  %v3140 = vmul.f32 %v3076, %v3132
  %v3141 = vmul.f32 %v3077, %v3133
  %v3142 = vmul.f32 %v3078, %v3134
  %v3143 = vmul.f32 %v3079, %v3135
  %v3144 = vmul.f32 %v3080, %v3136
  %v3145 = vmul.f32 %v3081, %v3137
  %v3146 = vmul.f32 %v3082, %v3138
  %v3147 = vmul.f32 %v3083, %v3139
  %3148 = vmatprep.subr.mxu0 %v3141
  %3149 = vmatpush1.msra.mxu0 %v3140
  %3150 = vmatprep.subr.mxu0 %v3143
  %3151 = vmatpush1.msra.mxu0 %v3142
  %3152 = vmatprep.subr.mxu0 %v3145
  %3153 = vmatpush1.msra.mxu0 %v3144
  %3154 = vmatprep.subr.mxu0 %v3147
  %3155 = vmatpush1.msra.mxu0 %v3146
  %3156 = vmatprep.subr.mxu0 0.0
  %3157 = vmatpush1.msra.mxu0 0.0
  %3158 = vmatprep.subr.mxu0 0.0
  %3159 = vmatpush1.msra.mxu0 0.0
  %3160 = vmatprep.subr.mxu0 0.0
  %3161 = vmatpush1.msra.mxu0 0.0
  %3162 = vmatprep.subr.mxu0 0.0
  %3163 = vmatpush1.msra.mxu0 0.0
  %3164 = vmatprep.subr.mxu0 0.0
  %3165 = vmatpush1.msra.mxu0 0.0
  %3166 = vmatprep.subr.mxu0 0.0
  %3167 = vmatpush1.msra.mxu0 0.0
  %3168 = vmatprep.subr.mxu0 0.0
  %3169 = vmatpush1.msra.mxu0 0.0
  %3170 = vmatprep.subr.mxu0 0.0
  %3171 = vmatpush1.msra.mxu0 0.0
  %3172 = vmatprep.subr.mxu0 0.0
  %3173 = vmatpush1.msra.mxu0 0.0
  %3174 = vmatprep.subr.mxu0 0.0
  %3175 = vmatpush1.msra.mxu0 0.0
  %3176 = vmatprep.subr.mxu0 0.0
  %3177 = vmatpush1.msra.mxu0 0.0
  %3178 = vmatprep.subr.mxu0 0.0
  %3179 = vmatpush1.msra.mxu0 0.0
  %3180 = vmatprep.subr.mxu0 0.0
  %3181 = vmatpush1.msra.mxu0 0.0
  %3182 = vmatprep.subr.mxu0 0.0
  %3183 = vmatpush1.msra.mxu0 0.0
  %3184 = vmatprep.subr.mxu0 0.0
  %3185 = vmatpush1.msra.mxu0 0.0
  %3186 = vmatprep.subr.mxu0 0.0
  %3187 = vmatpush1.msra.mxu0 0.0
  %3188 = vmatprep.subr.mxu0 0.0
  %3189 = vmatpush1.msra.mxu0 0.0
  %3190 = vmatprep.subr.mxu0 0.0
  %3191 = vmatpush1.msra.mxu0 0.0
  %3192 = vmatprep.subr.mxu0 0.0
  %3193 = vmatpush1.msra.mxu0 0.0
  %3194 = vmatprep.subr.mxu0 0.0
  %3195 = vmatpush1.msra.mxu0 0.0
  %3196 = vmatprep.subr.mxu0 0.0
  %3197 = vmatpush1.msra.mxu0 0.0
  %3198 = vmatprep.subr.mxu0 0.0
  %3199 = vmatpush1.msra.mxu0 0.0
  %3200 = vmatprep.subr.mxu0 0.0
  %3201 = vmatpush1.msra.mxu0 0.0
  %3202 = vmatprep.subr.mxu0 0.0
  %3203 = vmatpush1.msra.mxu0 0.0
  %3204 = vmatprep.subr.mxu0 0.0
  %3205 = vmatpush1.msra.mxu0 0.0
  %3206 = vmatprep.subr.mxu0 0.0
  %3207 = vmatpush1.msra.mxu0 0.0
  %3208 = vmatprep.subr.mxu0 0.0
  %3209 = vmatpush1.msra.mxu0 0.0
  %3210 = vmatprep.subr.mxu0 0.0
  %3211 = vmatpush1.msra.mxu0 0.0
  %3212 = vmatprep.mubr.f32.mxu0 0.0
  %3213 = vmatmul.mubr.f32.gmra.mrb[0].mxu0 %v1686
  %v3214 = vpop.f32.mrb[0].mxu0
  %v3215 = vadd.f32 %v1683, %v3214
  %v3216 = vpop.f32.mrb[0].mxu0
  %v3217 = vadd.f32 %v1683, %v3216
  %3218 = vdwg.mxu0
  %3221 = vrot.lane.b32.xlu0 %v3215, 64
  %v3222 = vpop.permute.xlu0 %3221
  %3223 = vrot.lane.b32.xlu0 %v3217, 64
  %v3224 = vpop.permute.xlu0 %3223
  %v3225 = vsel %vm154, %v3222, %v3224
  %v3229 = vadd.f32 %v1788, %v3222
  %v3230 = vadd.f32 %v1789, %v3225
  %v3231 = vadd.f32 %v1790, %v3224
  %3235 = vrot.lane.b32.xlu0 %v3229, 64
  %v3236 = vpop.permute.xlu0 %3235
  %3237 = vrot.lane.b32.xlu0 %v3230, 64
  %v3238 = vpop.permute.xlu0 %3237
  %3239 = vrot.lane.b32.xlu0 %v3231, 64
  %v3240 = vpop.permute.xlu0 %3239
  %v3241 = vsel %vm154, %v3236, %v3238
  %v3242 = vsel %vm154, %v3238, %v3240
  %s3245 = scalar_lea.vmem %s10, 16
  %3246 = vst [vmem:[%s3245] sm:$0xff] %v3241
  %3247 = vst [vmem:[%s3245 + $0x8] sm:$0xff] %v3242
  // Predicated region
  $region42: #{convnext_block.1} parent=0 // pred_check
    _
  $region43: #{convnext_block.1} parent=0 // pred_check_branch
    %3249 = sbr.rel (0) target = $region45
  $region44: #{convnext_block.1} parent=0 // pred_region
    _
  $region45: #{convnext_block.1} parent=0 // pred_fallthru
    _
  // Predicated region
  $region46: #{convnext_block.1} parent=0 // pred_check
    _
  $region47: #{convnext_block.1} parent=0 // pred_check_branch
    %3251 = sbr.rel (0) target = $region49
  $region48: #{convnext_block.1} parent=0 // pred_region
    _
  $region49: #{convnext_block.1} parent=0 // pred_fallthru
    _

</llo_original>
